<compile_context>
chip_gen: v6e
topology: v6e:2x2x1
jax: 0.10.0
libtpu: 0.0.40
codegen_flags: <defaults>
</compile_context>

<pallas_src>
import functools
import numpy as np
import jax
import jax.numpy as jnp
from jax.experimental import pallas as pl
from jax.experimental.pallas import tpu as pltpu

EXPANSION = 4


# --------------------------------------------------------------------------- #
# Kernel
# --------------------------------------------------------------------------- #
def _bottleneck_kernel(x_ref, m_ref, w1_ref, b1_ref, w2_ref, b2_ref,
                       w3_ref, b3_ref, wd_ref, bd_ref, o_ref, *, TH, Wp):
    """One (batch, row-tile) per grid step.

    x_ref : (1, 1, TR, Cin_p)   bf16, TR = (TH+3)*Wp flattened (rows+halo, padded width)
    m_ref : (1, TR, 1)          f32, 1.0 at real image pixels, 0.0 at boundary padding
    w1    : (Cin_p,  Cmid_p)    conv1 (1x1) folded with bn1
    w2    : (9, Cmid_p, Cmid_p) conv2 (3x3) folded with bn2, tap-major (ky*3+kx)
    w3    : (Cmid_p, Cout_p)    conv3 (1x1) folded with bn3
    wd    : (Cin_p,  Cout_p)    downsample (1x1) folded with its BN, or identity
    b*    : (1, C)              folded biases, f32
    o_ref : (1, 1, TH*Wp, Cout_p)
    """
    M = TH * Wp
    xt = x_ref[0, 0]                                    # (TR, Cin_p) bf16
    mask = m_ref[0]                                     # (TR, 1)     f32

    # ---- conv1 (1x1) + bn1 + ReLU on the whole tile (incl. halo rows) ----
    # mask zeroes the image-boundary padding pixels so conv2 sees true zero-pad.
    h1 = jnp.dot(xt, w1_ref[...], preferred_element_type=jnp.float32)
    h1 = jnp.maximum(h1 + b1_ref[...], 0.0) * mask      # (TR, Cmid_p) f32

    # ---- conv2 (3x3, pad=1) + bn2 + ReLU: 9 shifted big matmuls ----
    acc = jnp.zeros((M, w2_ref.shape[2]), jnp.float32)
    for dy in range(3):
        for dx in range(3):
            off = dy * Wp + dx                          # static offsets
            tap = h1[off:off + M, :].astype(jnp.bfloat16)
            acc = acc + jnp.dot(tap, w2_ref[dy * 3 + dx],
                                preferred_element_type=jnp.float32)
    h2 = jnp.maximum(acc + b2_ref[...], 0.0).astype(jnp.bfloat16)   # (M, Cmid_p)

    # ---- conv3 (1x1) + bn3 ----
    h3 = jnp.dot(h2, w3_ref[...], preferred_element_type=jnp.float32) + b3_ref[...]

    # ---- residual (1x1 downsample + BN, or identity) + final ReLU ----
    # Matmul over the whole tile, then select the center window in f32.
    res_full = jnp.dot(xt, wd_ref[...], preferred_element_type=jnp.float32)
    res = res_full[Wp + 1:Wp + 1 + M, :] + bd_ref[...]

    o_ref[0, 0] = jnp.maximum(h3 + res, 0.0).astype(o_ref.dtype)


# --------------------------------------------------------------------------- #
# Wrapper
# --------------------------------------------------------------------------- #
def bottleneck_forward(x_nchw, folded_params, *, stride=1, tile_h=None):
    """x_nchw: (N, Cin, H, W) f32 (PyTorch layout). Returns (N, Cout, H, W) f32."""
    assert stride == 1, "only stride=1 implemented"
    N, Cin, H, W = x_nchw.shape
    w1, b1, w2, b2, w3, b3, wd, bd = folded_params      # unpadded matmul layouts
    Cmid, Cout = w1.shape[1], w3.shape[1]

    def rup(v, m):
        return (v + m - 1) // m * m

    Cin_p, Cmid_p, Cout_p = rup(Cin, 128), rup(Cmid, 128), rup(Cout, 128)

    TH = tile_h if tile_h is not None else min(H, 32)   # row tile (bounds VMEM)
    nH = -(-H // TH)
    H_p = nH * TH
    Wp = rup(W + 2, 8)                                  # padded width (8-aligned)
    TR = (TH + 3) * Wp                                  # flattened rows per tile (with halo)
    M = TH * Wp                                         # flattened output rows per tile

    # ---- pad + cast weights (bf16) and biases (f32) ----
    def pad2(w, a, b):
        return jnp.pad(w, ((0, a - w.shape[0]), (0, b - w.shape[1])))

    w1p = pad2(w1, Cin_p, Cmid_p).astype(jnp.bfloat16)
    w2p = jnp.pad(w2, ((0, 0), (0, Cmid_p - Cmid), (0, Cmid_p - Cmid))).astype(jnp.bfloat16)
    w3p = pad2(w3, Cmid_p, Cout_p).astype(jnp.bfloat16)
    wdp = pad2(wd, Cin_p, Cout_p).astype(jnp.bfloat16)
    b1p = jnp.pad(b1, (0, Cmid_p - Cmid)).reshape(1, Cmid_p).astype(jnp.float32)
    b2p = jnp.pad(b2, (0, Cmid_p - Cmid)).reshape(1, Cmid_p).astype(jnp.float32)
    b3p = jnp.pad(b3, (0, Cout_p - Cout)).reshape(1, Cout_p).astype(jnp.float32)
    bdp = jnp.pad(bd, (0, Cout_p - Cout)).reshape(1, Cout_p).astype(jnp.float32)

    # ---- NCHW -> NHWC, channel pad to 128, spatial zero-pad, bf16 ----
    x = jnp.transpose(x_nchw, (0, 2, 3, 1)).astype(jnp.bfloat16)
    x = jnp.pad(x, ((0, 0), (1, H_p - H + 2), (1, Wp - W - 1), (0, Cin_p - Cin)))
    # x: (N, H_p+3, Wp, Cin_p)

    # overlapping row tiles (3-row halo), flattened spatially
    tiles = [x[:, i * TH:i * TH + TH + 3] for i in range(nH)]
    xt = jnp.stack(tiles, axis=1).reshape(N, nH, TR, Cin_p)

    # per-tile validity mask (real image pixels = 1, boundary padding = 0)
    rows = TH * jnp.arange(nH)[:, None] + jnp.arange(TH + 3)[None, :]   # padded row coords
    cols = jnp.arange(Wp)                                               # padded col coords
    valid = ((rows[:, :, None] >= 1) & (rows[:, :, None] <= H) &
             (cols[None, None, :] >= 1) & (cols[None, None, :] <= W))
    mask = valid.astype(jnp.float32).reshape(nH, TR, 1)

    kernel = functools.partial(_bottleneck_kernel, TH=TH, Wp=Wp)

    out = pl.pallas_call(
        kernel,
        out_shape=jax.ShapeDtypeStruct((N, nH, M, Cout_p), jnp.float32),
        grid_spec=pltpu.PrefetchScalarGridSpec(
            num_scalar_prefetch=0,
            grid=(N, nH),
            in_specs=[
                pl.BlockSpec((1, 1, TR, Cin_p), lambda n, i: (n, i, 0, 0)),
                pl.BlockSpec((1, TR, 1), lambda n, i: (i, 0, 0)),
                pl.BlockSpec((Cin_p, Cmid_p), lambda n, i: (0, 0)),
                pl.BlockSpec((1, Cmid_p), lambda n, i: (0, 0)),
                pl.BlockSpec((9, Cmid_p, Cmid_p), lambda n, i: (0, 0, 0)),
                pl.BlockSpec((1, Cmid_p), lambda n, i: (0, 0)),
                pl.BlockSpec((Cmid_p, Cout_p), lambda n, i: (0, 0)),
                pl.BlockSpec((1, Cout_p), lambda n, i: (0, 0)),
                pl.BlockSpec((Cin_p, Cout_p), lambda n, i: (0, 0)),
                pl.BlockSpec((1, Cout_p), lambda n, i: (0, 0)),
            ],
            out_specs=pl.BlockSpec((1, 1, M, Cout_p), lambda n, i: (n, i, 0, 0)),
        ),
        compiler_params=pltpu.CompilerParams(
            dimension_semantics=("parallel", "parallel")),
    )(xt, mask, w1p, b1p, w2p, b2p, w3p, b3p, wdp, bdp)

    out = out.reshape(N, nH * TH, Wp, Cout_p)[:, :H, :W, :Cout]
    return jnp.transpose(out, (0, 3, 1, 2))             # back to NCHW


# --------------------------------------------------------------------------- #
# Deterministic parameters (PyTorch layout) + BN folding
# --------------------------------------------------------------------------- #
def make_params(key, inplanes, planes, *, use_downsample):
    cout = planes * EXPANSION
    ks = iter(jax.random.split(key, 24))

    def conv(o, i, kh, kw):
        return jax.random.normal(next(ks), (o, i, kh, kw), jnp.float32) * 0.1

    def bn(c):
        g = jax.random.uniform(next(ks), (c,), jnp.float32, 0.5, 1.5)
        b = jax.random.normal(next(ks), (c,), jnp.float32) * 0.1
        m = jax.random.normal(next(ks), (c,), jnp.float32) * 0.1
        v = jax.random.uniform(next(ks), (c,), jnp.float32, 0.5, 1.5)
        return g, b, m, v

    raw = dict(w1=conv(planes, inplanes, 1, 1), bn1=bn(planes),
               w2=conv(planes, planes, 3, 3), bn2=bn(planes),
               w3=conv(cout, planes, 1, 1), bn3=bn(cout))
    if use_downsample:
        raw['wd'] = conv(cout, inplanes, 1, 1)
        raw['bnd'] = bn(cout)
    else:
        raw['wd'] = None
        raw['bnd'] = None
    return raw


def fold_params(raw, *, inplanes, planes, eps=1e-5):
    cout = planes * EXPANSION

    def fold(w, bn_):
        g, b, m, v = bn_
        s = g / jnp.sqrt(v + eps)
        return w * s[:, None, None, None], b - m * s

    w1, b1 = fold(raw['w1'], raw['bn1'])
    w2, b2 = fold(raw['w2'], raw['bn2'])
    w3, b3 = fold(raw['w3'], raw['bn3'])

    w1m = jnp.transpose(w1[:, :, 0, 0], (1, 0))                       # (Cin, Cmid)
    w2m = jnp.transpose(w2, (2, 3, 1, 0)).reshape(9, planes, planes)  # (9, Cmid, Cmid)
    w3m = jnp.transpose(w3[:, :, 0, 0], (1, 0))                       # (Cmid, Cout)

    if raw['wd'] is not None:
        wd, bd = fold(raw['wd'], raw['bnd'])
        wdm = jnp.transpose(wd[:, :, 0, 0], (1, 0))                   # (Cin, Cout)
    else:
        assert inplanes == cout, "identity residual requires Cin == Cout"
        wdm = jnp.eye(inplanes, dtype=jnp.float32)
        bd = jnp.zeros((cout,), jnp.float32)

    return (w1m, b1, w2m, b2, w3m, b3, wdm, bd)


# --------------------------------------------------------------------------- #
# Plain-JAX reference (same math / same bf16 casts, no Pallas)
# --------------------------------------------------------------------------- #
def reference_forward(x_nchw, folded):
    w1, b1, w2, b2, w3, b3, wd, bd = folded
    w1b, w2b, w3b, wdb = (w.astype(jnp.bfloat16) for w in (w1, w2, w3, wd))
    x = jnp.transpose(x_nchw, (0, 2, 3, 1)).astype(jnp.bfloat16)
    N, H, W, _ = x.shape
    f32 = jnp.float32

    h1 = jnp.einsum('nhwc,cd->nhwd', x, w1b, preferred_element_type=f32) + b1
    h1 = jnp.maximum(h1, 0.0).astype(jnp.bfloat16)
    h1p = jnp.pad(h1, ((0, 0), (1, 1), (1, 1), (0, 0)))
    acc = sum(jnp.einsum('nhwc,cd->nhwd', h1p[:, dy:dy + H, dx:dx + W, :],
                         w2b[dy * 3 + dx], preferred_element_type=f32)
              for dy in range(3) for dx in range(3))
    h2 = jnp.maximum(acc + b2, 0.0).astype(jnp.bfloat16)
    h3 = jnp.einsum('nhwc,cd->nhwd', h2, w3b, preferred_element_type=f32) + b3
    res = jnp.einsum('nhwc,cd->nhwd', x, wdb, preferred_element_type=f32) + bd
    y = jnp.maximum(h3 + res, 0.0)
    return jnp.transpose(y, (0, 3, 1, 2))


# --------------------------------------------------------------------------- #
if __name__ == "__main__":
    # Small config: batch=2, inplanes=16, planes=8 (-> out channels 32),
    # spatial 16x16, stride=1, downsample present (inplanes != planes*4).
    N, inplanes, planes, H, W = 2, 16, 8, 16, 16

    key = jax.random.PRNGKey(0)
    kx, kp = jax.random.split(key)
    x = jax.random.normal(kx, (N, inplanes, H, W), jnp.float32)

    raw = make_params(kp, inplanes, planes, use_downsample=True)
    folded = fold_params(raw, inplanes=inplanes, planes=planes)

    y = bottleneck_forward(x, folded, stride=1, tile_h=8)
    y = jax.block_until_ready(y)

    y_ref = reference_forward(x, folded)
    np.testing.assert_allclose(np.asarray(y), np.asarray(y_ref),
                               rtol=2e-2, atol=2e-2)
    print("KERNEL_OK")
</pallas_src>

<mosaic_0001>
module attributes {stable_mosaic.version = 11 : i64} {
  func.func @_bottleneck_kernel(%arg0: i32, %arg1: i32, %arg2: memref<1x1x264x128xbf16, #tpu.memory_space<vmem>>, %arg3: memref<1x264x1xf32, #tpu.memory_space<vmem>>, %arg4: memref<128x128xbf16, #tpu.memory_space<vmem>>, %arg5: memref<1x128xf32, #tpu.memory_space<vmem>>, %arg6: memref<9x128x128xbf16, #tpu.memory_space<vmem>>, %arg7: memref<1x128xf32, #tpu.memory_space<vmem>>, %arg8: memref<128x128xbf16, #tpu.memory_space<vmem>>, %arg9: memref<1x128xf32, #tpu.memory_space<vmem>>, %arg10: memref<128x128xbf16, #tpu.memory_space<vmem>>, %arg11: memref<1x128xf32, #tpu.memory_space<vmem>>, %arg12: memref<1x1x192x128xf32, #tpu.memory_space<vmem>>) attributes {dimension_semantics = [#tpu.dimension_semantics<parallel>, #tpu.dimension_semantics<parallel>], iteration_bounds = array<i64: 2, 2>, scalar_prefetch = 0 : i64, scratch_operands = 0 : i64, tpu.core_type = #tpu.core_type<tc>, window_params = [{transform_indices = @transform_0, window_bounds = array<i64: 1, 1, 264, 128>}, {transform_indices = @transform_1, window_bounds = array<i64: 1, 264, 1>}, {pipeline_mode = #tpu.pipeline_mode<synchronous>, transform_indices = @transform_2, window_bounds = array<i64: 128, 128>}, {pipeline_mode = #tpu.pipeline_mode<synchronous>, transform_indices = @transform_3, window_bounds = array<i64: 1, 128>}, {pipeline_mode = #tpu.pipeline_mode<synchronous>, transform_indices = @transform_4, window_bounds = array<i64: 9, 128, 128>}, {pipeline_mode = #tpu.pipeline_mode<synchronous>, transform_indices = @transform_5, window_bounds = array<i64: 1, 128>}, {pipeline_mode = #tpu.pipeline_mode<synchronous>, transform_indices = @transform_6, window_bounds = array<i64: 128, 128>}, {pipeline_mode = #tpu.pipeline_mode<synchronous>, transform_indices = @transform_7, window_bounds = array<i64: 1, 128>}, {pipeline_mode = #tpu.pipeline_mode<synchronous>, transform_indices = @transform_8, window_bounds = array<i64: 128, 128>}, {pipeline_mode = #tpu.pipeline_mode<synchronous>, transform_indices = @transform_9, window_bounds = array<i64: 1, 128>}, {transform_indices = @transform_10, window_bounds = array<i64: 1, 1, 192, 128>}]} {
    %c0 = arith.constant 0 : index
    %c0_0 = arith.constant 0 : index
    %c0_1 = arith.constant 0 : index
    %c0_2 = arith.constant 0 : index
    %0 = vector.load %arg2[%c0, %c0_0, %c0_1, %c0_2] : memref<1x1x264x128xbf16, #tpu.memory_space<vmem>>, vector<1x1x264x128xbf16>
    %1 = vector.shape_cast %0 : vector<1x1x264x128xbf16> to vector<264x128xbf16>
    %c0_3 = arith.constant 0 : index
    %c0_4 = arith.constant 0 : index
    %c0_5 = arith.constant 0 : index
    %2 = vector.load %arg3[%c0_3, %c0_4, %c0_5] : memref<1x264x1xf32, #tpu.memory_space<vmem>>, vector<1x264x1xf32>
    %3 = vector.shape_cast %2 : vector<1x264x1xf32> to vector<264x1xf32>
    %c0_6 = arith.constant 0 : index
    %c0_7 = arith.constant 0 : index
    %4 = vector.load %arg4[%c0_6, %c0_7] : memref<128x128xbf16, #tpu.memory_space<vmem>>, vector<128x128xbf16>
    %cst = arith.constant dense<0.000000e+00> : vector<264x128xf32>
    %5 = tpu.matmul %1, %4, %cst {dimension_numbers = #tpu.dot_dimension_numbers<[1], [0], [0], [1], [0, 0, 1, 1], [], []>} : vector<264x128xbf16>, vector<128x128xbf16>, vector<264x128xf32> -> vector<264x128xf32>
    %c0_8 = arith.constant 0 : index
    %c0_9 = arith.constant 0 : index
    %6 = vector.load %arg5[%c0_8, %c0_9] : memref<1x128xf32, #tpu.memory_space<vmem>>, vector<1x128xf32>
    %7 = vector.broadcast %6 : vector<1x128xf32> to vector<264x128xf32>
    %8 = arith.addf %5, %7 : vector<264x128xf32>
    %cst_10 = arith.constant 0.000000e+00 : f32
    %9 = vector.broadcast %cst_10 : f32 to vector<264x128xf32>
    %10 = arith.maximumf %8, %9 : vector<264x128xf32>
    %11 = vector.broadcast %3 : vector<264x1xf32> to vector<264x128xf32>
    %12 = arith.mulf %10, %11 : vector<264x128xf32>
    %cst_11 = arith.constant 0.000000e+00 : f32
    %13 = vector.broadcast %cst_11 : f32 to vector<192x128xf32>
    %14 = vector.extract_strided_slice %12 {offsets = [0, 0], sizes = [192, 128], strides = [1, 1]} : vector<264x128xf32> to vector<192x128xf32>
    %15 = arith.truncf %14 : vector<192x128xf32> to vector<192x128xbf16>
    %c0_12 = arith.constant 0 : index
    %c0_13 = arith.constant 0 : index
    %c0_14 = arith.constant 0 : index
    %16 = vector.load %arg6[%c0_12, %c0_13, %c0_14] : memref<9x128x128xbf16, #tpu.memory_space<vmem>>, vector<1x128x128xbf16>
    %17 = vector.shape_cast %16 : vector<1x128x128xbf16> to vector<128x128xbf16>
    %cst_15 = arith.constant dense<0.000000e+00> : vector<192x128xf32>
    %18 = tpu.matmul %15, %17, %cst_15 {dimension_numbers = #tpu.dot_dimension_numbers<[1], [0], [0], [1], [0, 0, 1, 1], [], []>} : vector<192x128xbf16>, vector<128x128xbf16>, vector<192x128xf32> -> vector<192x128xf32>
    %19 = arith.addf %13, %18 : vector<192x128xf32>
    %20 = vector.extract_strided_slice %12 {offsets = [1, 0], sizes = [192, 128], strides = [1, 1]} : vector<264x128xf32> to vector<192x128xf32>
    %21 = arith.truncf %20 : vector<192x128xf32> to vector<192x128xbf16>
    %c1 = arith.constant 1 : index
    %c0_16 = arith.constant 0 : index
    %c0_17 = arith.constant 0 : index
    %22 = vector.load %arg6[%c1, %c0_16, %c0_17] : memref<9x128x128xbf16, #tpu.memory_space<vmem>>, vector<1x128x128xbf16>
    %23 = vector.shape_cast %22 : vector<1x128x128xbf16> to vector<128x128xbf16>
    %cst_18 = arith.constant dense<0.000000e+00> : vector<192x128xf32>
    %24 = tpu.matmul %21, %23, %cst_18 {dimension_numbers = #tpu.dot_dimension_numbers<[1], [0], [0], [1], [0, 0, 1, 1], [], []>} : vector<192x128xbf16>, vector<128x128xbf16>, vector<192x128xf32> -> vector<192x128xf32>
    %25 = arith.addf %19, %24 : vector<192x128xf32>
    %26 = vector.extract_strided_slice %12 {offsets = [2, 0], sizes = [192, 128], strides = [1, 1]} : vector<264x128xf32> to vector<192x128xf32>
    %27 = arith.truncf %26 : vector<192x128xf32> to vector<192x128xbf16>
    %c2 = arith.constant 2 : index
    %c0_19 = arith.constant 0 : index
    %c0_20 = arith.constant 0 : index
    %28 = vector.load %arg6[%c2, %c0_19, %c0_20] : memref<9x128x128xbf16, #tpu.memory_space<vmem>>, vector<1x128x128xbf16>
    %29 = vector.shape_cast %28 : vector<1x128x128xbf16> to vector<128x128xbf16>
    %cst_21 = arith.constant dense<0.000000e+00> : vector<192x128xf32>
    %30 = tpu.matmul %27, %29, %cst_21 {dimension_numbers = #tpu.dot_dimension_numbers<[1], [0], [0], [1], [0, 0, 1, 1], [], []>} : vector<192x128xbf16>, vector<128x128xbf16>, vector<192x128xf32> -> vector<192x128xf32>
    %31 = arith.addf %25, %30 : vector<192x128xf32>
    %32 = vector.extract_strided_slice %12 {offsets = [24, 0], sizes = [192, 128], strides = [1, 1]} : vector<264x128xf32> to vector<192x128xf32>
    %33 = arith.truncf %32 : vector<192x128xf32> to vector<192x128xbf16>
    %c3 = arith.constant 3 : index
    %c0_22 = arith.constant 0 : index
    %c0_23 = arith.constant 0 : index
    %34 = vector.load %arg6[%c3, %c0_22, %c0_23] : memref<9x128x128xbf16, #tpu.memory_space<vmem>>, vector<1x128x128xbf16>
    %35 = vector.shape_cast %34 : vector<1x128x128xbf16> to vector<128x128xbf16>
    %cst_24 = arith.constant dense<0.000000e+00> : vector<192x128xf32>
    %36 = tpu.matmul %33, %35, %cst_24 {dimension_numbers = #tpu.dot_dimension_numbers<[1], [0], [0], [1], [0, 0, 1, 1], [], []>} : vector<192x128xbf16>, vector<128x128xbf16>, vector<192x128xf32> -> vector<192x128xf32>
    %37 = arith.addf %31, %36 : vector<192x128xf32>
    %38 = vector.extract_strided_slice %12 {offsets = [25, 0], sizes = [192, 128], strides = [1, 1]} : vector<264x128xf32> to vector<192x128xf32>
    %39 = arith.truncf %38 : vector<192x128xf32> to vector<192x128xbf16>
    %c4 = arith.constant 4 : index
    %c0_25 = arith.constant 0 : index
    %c0_26 = arith.constant 0 : index
    %40 = vector.load %arg6[%c4, %c0_25, %c0_26] : memref<9x128x128xbf16, #tpu.memory_space<vmem>>, vector<1x128x128xbf16>
    %41 = vector.shape_cast %40 : vector<1x128x128xbf16> to vector<128x128xbf16>
    %cst_27 = arith.constant dense<0.000000e+00> : vector<192x128xf32>
    %42 = tpu.matmul %39, %41, %cst_27 {dimension_numbers = #tpu.dot_dimension_numbers<[1], [0], [0], [1], [0, 0, 1, 1], [], []>} : vector<192x128xbf16>, vector<128x128xbf16>, vector<192x128xf32> -> vector<192x128xf32>
    %43 = arith.addf %37, %42 : vector<192x128xf32>
    %44 = vector.extract_strided_slice %12 {offsets = [26, 0], sizes = [192, 128], strides = [1, 1]} : vector<264x128xf32> to vector<192x128xf32>
    %45 = arith.truncf %44 : vector<192x128xf32> to vector<192x128xbf16>
    %c5 = arith.constant 5 : index
    %c0_28 = arith.constant 0 : index
    %c0_29 = arith.constant 0 : index
    %46 = vector.load %arg6[%c5, %c0_28, %c0_29] : memref<9x128x128xbf16, #tpu.memory_space<vmem>>, vector<1x128x128xbf16>
    %47 = vector.shape_cast %46 : vector<1x128x128xbf16> to vector<128x128xbf16>
    %cst_30 = arith.constant dense<0.000000e+00> : vector<192x128xf32>
    %48 = tpu.matmul %45, %47, %cst_30 {dimension_numbers = #tpu.dot_dimension_numbers<[1], [0], [0], [1], [0, 0, 1, 1], [], []>} : vector<192x128xbf16>, vector<128x128xbf16>, vector<192x128xf32> -> vector<192x128xf32>
    %49 = arith.addf %43, %48 : vector<192x128xf32>
    %50 = vector.extract_strided_slice %12 {offsets = [48, 0], sizes = [192, 128], strides = [1, 1]} : vector<264x128xf32> to vector<192x128xf32>
    %51 = arith.truncf %50 : vector<192x128xf32> to vector<192x128xbf16>
    %c6 = arith.constant 6 : index
    %c0_31 = arith.constant 0 : index
    %c0_32 = arith.constant 0 : index
    %52 = vector.load %arg6[%c6, %c0_31, %c0_32] : memref<9x128x128xbf16, #tpu.memory_space<vmem>>, vector<1x128x128xbf16>
    %53 = vector.shape_cast %52 : vector<1x128x128xbf16> to vector<128x128xbf16>
    %cst_33 = arith.constant dense<0.000000e+00> : vector<192x128xf32>
    %54 = tpu.matmul %51, %53, %cst_33 {dimension_numbers = #tpu.dot_dimension_numbers<[1], [0], [0], [1], [0, 0, 1, 1], [], []>} : vector<192x128xbf16>, vector<128x128xbf16>, vector<192x128xf32> -> vector<192x128xf32>
    %55 = arith.addf %49, %54 : vector<192x128xf32>
    %56 = vector.extract_strided_slice %12 {offsets = [49, 0], sizes = [192, 128], strides = [1, 1]} : vector<264x128xf32> to vector<192x128xf32>
    %57 = arith.truncf %56 : vector<192x128xf32> to vector<192x128xbf16>
    %c7 = arith.constant 7 : index
    %c0_34 = arith.constant 0 : index
    %c0_35 = arith.constant 0 : index
    %58 = vector.load %arg6[%c7, %c0_34, %c0_35] : memref<9x128x128xbf16, #tpu.memory_space<vmem>>, vector<1x128x128xbf16>
    %59 = vector.shape_cast %58 : vector<1x128x128xbf16> to vector<128x128xbf16>
    %cst_36 = arith.constant dense<0.000000e+00> : vector<192x128xf32>
    %60 = tpu.matmul %57, %59, %cst_36 {dimension_numbers = #tpu.dot_dimension_numbers<[1], [0], [0], [1], [0, 0, 1, 1], [], []>} : vector<192x128xbf16>, vector<128x128xbf16>, vector<192x128xf32> -> vector<192x128xf32>
    %61 = arith.addf %55, %60 : vector<192x128xf32>
    %62 = vector.extract_strided_slice %12 {offsets = [50, 0], sizes = [192, 128], strides = [1, 1]} : vector<264x128xf32> to vector<192x128xf32>
    %63 = arith.truncf %62 : vector<192x128xf32> to vector<192x128xbf16>
    %c8 = arith.constant 8 : index
    %c0_37 = arith.constant 0 : index
    %c0_38 = arith.constant 0 : index
    %64 = vector.load %arg6[%c8, %c0_37, %c0_38] : memref<9x128x128xbf16, #tpu.memory_space<vmem>>, vector<1x128x128xbf16>
    %65 = vector.shape_cast %64 : vector<1x128x128xbf16> to vector<128x128xbf16>
    %cst_39 = arith.constant dense<0.000000e+00> : vector<192x128xf32>
    %66 = tpu.matmul %63, %65, %cst_39 {dimension_numbers = #tpu.dot_dimension_numbers<[1], [0], [0], [1], [0, 0, 1, 1], [], []>} : vector<192x128xbf16>, vector<128x128xbf16>, vector<192x128xf32> -> vector<192x128xf32>
    %67 = arith.addf %61, %66 : vector<192x128xf32>
    %c0_40 = arith.constant 0 : index
    %c0_41 = arith.constant 0 : index
    %68 = vector.load %arg7[%c0_40, %c0_41] : memref<1x128xf32, #tpu.memory_space<vmem>>, vector<1x128xf32>
    %69 = vector.broadcast %68 : vector<1x128xf32> to vector<192x128xf32>
    %70 = arith.addf %67, %69 : vector<192x128xf32>
    %cst_42 = arith.constant 0.000000e+00 : f32
    %71 = vector.broadcast %cst_42 : f32 to vector<192x128xf32>
    %72 = arith.maximumf %70, %71 : vector<192x128xf32>
    %73 = arith.truncf %72 : vector<192x128xf32> to vector<192x128xbf16>
    %c0_43 = arith.constant 0 : index
    %c0_44 = arith.constant 0 : index
    %74 = vector.load %arg8[%c0_43, %c0_44] : memref<128x128xbf16, #tpu.memory_space<vmem>>, vector<128x128xbf16>
    %cst_45 = arith.constant dense<0.000000e+00> : vector<192x128xf32>
    %75 = tpu.matmul %73, %74, %cst_45 {dimension_numbers = #tpu.dot_dimension_numbers<[1], [0], [0], [1], [0, 0, 1, 1], [], []>} : vector<192x128xbf16>, vector<128x128xbf16>, vector<192x128xf32> -> vector<192x128xf32>
    %c0_46 = arith.constant 0 : index
    %c0_47 = arith.constant 0 : index
    %76 = vector.load %arg9[%c0_46, %c0_47] : memref<1x128xf32, #tpu.memory_space<vmem>>, vector<1x128xf32>
    %77 = vector.broadcast %76 : vector<1x128xf32> to vector<192x128xf32>
    %78 = arith.addf %75, %77 : vector<192x128xf32>
    %c0_48 = arith.constant 0 : index
    %c0_49 = arith.constant 0 : index
    %79 = vector.load %arg10[%c0_48, %c0_49] : memref<128x128xbf16, #tpu.memory_space<vmem>>, vector<128x128xbf16>
    %cst_50 = arith.constant dense<0.000000e+00> : vector<264x128xf32>
    %80 = tpu.matmul %1, %79, %cst_50 {dimension_numbers = #tpu.dot_dimension_numbers<[1], [0], [0], [1], [0, 0, 1, 1], [], []>} : vector<264x128xbf16>, vector<128x128xbf16>, vector<264x128xf32> -> vector<264x128xf32>
    %81 = vector.extract_strided_slice %80 {offsets = [25, 0], sizes = [192, 128], strides = [1, 1]} : vector<264x128xf32> to vector<192x128xf32>
    %c0_51 = arith.constant 0 : index
    %c0_52 = arith.constant 0 : index
    %82 = vector.load %arg11[%c0_51, %c0_52] : memref<1x128xf32, #tpu.memory_space<vmem>>, vector<1x128xf32>
    %83 = vector.broadcast %82 : vector<1x128xf32> to vector<192x128xf32>
    %84 = arith.addf %81, %83 : vector<192x128xf32>
    %85 = arith.addf %78, %84 : vector<192x128xf32>
    %cst_53 = arith.constant 0.000000e+00 : f32
    %86 = vector.broadcast %cst_53 : f32 to vector<192x128xf32>
    %87 = arith.maximumf %85, %86 : vector<192x128xf32>
    %c0_54 = arith.constant 0 : index
    %c0_55 = arith.constant 0 : index
    %c0_56 = arith.constant 0 : index
    %c0_57 = arith.constant 0 : index
    %88 = vector.load %arg12[%c0_54, %c0_55, %c0_56, %c0_57] : memref<1x1x192x128xf32, #tpu.memory_space<vmem>>, vector<1x1x192x128xf32>
    %89 = vector.shape_cast %88 : vector<1x1x192x128xf32> to vector<192x128xf32>
    %90 = vector.shape_cast %87 : vector<192x128xf32> to vector<1x1x192x128xf32>
    tpu.vector_store %arg12[%c0_54, %c0_55, %c0_56, %c0_57], %90 {strides = array<i32>} : memref<1x1x192x128xf32, #tpu.memory_space<vmem>>, vector<1x1x192x128xf32>,
    return
  }
  func.func @transform_0(%arg0: i32, %arg1: i32) -> (i32, i32, i32, i32) {
    %c0_i32 = arith.constant 0 : i32
    %c0_i32_0 = arith.constant 0 : i32
    %c0_i32_1 = arith.constant 0 : i32
    return %arg0, %arg1, %c0_i32, %c0_i32_0 : i32, i32, i32, i32
  }
  func.func @transform_1(%arg0: i32, %arg1: i32) -> (i32, i32, i32) {
    %c0_i32 = arith.constant 0 : i32
    %c0_i32_0 = arith.constant 0 : i32
    %c0_i32_1 = arith.constant 0 : i32
    return %arg1, %c0_i32, %c0_i32_0 : i32, i32, i32
  }
  func.func @transform_2(%arg0: i32, %arg1: i32) -> (i32, i32) {
    %c0_i32 = arith.constant 0 : i32
    %c0_i32_0 = arith.constant 0 : i32
    %c0_i32_1 = arith.constant 0 : i32
    return %c0_i32, %c0_i32_0 : i32, i32
  }
  func.func @transform_3(%arg0: i32, %arg1: i32) -> (i32, i32) {
    %c0_i32 = arith.constant 0 : i32
    %c0_i32_0 = arith.constant 0 : i32
    %c0_i32_1 = arith.constant 0 : i32
    return %c0_i32, %c0_i32_0 : i32, i32
  }
  func.func @transform_4(%arg0: i32, %arg1: i32) -> (i32, i32, i32) {
    %c0_i32 = arith.constant 0 : i32
    %c0_i32_0 = arith.constant 0 : i32
    %c0_i32_1 = arith.constant 0 : i32
    %c0_i32_2 = arith.constant 0 : i32
    return %c0_i32, %c0_i32_0, %c0_i32_1 : i32, i32, i32
  }
  func.func @transform_5(%arg0: i32, %arg1: i32) -> (i32, i32) {
    %c0_i32 = arith.constant 0 : i32
    %c0_i32_0 = arith.constant 0 : i32
    %c0_i32_1 = arith.constant 0 : i32
    return %c0_i32, %c0_i32_0 : i32, i32
  }
  func.func @transform_6(%arg0: i32, %arg1: i32) -> (i32, i32) {
    %c0_i32 = arith.constant 0 : i32
    %c0_i32_0 = arith.constant 0 : i32
    %c0_i32_1 = arith.constant 0 : i32
    return %c0_i32, %c0_i32_0 : i32, i32
  }
  func.func @transform_7(%arg0: i32, %arg1: i32) -> (i32, i32) {
    %c0_i32 = arith.constant 0 : i32
    %c0_i32_0 = arith.constant 0 : i32
    %c0_i32_1 = arith.constant 0 : i32
    return %c0_i32, %c0_i32_0 : i32, i32
  }
  func.func @transform_8(%arg0: i32, %arg1: i32) -> (i32, i32) {
    %c0_i32 = arith.constant 0 : i32
    %c0_i32_0 = arith.constant 0 : i32
    %c0_i32_1 = arith.constant 0 : i32
    return %c0_i32, %c0_i32_0 : i32, i32
  }
  func.func @transform_9(%arg0: i32, %arg1: i32) -> (i32, i32) {
    %c0_i32 = arith.constant 0 : i32
    %c0_i32_0 = arith.constant 0 : i32
    %c0_i32_1 = arith.constant 0 : i32
    return %c0_i32, %c0_i32_0 : i32, i32
  }
  func.func @transform_10(%arg0: i32, %arg1: i32) -> (i32, i32, i32, i32) {
    %c0_i32 = arith.constant 0 : i32
    %c0_i32_0 = arith.constant 0 : i32
    %c0_i32_1 = arith.constant 0 : i32
    return %arg0, %arg1, %c0_i32, %c0_i32_0 : i32, i32, i32, i32
  }
}

</mosaic_0001>

<llo_original>
// kernel: tpu_custom_call.1
$region0: #{tpu_custom_call.1}
  #allocation0 [shape = 'u32[]', space=smem, size = 0x4, offset = 0x4, fixed_abs, tag = 'smem constant byte address 0x4 - core index']
  #allocation1 [shape = 'u32[144,128]{1,0:T(1,128)}', space=vmem, size = 0x12000, scoped, tag = 'internal scratch']
  %s0 = inlined_call_operand.vmem [shape: bf16[2,2,264,128], index: 0, kind: input, shape index: {}]
  %s1 = inlined_call_operand.vmem [shape: f32[2,264,1], index: 1, kind: input, shape index: {}]
  %s2 = inlined_call_operand.hbm [shape: bf16[128,128], index: 2, kind: input, shape index: {}]
  %s3 = inlined_call_operand.vmem [shape: f32[1,128], index: 3, kind: input, shape index: {}]
  %s4 = inlined_call_operand.hbm [shape: bf16[9,128,128], index: 4, kind: input, shape index: {}]
  %s5 = inlined_call_operand.vmem [shape: f32[1,128], index: 5, kind: input, shape index: {}]
  %s6 = inlined_call_operand.hbm [shape: bf16[128,128], index: 6, kind: input, shape index: {}]
  %s7 = inlined_call_operand.vmem [shape: f32[1,128], index: 7, kind: input, shape index: {}]
  %s8 = inlined_call_operand.hbm [shape: bf16[128,128], index: 8, kind: input, shape index: {}]
  %s9 = inlined_call_operand.vmem [shape: f32[1,128], index: 9, kind: input, shape index: {}]
  %s10 = inlined_call_operand.hbm [shape: f32[2,2,192,128], index: 10, kind: output, shape index: {}]
  %s11 = sld [smem:[#allocation0]]
  $region89: #{tpu_custom_call.1} parent=0
    _
  %s13 = ssub.s32 1, %s11
  %s14 = scalar_select 0, %s13, %s11
  $region1: #{tpu_custom_call.1} parent=0
    #allocation2 [shape = 'u8[32768]{0}', space=vmem, size = 0x8000, scoped, tag = 'input window, operand 2, single buffered']
    #allocation3 [shape = 's32[2]{0}', space=sflag, size = 0x8, scoped, tag = 'scoped memory for tpu_custom_call.1']
    #allocation4 [shape = 's32[2]{0}', space=sflag, size = 0x8, scoped, tag = 'scoped memory for tpu_custom_call.1']
    #allocation5 [shape = 'u8[294912]{0}', space=vmem, size = 0x48000, scoped, tag = 'input window, operand 4, single buffered']
    #allocation6 [shape = 's32[1]{0}', space=sflag, size = 0x4, scoped, tag = 'scoped memory for tpu_custom_call.1']
    #allocation7 [shape = 'u8[32768]{0}', space=vmem, size = 0x8000, scoped, tag = 'input window, operand 6, single buffered']
    #allocation8 [shape = 'u8[32768]{0}', space=vmem, size = 0x8000, scoped, tag = 'input window, operand 8, single buffered']
    #allocation9 [shape = 's32[1]{0}', space=sflag, size = 0x4, scoped, tag = 'scoped memory for tpu_custom_call.1']
    #allocation10 [shape = 'u8[196608]{0}', space=vmem, size = 0x30000, scoped, tag = 'output window, operand 0']
    %15 = vsyncpa [#allocation3], 0
    %16 = vsyncpa [#allocation6], 0
    %17 = vsyncpa [#allocation9], 0
    %18 = vsyncpa [#allocation4], 0
    %s19 = scalar_lea.sflag [#allocation4], 1
    %20 = vsyncpa %s19, 0
    loop: start=0, step=1, limit=6
    $region2: #{tpu_custom_call.1} parent=1 // loop_pre_header
      _
    $region3: #{tpu_custom_call.1} parent=1 // loop_header
      %s22 = sphi 0, %s26
      %p23 = scmp.ge.s32.totalorder %s22, 6
      %s29 = sphi 0, %s41
      %s30 = sphi 0, %s37
      %s31 = sphi 0, %s29
      %s32 = sphi 0, %s30
      %s33 = sphi 0, %s31
      %s34 = sphi 0, %s32
      %s46 = sphi 0, %s48
      %s49 = sphi 0, %s46
      %s50 = sphi 0, %s49
      %s66 = sphi 0, %s50
      %s72 = sphi 0, %s74
      %s75 = sphi 0, %s72
      %s76 = sphi 0, %s75
      %s92 = sphi 0, %s76
      %s96 = sphi 0, %s96
      %s98 = sphi 0, %s96
      %s99 = sphi 0, %s98
      %s113 = sphi 0, %s99
      %s117 = sphi 0, %s117
      %s119 = sphi 0, %s117
      %s120 = sphi 0, %s119
      %s134 = sphi 0, %s120
      %s138 = sphi 0, %s138
      %s140 = sphi 0, %s138
      %s141 = sphi 0, %s140
      %s155 = sphi 0, %s141
      %s159 = sphi 0, %s159
      %s161 = sphi 0, %s159
      %s162 = sphi 0, %s161
      %s176 = sphi 0, %s162
      %s180 = sphi 0, %s180
      %s182 = sphi 0, %s180
      %s183 = sphi 0, %s182
      %s197 = sphi 0, %s183
      %s201 = sphi 0, %s201
      %s203 = sphi 0, %s201
      %s204 = sphi 0, %s203
      %s218 = sphi 0, %s204
      %s222 = sphi 0, %s222
      %s224 = sphi 0, %s222
      %s225 = sphi 0, %s224
      %s239 = sphi 0, %s225
      %s243 = sphi 0, %s243
      %s245 = sphi 0, %s243
      %s246 = sphi 0, %s245
      %s260 = sphi 0, %s246
      %s268 = sphi 0, %s270
      %s271 = sphi 0, %s268
      %s272 = sphi 0, %s271
      %s288 = sphi 0, %s272
    $region4: #{tpu_custom_call.1} parent=1 // loop_header_branch
      %25 = sbr.rel (%p23) target = $region8
    $region5: #{tpu_custom_call.1} parent=1 // loop_body
      %s27 = ssub.s32 %s22, 1
      %s28 = ssub.s32 %s22, 2
      %s35 = sadd.s32 1, %s30
      %p36 = scmp.ge.s32.totalorder %s35, 2
      %s37 = scalar_select %p36, 0, %s35
      %s38 = sadd.s32 1, %s29
      %s39 = scalar_select %p36, %s38, %s29
      %p40 = scmp.ge.s32.totalorder %s39, 2
      %s41 = scalar_select %p40, 0, %s39
      %s42 = ssub.s32 %s29, %s41
      %s43 = ssub.s32 %s30, %s37
      %s44 = sor.u32 %s42, %s43
      %p45 = scmp.eq.s32.totalorder %s44, 0
      %s47 = sadd.s32 %s46, 1
      %s48 = scalar_select %p45, %s46, %s47
      %p51 = pneg %p45
      %p52 = scmp.eq.s32.totalorder %s22, 3
      %p53 = por %p51, %p52
      %p54 = scmp.ne.s32.totalorder %s46, %s49
      %p55 = scmp.eq.s32.totalorder %s22, 0
      %p56 = por %p54, %p55
      %p57 = scmp.ne.s32.totalorder %s46, %s49
      %p58 = scmp.eq.s32.totalorder %s27, 3
      %p59 = por %p57, %p58
      %p60 = scmp.ne.s32.totalorder %s49, %s50
      %p61 = scmp.eq.s32.totalorder %s27, 0
      %p62 = por %p60, %p61
      %p63 = scmp.ne.s32.totalorder %s49, %s50
      %p64 = scmp.eq.s32.totalorder %s28, 3
      %p65 = por %p63, %p64
      %p67 = scmp.ne.s32.totalorder %s50, %s66
      %p68 = scmp.eq.s32.totalorder %s28, 0
      %p69 = por %p67, %p68
      %s70 = ssub.s32 %s30, %s37
      %p71 = scmp.eq.s32.totalorder %s70, 0
      %s73 = sadd.s32 %s72, 1
      %s74 = scalar_select %p71, %s72, %s73
      %p77 = pneg %p71
      %p78 = scmp.eq.s32.totalorder %s22, 3
      %p79 = por %p77, %p78
      %p80 = scmp.ne.s32.totalorder %s72, %s75
      %p81 = scmp.eq.s32.totalorder %s22, 0
      %p82 = por %p80, %p81
      %p83 = scmp.ne.s32.totalorder %s72, %s75
      %p84 = scmp.eq.s32.totalorder %s27, 3
      %p85 = por %p83, %p84
      %p86 = scmp.ne.s32.totalorder %s75, %s76
      %p87 = scmp.eq.s32.totalorder %s27, 0
      %p88 = por %p86, %p87
      %p89 = scmp.ne.s32.totalorder %s75, %s76
      %p90 = scmp.eq.s32.totalorder %s28, 3
      %p91 = por %p89, %p90
      %p93 = scmp.ne.s32.totalorder %s76, %s92
      %p94 = scmp.eq.s32.totalorder %s28, 0
      %p95 = por %p93, %p94
      %s97 = sadd.s32 %s96, 1
      %p100 = scmp.eq.s32.totalorder %s22, 3
      %p101 = scmp.ne.s32.totalorder %s96, %s98
      %p102 = scmp.eq.s32.totalorder %s22, 0
      %p103 = por %p101, %p102
      %p104 = scmp.ne.s32.totalorder %s96, %s98
      %p105 = scmp.eq.s32.totalorder %s27, 3
      %p106 = por %p104, %p105
      %p107 = scmp.ne.s32.totalorder %s98, %s99
      %p108 = scmp.eq.s32.totalorder %s27, 0
      %p109 = por %p107, %p108
      %p110 = scmp.ne.s32.totalorder %s98, %s99
      %p111 = scmp.eq.s32.totalorder %s28, 3
      %p112 = por %p110, %p111
      %p114 = scmp.ne.s32.totalorder %s99, %s113
      %p115 = scmp.eq.s32.totalorder %s28, 0
      %p116 = por %p114, %p115
      %s118 = sadd.s32 %s117, 1
      %p121 = scmp.eq.s32.totalorder %s22, 3
      %p122 = scmp.ne.s32.totalorder %s117, %s119
      %p123 = scmp.eq.s32.totalorder %s22, 0
      %p124 = por %p122, %p123
      %p125 = scmp.ne.s32.totalorder %s117, %s119
      %p126 = scmp.eq.s32.totalorder %s27, 3
      %p127 = por %p125, %p126
      %p128 = scmp.ne.s32.totalorder %s119, %s120
      %p129 = scmp.eq.s32.totalorder %s27, 0
      %p130 = por %p128, %p129
      %p131 = scmp.ne.s32.totalorder %s119, %s120
      %p132 = scmp.eq.s32.totalorder %s28, 3
      %p133 = por %p131, %p132
      %p135 = scmp.ne.s32.totalorder %s120, %s134
      %p136 = scmp.eq.s32.totalorder %s28, 0
      %p137 = por %p135, %p136
      %s139 = sadd.s32 %s138, 1
      %p142 = scmp.eq.s32.totalorder %s22, 3
      %p143 = scmp.ne.s32.totalorder %s138, %s140
      %p144 = scmp.eq.s32.totalorder %s22, 0
      %p145 = por %p143, %p144
      %p146 = scmp.ne.s32.totalorder %s138, %s140
      %p147 = scmp.eq.s32.totalorder %s27, 3
      %p148 = por %p146, %p147
      %p149 = scmp.ne.s32.totalorder %s140, %s141
      %p150 = scmp.eq.s32.totalorder %s27, 0
      %p151 = por %p149, %p150
      %p152 = scmp.ne.s32.totalorder %s140, %s141
      %p153 = scmp.eq.s32.totalorder %s28, 3
      %p154 = por %p152, %p153
      %p156 = scmp.ne.s32.totalorder %s141, %s155
      %p157 = scmp.eq.s32.totalorder %s28, 0
      %p158 = por %p156, %p157
      %s160 = sadd.s32 %s159, 1
      %p163 = scmp.eq.s32.totalorder %s22, 3
      %p164 = scmp.ne.s32.totalorder %s159, %s161
      %p165 = scmp.eq.s32.totalorder %s22, 0
      %p166 = por %p164, %p165
      %p167 = scmp.ne.s32.totalorder %s159, %s161
      %p168 = scmp.eq.s32.totalorder %s27, 3
      %p169 = por %p167, %p168
      %p170 = scmp.ne.s32.totalorder %s161, %s162
      %p171 = scmp.eq.s32.totalorder %s27, 0
      %p172 = por %p170, %p171
      %p173 = scmp.ne.s32.totalorder %s161, %s162
      %p174 = scmp.eq.s32.totalorder %s28, 3
      %p175 = por %p173, %p174
      %p177 = scmp.ne.s32.totalorder %s162, %s176
      %p178 = scmp.eq.s32.totalorder %s28, 0
      %p179 = por %p177, %p178
      %s181 = sadd.s32 %s180, 1
      %p184 = scmp.eq.s32.totalorder %s22, 3
      %p185 = scmp.ne.s32.totalorder %s180, %s182
      %p186 = scmp.eq.s32.totalorder %s22, 0
      %p187 = por %p185, %p186
      %p188 = scmp.ne.s32.totalorder %s180, %s182
      %p189 = scmp.eq.s32.totalorder %s27, 3
      %p190 = por %p188, %p189
      %p191 = scmp.ne.s32.totalorder %s182, %s183
      %p192 = scmp.eq.s32.totalorder %s27, 0
      %p193 = por %p191, %p192
      %p194 = scmp.ne.s32.totalorder %s182, %s183
      %p195 = scmp.eq.s32.totalorder %s28, 3
      %p196 = por %p194, %p195
      %p198 = scmp.ne.s32.totalorder %s183, %s197
      %p199 = scmp.eq.s32.totalorder %s28, 0
      %p200 = por %p198, %p199
      %s202 = sadd.s32 %s201, 1
      %p205 = scmp.eq.s32.totalorder %s22, 3
      %p206 = scmp.ne.s32.totalorder %s201, %s203
      %p207 = scmp.eq.s32.totalorder %s22, 0
      %p208 = por %p206, %p207
      %p209 = scmp.ne.s32.totalorder %s201, %s203
      %p210 = scmp.eq.s32.totalorder %s27, 3
      %p211 = por %p209, %p210
      %p212 = scmp.ne.s32.totalorder %s203, %s204
      %p213 = scmp.eq.s32.totalorder %s27, 0
      %p214 = por %p212, %p213
      %p215 = scmp.ne.s32.totalorder %s203, %s204
      %p216 = scmp.eq.s32.totalorder %s28, 3
      %p217 = por %p215, %p216
      %p219 = scmp.ne.s32.totalorder %s204, %s218
      %p220 = scmp.eq.s32.totalorder %s28, 0
      %p221 = por %p219, %p220
      %s223 = sadd.s32 %s222, 1
      %p226 = scmp.eq.s32.totalorder %s22, 3
      %p227 = scmp.ne.s32.totalorder %s222, %s224
      %p228 = scmp.eq.s32.totalorder %s22, 0
      %p229 = por %p227, %p228
      %p230 = scmp.ne.s32.totalorder %s222, %s224
      %p231 = scmp.eq.s32.totalorder %s27, 3
      %p232 = por %p230, %p231
      %p233 = scmp.ne.s32.totalorder %s224, %s225
      %p234 = scmp.eq.s32.totalorder %s27, 0
      %p235 = por %p233, %p234
      %p236 = scmp.ne.s32.totalorder %s224, %s225
      %p237 = scmp.eq.s32.totalorder %s28, 3
      %p238 = por %p236, %p237
      %p240 = scmp.ne.s32.totalorder %s225, %s239
      %p241 = scmp.eq.s32.totalorder %s28, 0
      %p242 = por %p240, %p241
      %s244 = sadd.s32 %s243, 1
      %p247 = scmp.eq.s32.totalorder %s22, 3
      %p248 = scmp.ne.s32.totalorder %s243, %s245
      %p249 = scmp.eq.s32.totalorder %s22, 0
      %p250 = por %p248, %p249
      %p251 = scmp.ne.s32.totalorder %s243, %s245
      %p252 = scmp.eq.s32.totalorder %s27, 3
      %p253 = por %p251, %p252
      %p254 = scmp.ne.s32.totalorder %s245, %s246
      %p255 = scmp.eq.s32.totalorder %s27, 0
      %p256 = por %p254, %p255
      %p257 = scmp.ne.s32.totalorder %s245, %s246
      %p258 = scmp.eq.s32.totalorder %s28, 3
      %p259 = por %p257, %p258
      %p261 = scmp.ne.s32.totalorder %s246, %s260
      %p262 = scmp.eq.s32.totalorder %s28, 0
      %p263 = por %p261, %p262
      %s264 = ssub.s32 %s29, %s41
      %s265 = ssub.s32 %s30, %s37
      %s266 = sor.u32 %s264, %s265
      %p267 = scmp.eq.s32.totalorder %s266, 0
      %s269 = sadd.s32 %s268, 1
      %s270 = scalar_select %p267, %s268, %s269
      %p273 = pneg %p267
      %p274 = scmp.eq.s32.totalorder %s22, 3
      %p275 = por %p273, %p274
      %p276 = scmp.ne.s32.totalorder %s268, %s271
      %p277 = scmp.eq.s32.totalorder %s22, 0
      %p278 = por %p276, %p277
      %p279 = scmp.ne.s32.totalorder %s268, %s271
      %p280 = scmp.eq.s32.totalorder %s27, 3
      %p281 = por %p279, %p280
      %p282 = scmp.ne.s32.totalorder %s271, %s272
      %p283 = scmp.eq.s32.totalorder %s27, 0
      %p284 = por %p282, %p283
      %p285 = scmp.ne.s32.totalorder %s271, %s272
      %p286 = scmp.eq.s32.totalorder %s28, 3
      %p287 = por %p285, %p286
      %p289 = scmp.ne.s32.totalorder %s272, %s288
      %p290 = scmp.eq.s32.totalorder %s28, 0
      %p291 = por %p289, %p290
      %p292 = scmp.le.s32.totalorder 1, %s22
      %p293 = scmp.lt.s32.totalorder %s22, 5
      %p294 = pnand %p292, %p293
      %p295 = pneg %p294
      // Predicated region
      $region9: #{tpu_custom_call.1} parent=5 // pred_check
        _
      $region10: #{tpu_custom_call.1} parent=5 // pred_check_branch
        %297 = sbr.rel (%p294) target = $region12
      $region11: #{tpu_custom_call.1} parent=5 // pred_region
        %s298 = ssub.s32 %s22, 1
        // Predicated region
        $region13: #{tpu_custom_call.1} parent=11 // pred_check
          %p299 = pneg %p109
        $region14: #{tpu_custom_call.1} parent=11 // pred_check_branch
          %301 = sbr.rel (%p299) target = $region16
        $region15: #{tpu_custom_call.1} parent=11 // pred_region
          %s303 = ssub.s32 1024, 1024
          %304 = vsyncadd [#allocation3], %s303
          %s305 = sshll.u32 [#allocation2], 4
          %s306 = int_to_ptr.vmem [resolvable:$true] %s305
          %311 = dma.hbm_to_vmem [thread:$0]  %s2, 1024, %s306, [#allocation3], 64, 64, 4
        $region16: #{tpu_custom_call.1} parent=11 // pred_fallthru
          _
        // Predicated region
        $region17: #{tpu_custom_call.1} parent=11 // pred_check
          %p312 = pneg %p130
        $region18: #{tpu_custom_call.1} parent=11 // pred_check_branch
          %314 = sbr.rel (%p312) target = $region20
        $region19: #{tpu_custom_call.1} parent=11 // pred_region
          _
        $region20: #{tpu_custom_call.1} parent=11 // pred_fallthru
          _
        // Predicated region
        $region21: #{tpu_custom_call.1} parent=11 // pred_check
          %p315 = pneg %p151
        $region22: #{tpu_custom_call.1} parent=11 // pred_check_branch
          %317 = sbr.rel (%p315) target = $region24
        $region23: #{tpu_custom_call.1} parent=11 // pred_region
          %s319 = ssub.s32 9216, 9216
          %320 = vsyncadd [#allocation6], %s319
          %s321 = sshll.u32 [#allocation5], 4
          %s322 = int_to_ptr.vmem [resolvable:$true] %s321
          %327 = dma.hbm_to_vmem [thread:$0]  %s4, 9216, %s322, [#allocation6], 64, 64, 4
        $region24: #{tpu_custom_call.1} parent=11 // pred_fallthru
          _
        // Predicated region
        $region25: #{tpu_custom_call.1} parent=11 // pred_check
          %p328 = pneg %p172
        $region26: #{tpu_custom_call.1} parent=11 // pred_check_branch
          %330 = sbr.rel (%p328) target = $region28
        $region27: #{tpu_custom_call.1} parent=11 // pred_region
          _
        $region28: #{tpu_custom_call.1} parent=11 // pred_fallthru
          _
        // Predicated region
        $region29: #{tpu_custom_call.1} parent=11 // pred_check
          %p331 = pneg %p193
        $region30: #{tpu_custom_call.1} parent=11 // pred_check_branch
          %333 = sbr.rel (%p331) target = $region32
        $region31: #{tpu_custom_call.1} parent=11 // pred_region
          %s335 = ssub.s32 1024, 1024
          %336 = vsyncadd [#allocation6], %s335
          %s337 = sshll.u32 [#allocation7], 4
          %s338 = int_to_ptr.vmem [resolvable:$true] %s337
          %343 = dma.hbm_to_vmem [thread:$0]  %s6, 1024, %s338, [#allocation6], 64, 64, 4
        $region32: #{tpu_custom_call.1} parent=11 // pred_fallthru
          _
        // Predicated region
        $region33: #{tpu_custom_call.1} parent=11 // pred_check
          %p344 = pneg %p214
        $region34: #{tpu_custom_call.1} parent=11 // pred_check_branch
          %346 = sbr.rel (%p344) target = $region36
        $region35: #{tpu_custom_call.1} parent=11 // pred_region
          _
        $region36: #{tpu_custom_call.1} parent=11 // pred_fallthru
          _
        // Predicated region
        $region37: #{tpu_custom_call.1} parent=11 // pred_check
          %p347 = pneg %p235
        $region38: #{tpu_custom_call.1} parent=11 // pred_check_branch
          %349 = sbr.rel (%p347) target = $region40
        $region39: #{tpu_custom_call.1} parent=11 // pred_region
          %s351 = ssub.s32 1024, 1024
          %352 = vsyncadd [#allocation9], %s351
          %s353 = sshll.u32 [#allocation8], 4
          %s354 = int_to_ptr.vmem [resolvable:$true] %s353
          %359 = dma.hbm_to_vmem [thread:$0]  %s8, 1024, %s354, [#allocation9], 64, 64, 4
        $region40: #{tpu_custom_call.1} parent=11 // pred_fallthru
          _
        // Predicated region
        $region41: #{tpu_custom_call.1} parent=11 // pred_check
          %p360 = pneg %p256
        $region42: #{tpu_custom_call.1} parent=11 // pred_check_branch
          %362 = sbr.rel (%p360) target = $region44
        $region43: #{tpu_custom_call.1} parent=11 // pred_region
          _
        $region44: #{tpu_custom_call.1} parent=11 // pred_fallthru
          _
      $region12: #{tpu_custom_call.1} parent=5 // pred_fallthru
        _
      %p363 = scmp.lt.s32.totalorder %s22, 4
      // Predicated region
      $region45: #{tpu_custom_call.1} parent=5 // pred_check
        %p364 = pneg %p363
      $region46: #{tpu_custom_call.1} parent=5 // pred_check_branch
        %366 = sbr.rel (%p364) target = $region48
      $region47: #{tpu_custom_call.1} parent=5 // pred_region
        // Predicated region
        $region49: #{tpu_custom_call.1} parent=47 // pred_check
          %p367 = pneg %p56
        $region50: #{tpu_custom_call.1} parent=47 // pred_check_branch
          %369 = sbr.rel (%p367) target = $region52
        $region51: #{tpu_custom_call.1} parent=47 // pred_region
          %p370 = scmp.lt.s32.totalorder %s29, 1
          %s371 = scalar_select %p370, %s29, 1
          %p372 = scmp.lt.s32.totalorder %s30, 1
          %s373 = scalar_select %p372, %s30, 1
          %s374 = smul.addr %s373, 33
          %s375 = smul.addr %s371, 66
          %s376 = sadd.s32 %s374, %s375
          %s377 = smul.addr %s376, 4
          %s378 = scalar_lea.vmem %s0, %s377
        $region52: #{tpu_custom_call.1} parent=47 // pred_fallthru
          _
        // Predicated region
        $region53: #{tpu_custom_call.1} parent=47 // pred_check
          %p379 = pneg %p82
        $region54: #{tpu_custom_call.1} parent=47 // pred_check_branch
          %381 = sbr.rel (%p379) target = $region56
        $region55: #{tpu_custom_call.1} parent=47 // pred_region
          %p382 = scmp.lt.s32.totalorder %s30, 1
          %s383 = scalar_select %p382, %s30, 1
          %s384 = smul.addr %s383, 33
          %s385 = smul.addr %s384, 8
          %s386 = scalar_lea.vmem %s1, %s385
        $region56: #{tpu_custom_call.1} parent=47 // pred_fallthru
          _
      $region48: #{tpu_custom_call.1} parent=5 // pred_fallthru
        _
      %p387 = scmp.le.s32.totalorder 1, %s22
      %p388 = scmp.lt.s32.totalorder %s22, 5
      %p389 = pnand %p387, %p388
      %p390 = pneg %p389
      // Predicated region
      $region57: #{tpu_custom_call.1} parent=5 // pred_check
        _
      $region58: #{tpu_custom_call.1} parent=5 // pred_check_branch
        %392 = sbr.rel (%p389) target = $region60
      $region59: #{tpu_custom_call.1} parent=5 // pred_region
        %s393 = ssub.s32 %s22, 1
        // Predicated region
        $region61: #{tpu_custom_call.1} parent=59 // pred_check
          %p394 = pneg %p109
        $region62: #{tpu_custom_call.1} parent=59 // pred_check_branch
          %396 = sbr.rel (%p394) target = $region64
        $region63: #{tpu_custom_call.1} parent=59 // pred_region
          %397 = dma.done [#allocation3], 1024
        $region64: #{tpu_custom_call.1} parent=59 // pred_fallthru
          _
        // Predicated region
        $region65: #{tpu_custom_call.1} parent=59 // pred_check
          %p398 = pneg %p151
        $region66: #{tpu_custom_call.1} parent=59 // pred_check_branch
          %400 = sbr.rel (%p398) target = $region68
        $region67: #{tpu_custom_call.1} parent=59 // pred_region
          %401 = dma.done [#allocation6], 9216
        $region68: #{tpu_custom_call.1} parent=59 // pred_fallthru
          _
        // Predicated region
        $region69: #{tpu_custom_call.1} parent=59 // pred_check
          %p402 = pneg %p193
        $region70: #{tpu_custom_call.1} parent=59 // pred_check_branch
          %404 = sbr.rel (%p402) target = $region72
        $region71: #{tpu_custom_call.1} parent=59 // pred_region
          %405 = dma.done [#allocation6], 1024
        $region72: #{tpu_custom_call.1} parent=59 // pred_fallthru
          _
        // Predicated region
        $region73: #{tpu_custom_call.1} parent=59 // pred_check
          %p406 = pneg %p235
        $region74: #{tpu_custom_call.1} parent=59 // pred_check_branch
          %408 = sbr.rel (%p406) target = $region76
        $region75: #{tpu_custom_call.1} parent=59 // pred_region
          %409 = dma.done [#allocation9], 1024
        $region76: #{tpu_custom_call.1} parent=59 // pred_fallthru
          _
        %p410 = scmp.lt.s32.totalorder %s31, 1
        %s411 = scalar_select %p410, %s31, 1
        %p412 = scmp.lt.s32.totalorder %s32, 1
        %s413 = scalar_select %p412, %s32, 1
        %s414 = smul.addr %s413, 33
        %s415 = smul.addr %s411, 66
        %s416 = sadd.s32 %s414, %s415
        %s417 = smul.addr %s416, 4
        %s418 = scalar_lea.vmem %s0, %s417
        %p419 = pneg %p62
        %p420 = pneg %p59
        %p421 = scmp.lt.s32.totalorder %s32, 1
        %s422 = scalar_select %p421, %s32, 1
        %s423 = smul.addr %s422, 33
        %s424 = smul.addr %s423, 8
        %s425 = scalar_lea.vmem %s1, %s424
        %p426 = pneg %p88
        %p427 = pneg %p85
        %p428 = pneg %p109
        %p429 = pneg %p106
        %p430 = pneg %p130
        %p431 = pneg %p127
        %p432 = pneg %p151
        %p433 = pneg %p148
        %p434 = pneg %p172
        %p435 = pneg %p169
        %p436 = pneg %p193
        %p437 = pneg %p190
        %p438 = pneg %p214
        %p439 = pneg %p211
        %p440 = pneg %p235
        %p441 = pneg %p232
        %p442 = pneg %p256
        %p443 = pneg %p253
        %p444 = pneg %p284
        %p445 = pneg %p281
        %s446 = sand.u32 %s271, 1
        %s447 = scalar_lea.sflag [#allocation4], %s446
        %s448 = sand.u32 %s271, 1
        %s449 = smul.addr %s448, 192
        %s450 = scalar_lea.vmem [#allocation10], %s449
        %p451 = scmp.lt.s32.totalorder %s31, 1
        %s452 = scalar_select %p451, %s31, 1
        %p453 = scmp.lt.s32.totalorder %s32, 1
        %s454 = scalar_select %p453, %s32, 1
        %s455 = smul.addr %s454, 33
        %s456 = smul.addr %s452, 66
        %s457 = sadd.s32 %s455, %s456
        %s458 = smul.addr %s457, 4
        %s459 = scalar_lea.vmem %s0, %s458
        %p460 = scmp.lt.s32.totalorder %s32, 1
        %s461 = scalar_select %p460, %s32, 1
        %s462 = smul.addr %s461, 33
        %s463 = smul.addr %s462, 8
        %s464 = scalar_lea.vmem %s1, %s463
        %v466 = vld [vmem:[%s459] sm:$0xf]
        %v467 = vld [vmem:[%s459 + $0x4] sm:$0xf]
        %v468 = vld [vmem:[%s459 + $0x8] sm:$0xf]
        %v469 = vld [vmem:[%s459 + $0xc] sm:$0xf]
        %v470 = vld [vmem:[%s459 + $0x10] sm:$0xf]
        %v471 = vld [vmem:[%s459 + $0x14] sm:$0xf]
        %v472 = vld [vmem:[%s459 + $0x18] sm:$0xf]
        %v473 = vld [vmem:[%s459 + $0x1c] sm:$0xf]
        %v474 = vld [vmem:[%s459 + $0x20] sm:$0xf]
        %v475 = vld [vmem:[%s459 + $0x24] sm:$0xf]
        %v476 = vld [vmem:[%s459 + $0x28] sm:$0xf]
        %v477 = vld [vmem:[%s459 + $0x2c] sm:$0xf]
        %v478 = vld [vmem:[%s459 + $0x30] sm:$0xf]
        %v479 = vld [vmem:[%s459 + $0x34] sm:$0xf]
        %v480 = vld [vmem:[%s459 + $0x38] sm:$0xf]
        %v481 = vld [vmem:[%s459 + $0x3c] sm:$0xf]
        %v482 = vld [vmem:[%s459 + $0x40] sm:$0xf]
        %v483 = vld [vmem:[%s459 + $0x44] sm:$0xf]
        %v484 = vld [vmem:[%s459 + $0x48] sm:$0xf]
        %v485 = vld [vmem:[%s459 + $0x4c] sm:$0xf]
        %v486 = vld [vmem:[%s459 + $0x50] sm:$0xf]
        %v487 = vld [vmem:[%s459 + $0x54] sm:$0xf]
        %v488 = vld [vmem:[%s459 + $0x58] sm:$0xf]
        %v489 = vld [vmem:[%s459 + $0x5c] sm:$0xf]
        %v490 = vld [vmem:[%s459 + $0x60] sm:$0xf]
        %v491 = vld [vmem:[%s459 + $0x64] sm:$0xf]
        %v492 = vld [vmem:[%s459 + $0x68] sm:$0xf]
        %v493 = vld [vmem:[%s459 + $0x6c] sm:$0xf]
        %v494 = vld [vmem:[%s459 + $0x70] sm:$0xf]
        %v495 = vld [vmem:[%s459 + $0x74] sm:$0xf]
        %v496 = vld [vmem:[%s459 + $0x78] sm:$0xf]
        %v497 = vld [vmem:[%s459 + $0x7c] sm:$0xf]
        %v498 = vld [vmem:[%s459 + $0x80] sm:$0xf]
        %v499 = vld [vmem:[%s464] sm:$0xff]
        %v500 = vld [vmem:[%s464 + $0x8] sm:$0xff]
        %v501 = vld [vmem:[%s464 + $0x10] sm:$0xff]
        %v502 = vld [vmem:[%s464 + $0x18] sm:$0xff]
        %v503 = vld [vmem:[%s464 + $0x20] sm:$0xff]
        %v504 = vld [vmem:[%s464 + $0x28] sm:$0xff]
        %v505 = vld [vmem:[%s464 + $0x30] sm:$0xff]
        %v506 = vld [vmem:[%s464 + $0x38] sm:$0xff]
        %v507 = vld [vmem:[%s464 + $0x40] sm:$0xff]
        %v508 = vld [vmem:[%s464 + $0x48] sm:$0xff]
        %v509 = vld [vmem:[%s464 + $0x50] sm:$0xff]
        %v510 = vld [vmem:[%s464 + $0x58] sm:$0xff]
        %v511 = vld [vmem:[%s464 + $0x60] sm:$0xff]
        %v512 = vld [vmem:[%s464 + $0x68] sm:$0xff]
        %v513 = vld [vmem:[%s464 + $0x70] sm:$0xff]
        %v514 = vld [vmem:[%s464 + $0x78] sm:$0xff]
        %v515 = vld [vmem:[%s464 + $0x80] sm:$0xff]
        %v516 = vld [vmem:[%s464 + $0x88] sm:$0xff]
        %v517 = vld [vmem:[%s464 + $0x90] sm:$0xff]
        %v518 = vld [vmem:[%s464 + $0x98] sm:$0xff]
        %v519 = vld [vmem:[%s464 + $0xa0] sm:$0xff]
        %v520 = vld [vmem:[%s464 + $0xa8] sm:$0xff]
        %v521 = vld [vmem:[%s464 + $0xb0] sm:$0xff]
        %v522 = vld [vmem:[%s464 + $0xb8] sm:$0xff]
        %v523 = vld [vmem:[%s464 + $0xc0] sm:$0xff]
        %v524 = vld [vmem:[%s464 + $0xc8] sm:$0xff]
        %v525 = vld [vmem:[%s464 + $0xd0] sm:$0xff]
        %v526 = vld [vmem:[%s464 + $0xd8] sm:$0xff]
        %v527 = vld [vmem:[%s464 + $0xe0] sm:$0xff]
        %v528 = vld [vmem:[%s464 + $0xe8] sm:$0xff]
        %v529 = vld [vmem:[%s464 + $0xf0] sm:$0xff]
        %v530 = vld [vmem:[#allocation2] sm:$0xf]
        %v531 = vld [vmem:[#allocation2 + $0x4] sm:$0xf]
        %v532 = vld [vmem:[#allocation2 + $0x8] sm:$0xf]
        %v533 = vld [vmem:[#allocation2 + $0xc] sm:$0xf]
        %v534 = vld [vmem:[#allocation2 + $0x10] sm:$0xf]
        %v535 = vld [vmem:[#allocation2 + $0x14] sm:$0xf]
        %v536 = vld [vmem:[#allocation2 + $0x18] sm:$0xf]
        %v537 = vld [vmem:[#allocation2 + $0x1c] sm:$0xf]
        %v538 = vld [vmem:[#allocation2 + $0x20] sm:$0xf]
        %v539 = vld [vmem:[#allocation2 + $0x24] sm:$0xf]
        %v540 = vld [vmem:[#allocation2 + $0x28] sm:$0xf]
        %v541 = vld [vmem:[#allocation2 + $0x2c] sm:$0xf]
        %v542 = vld [vmem:[#allocation2 + $0x30] sm:$0xf]
        %v543 = vld [vmem:[#allocation2 + $0x34] sm:$0xf]
        %v544 = vld [vmem:[#allocation2 + $0x38] sm:$0xf]
        %v545 = vld [vmem:[#allocation2 + $0x3c] sm:$0xf]
        %v546 = vld [vmem:[%s3] sm:$0x1]
        %v548 = vlaneseq
        %v549 = vshrl.u32 %v548, 7
        %v550 = vsub.s32 0, %v549
        %v551 = vrot.slane %v546, %v550
        %v586 = vunpack.c.l.b16 %v466
        %v587 = vunpack.c.l.b16 %v467
        %v588 = vunpack.c.l.b16 %v468
        %v589 = vunpack.c.l.b16 %v469
        %v590 = vunpack.c.l.b16 %v470
        %v591 = vunpack.c.l.b16 %v471
        %v592 = vunpack.c.l.b16 %v472
        %v593 = vunpack.c.l.b16 %v473
        %v594 = vunpack.c.l.b16 %v474
        %v595 = vunpack.c.l.b16 %v475
        %v596 = vunpack.c.l.b16 %v476
        %v597 = vunpack.c.l.b16 %v477
        %v598 = vunpack.c.l.b16 %v478
        %v599 = vunpack.c.l.b16 %v479
        %v600 = vunpack.c.l.b16 %v480
        %v601 = vunpack.c.l.b16 %v481
        %v602 = vunpack.c.l.b16 %v482
        %v603 = vunpack.c.l.b16 %v483
        %v604 = vunpack.c.l.b16 %v484
        %v605 = vunpack.c.l.b16 %v485
        %v606 = vunpack.c.l.b16 %v486
        %v607 = vunpack.c.l.b16 %v487
        %v608 = vunpack.c.l.b16 %v488
        %v609 = vunpack.c.l.b16 %v489
        %v610 = vunpack.c.l.b16 %v490
        %v611 = vunpack.c.l.b16 %v491
        %v612 = vunpack.c.l.b16 %v492
        %v613 = vunpack.c.l.b16 %v493
        %v614 = vunpack.c.l.b16 %v494
        %v615 = vunpack.c.l.b16 %v495
        %v616 = vunpack.c.l.b16 %v496
        %v617 = vunpack.c.l.b16 %v497
        %v618 = vunpack.c.l.b16 %v498
        %v619 = vpack.c.b16 %v587, %v586
        %v620 = vpack.c.b16 %v589, %v588
        %v621 = vpack.c.b16 %v591, %v590
        %v622 = vpack.c.b16 %v593, %v592
        %v623 = vpack.c.b16 %v595, %v594
        %v624 = vpack.c.b16 %v597, %v596
        %v625 = vpack.c.b16 %v599, %v598
        %v626 = vpack.c.b16 %v601, %v600
        %v627 = vpack.c.b16 %v603, %v602
        %v628 = vpack.c.b16 %v605, %v604
        %v629 = vpack.c.b16 %v607, %v606
        %v630 = vpack.c.b16 %v609, %v608
        %v631 = vpack.c.b16 %v611, %v610
        %v632 = vpack.c.b16 %v613, %v612
        %v633 = vpack.c.b16 %v615, %v614
        %v634 = vpack.c.b16 %v617, %v616
        %v635 = vpack.c.b16 %v618, %v618
        %v669 = vunpack.c.l.b16 %v530
        %v670 = vunpack.c.l.b16 %v531
        %v671 = vunpack.c.l.b16 %v532
        %v672 = vunpack.c.l.b16 %v533
        %v673 = vunpack.c.l.b16 %v534
        %v674 = vunpack.c.l.b16 %v535
        %v675 = vunpack.c.l.b16 %v536
        %v676 = vunpack.c.l.b16 %v537
        %v677 = vunpack.c.l.b16 %v538
        %v678 = vunpack.c.l.b16 %v539
        %v679 = vunpack.c.l.b16 %v540
        %v680 = vunpack.c.l.b16 %v541
        %v681 = vunpack.c.l.b16 %v542
        %v682 = vunpack.c.l.b16 %v543
        %v683 = vunpack.c.l.b16 %v544
        %v684 = vunpack.c.l.b16 %v545
        %v685 = vpack.c.b16 %v670, %v669
        %v686 = vpack.c.b16 %v672, %v671
        %v687 = vpack.c.b16 %v674, %v673
        %v688 = vpack.c.b16 %v676, %v675
        %v689 = vpack.c.b16 %v678, %v677
        %v690 = vpack.c.b16 %v680, %v679
        %v691 = vpack.c.b16 %v682, %v681
        %v692 = vpack.c.b16 %v684, %v683
        %701 = vmatprep.subr.bf16.mxu0 0
        %702 = vmatpush1.bf16.msra.mxu0 %v692
        %703 = vmatprep.subr.bf16.mxu0 0
        %704 = vmatpush1.bf16.msra.mxu0 %v691
        %705 = vmatprep.subr.bf16.mxu0 0
        %706 = vmatpush1.bf16.msra.mxu0 %v690
        %707 = vmatprep.subr.bf16.mxu0 0
        %708 = vmatpush1.bf16.msra.mxu0 %v689
        %709 = vmatprep.subr.bf16.mxu0 0
        %710 = vmatpush1.bf16.msra.mxu0 %v688
        %711 = vmatprep.subr.bf16.mxu0 0
        %712 = vmatpush1.bf16.msra.mxu0 %v687
        %713 = vmatprep.subr.bf16.mxu0 0
        %714 = vmatpush1.bf16.msra.mxu0 %v686
        %715 = vmatprep.subr.bf16.mxu0 0
        %716 = vmatpush1.bf16.msra.mxu0 %v685
        %717 = vmatprep.subr.bf16.mxu0 0
        %718 = vmatpush2.bf16.msra.mxu0 0
        %719 = vmatprep.subr.bf16.mxu0 0
        %720 = vmatpush2.bf16.msra.mxu0 0
        %721 = vmatprep.subr.bf16.mxu0 0
        %722 = vmatpush2.bf16.msra.mxu0 0
        %723 = vmatprep.subr.bf16.mxu0 0
        %724 = vmatpush2.bf16.msra.mxu0 0
        %725 = vmatprep.subr.bf16.mxu0 0
        %726 = vmatpush2.bf16.msra.mxu0 0
        %727 = vmatprep.subr.bf16.mxu0 0
        %728 = vmatpush2.bf16.msra.mxu0 0
        %729 = vmatprep.subr.bf16.mxu0 0
        %730 = vmatpush2.bf16.msra.mxu0 0
        %731 = vmatprep.subr.bf16.mxu0 0
        %732 = vmatpush2.bf16.msra.mxu0 0
        %733 = vmatprep.mubr.bf16.mxu0 0
        %734 = vmatmul.mubr.bf16.gmra.mxu0 %v619
        %v735 = vpop.f32.mrf.mxu0
        %v736 = vadd.f32 %v551, %v735
        %v737 = vpop.f32.mrf.mxu0
        %v738 = vpop.f32.mrf.mxu0
        %v739 = vadd.f32 %v551, %v738
        %v740 = vpop.f32.mrf.mxu0
        %741 = vmatprep.mubr.bf16.mxu0 0
        %742 = vmatmul.mubr.bf16.gmra.mxu0 %v620
        %v743 = vpop.f32.mrf.mxu0
        %v744 = vadd.f32 %v551, %v743
        %v745 = vpop.f32.mrf.mxu0
        %v746 = vpop.f32.mrf.mxu0
        %v747 = vadd.f32 %v551, %v746
        %v748 = vpop.f32.mrf.mxu0
        %749 = vmatprep.mubr.bf16.mxu0 0
        %750 = vmatmul.mubr.bf16.gmra.mxu0 %v621
        %v751 = vpop.f32.mrf.mxu0
        %v752 = vadd.f32 %v551, %v751
        %v753 = vpop.f32.mrf.mxu0
        %v754 = vpop.f32.mrf.mxu0
        %v755 = vadd.f32 %v551, %v754
        %v756 = vpop.f32.mrf.mxu0
        %757 = vmatprep.mubr.bf16.mxu0 0
        %758 = vmatmul.mubr.bf16.gmra.mxu0 %v622
        %v759 = vpop.f32.mrf.mxu0
        %v760 = vadd.f32 %v551, %v759
        %v761 = vpop.f32.mrf.mxu0
        %v762 = vpop.f32.mrf.mxu0
        %v763 = vadd.f32 %v551, %v762
        %v764 = vpop.f32.mrf.mxu0
        %765 = vmatprep.mubr.bf16.mxu0 0
        %766 = vmatmul.mubr.bf16.gmra.mxu0 %v623
        %v767 = vpop.f32.mrf.mxu0
        %v768 = vadd.f32 %v551, %v767
        %v769 = vpop.f32.mrf.mxu0
        %v770 = vpop.f32.mrf.mxu0
        %v771 = vadd.f32 %v551, %v770
        %v772 = vpop.f32.mrf.mxu0
        %773 = vmatprep.mubr.bf16.mxu0 0
        %774 = vmatmul.mubr.bf16.gmra.mxu0 %v624
        %v775 = vpop.f32.mrf.mxu0
        %v776 = vadd.f32 %v551, %v775
        %v777 = vpop.f32.mrf.mxu0
        %v778 = vpop.f32.mrf.mxu0
        %v779 = vadd.f32 %v551, %v778
        %v780 = vpop.f32.mrf.mxu0
        %781 = vmatprep.mubr.bf16.mxu0 0
        %782 = vmatmul.mubr.bf16.gmra.mxu0 %v625
        %v783 = vpop.f32.mrf.mxu0
        %v784 = vadd.f32 %v551, %v783
        %v785 = vpop.f32.mrf.mxu0
        %v786 = vpop.f32.mrf.mxu0
        %v787 = vadd.f32 %v551, %v786
        %v788 = vpop.f32.mrf.mxu0
        %789 = vmatprep.mubr.bf16.mxu0 0
        %790 = vmatmul.mubr.bf16.gmra.mxu0 %v626
        %v791 = vpop.f32.mrf.mxu0
        %v792 = vadd.f32 %v551, %v791
        %v793 = vpop.f32.mrf.mxu0
        %v794 = vpop.f32.mrf.mxu0
        %v795 = vadd.f32 %v551, %v794
        %v796 = vpop.f32.mrf.mxu0
        %797 = vmatprep.mubr.bf16.mxu0 0
        %798 = vmatmul.mubr.bf16.gmra.mxu0 %v627
        %v799 = vpop.f32.mrf.mxu0
        %v800 = vadd.f32 %v551, %v799
        %v801 = vpop.f32.mrf.mxu0
        %v802 = vpop.f32.mrf.mxu0
        %v803 = vadd.f32 %v551, %v802
        %v804 = vpop.f32.mrf.mxu0
        %805 = vmatprep.mubr.bf16.mxu0 0
        %806 = vmatmul.mubr.bf16.gmra.mxu0 %v628
        %v807 = vpop.f32.mrf.mxu0
        %v808 = vadd.f32 %v551, %v807
        %v809 = vpop.f32.mrf.mxu0
        %v810 = vpop.f32.mrf.mxu0
        %v811 = vadd.f32 %v551, %v810
        %v812 = vpop.f32.mrf.mxu0
        %813 = vmatprep.mubr.bf16.mxu0 0
        %814 = vmatmul.mubr.bf16.gmra.mxu0 %v629
        %v815 = vpop.f32.mrf.mxu0
        %v816 = vadd.f32 %v551, %v815
        %v817 = vpop.f32.mrf.mxu0
        %v818 = vpop.f32.mrf.mxu0
        %v819 = vadd.f32 %v551, %v818
        %v820 = vpop.f32.mrf.mxu0
        %821 = vmatprep.mubr.bf16.mxu0 0
        %822 = vmatmul.mubr.bf16.gmra.mxu0 %v630
        %v823 = vpop.f32.mrf.mxu0
        %v824 = vadd.f32 %v551, %v823
        %v825 = vpop.f32.mrf.mxu0
        %v826 = vpop.f32.mrf.mxu0
        %v827 = vadd.f32 %v551, %v826
        %v828 = vpop.f32.mrf.mxu0
        %829 = vmatprep.mubr.bf16.mxu0 0
        %830 = vmatmul.mubr.bf16.gmra.mxu0 %v631
        %v831 = vpop.f32.mrf.mxu0
        %v832 = vadd.f32 %v551, %v831
        %v833 = vpop.f32.mrf.mxu0
        %v834 = vpop.f32.mrf.mxu0
        %v835 = vadd.f32 %v551, %v834
        %v836 = vpop.f32.mrf.mxu0
        %837 = vmatprep.mubr.bf16.mxu0 0
        %838 = vmatmul.mubr.bf16.gmra.mxu0 %v632
        %v839 = vpop.f32.mrf.mxu0
        %v840 = vadd.f32 %v551, %v839
        %v841 = vpop.f32.mrf.mxu0
        %v842 = vpop.f32.mrf.mxu0
        %v843 = vadd.f32 %v551, %v842
        %v844 = vpop.f32.mrf.mxu0
        %845 = vmatprep.mubr.bf16.mxu0 0
        %846 = vmatmul.mubr.bf16.gmra.mxu0 %v633
        %v847 = vpop.f32.mrf.mxu0
        %v848 = vadd.f32 %v551, %v847
        %v849 = vpop.f32.mrf.mxu0
        %v850 = vpop.f32.mrf.mxu0
        %v851 = vadd.f32 %v551, %v850
        %v852 = vpop.f32.mrf.mxu0
        %853 = vmatprep.mubr.bf16.mxu0 0
        %854 = vmatmul.mubr.bf16.gmra.mxu0 %v634
        %v855 = vpop.f32.mrf.mxu0
        %v856 = vadd.f32 %v551, %v855
        %v857 = vpop.f32.mrf.mxu0
        %v858 = vpop.f32.mrf.mxu0
        %v859 = vpop.f32.mrf.mxu0
        %860 = vmatprep.mubr.bf16.mxu0 0
        %861 = vmatmul.mubr.bf16.gmra.mxu0 %v635
        %v862 = vpop.f32.mrf.mxu0
        %v863 = vpop.f32.mrf.mxu0
        %v864 = vpop.f32.mrf.mxu0
        %v865 = vpop.f32.mrf.mxu0
        %866 = vdwg.mxu0
        %v867 = vmax.f32 %v736, 0.0
        %v868 = vmax.f32 %v739, 0.0
        %v869 = vmax.f32 %v744, 0.0
        %v870 = vmax.f32 %v747, 0.0
        %v871 = vmax.f32 %v752, 0.0
        %v872 = vmax.f32 %v755, 0.0
        %v873 = vmax.f32 %v760, 0.0
        %v874 = vmax.f32 %v763, 0.0
        %v875 = vmax.f32 %v768, 0.0
        %v876 = vmax.f32 %v771, 0.0
        %v877 = vmax.f32 %v776, 0.0
        %v878 = vmax.f32 %v779, 0.0
        %v879 = vmax.f32 %v784, 0.0
        %v880 = vmax.f32 %v787, 0.0
        %v881 = vmax.f32 %v792, 0.0
        %v882 = vmax.f32 %v795, 0.0
        %v883 = vmax.f32 %v800, 0.0
        %v884 = vmax.f32 %v803, 0.0
        %v885 = vmax.f32 %v808, 0.0
        %v886 = vmax.f32 %v811, 0.0
        %v887 = vmax.f32 %v816, 0.0
        %v888 = vmax.f32 %v819, 0.0
        %v889 = vmax.f32 %v824, 0.0
        %v890 = vmax.f32 %v827, 0.0
        %v891 = vmax.f32 %v832, 0.0
        %v892 = vmax.f32 %v835, 0.0
        %v893 = vmax.f32 %v840, 0.0
        %v894 = vmax.f32 %v843, 0.0
        %v895 = vmax.f32 %v848, 0.0
        %v896 = vmax.f32 %v851, 0.0
        %v897 = vmax.f32 %v856, 0.0
        %899 = vset.pattern.permute.xlu0 0
        %900 = vperm.xlu0 %899, %v499
        %v901 = vpop.permute.xlu0 %900
        %904 = vset.pattern.permute.xlu0 0
        %905 = vperm.xlu0 %904, %v500
        %v906 = vpop.permute.xlu0 %905
        %909 = vset.pattern.permute.xlu0 0
        %910 = vperm.xlu0 %909, %v501
        %v911 = vpop.permute.xlu0 %910
        %914 = vset.pattern.permute.xlu0 0
        %915 = vperm.xlu0 %914, %v502
        %v916 = vpop.permute.xlu0 %915
        %919 = vset.pattern.permute.xlu0 0
        %920 = vperm.xlu0 %919, %v503
        %v921 = vpop.permute.xlu0 %920
        %924 = vset.pattern.permute.xlu0 0
        %925 = vperm.xlu0 %924, %v504
        %v926 = vpop.permute.xlu0 %925
        %929 = vset.pattern.permute.xlu0 0
        %930 = vperm.xlu0 %929, %v505
        %v931 = vpop.permute.xlu0 %930
        %934 = vset.pattern.permute.xlu0 0
        %935 = vperm.xlu0 %934, %v506
        %v936 = vpop.permute.xlu0 %935
        %939 = vset.pattern.permute.xlu0 0
        %940 = vperm.xlu0 %939, %v507
        %v941 = vpop.permute.xlu0 %940
        %944 = vset.pattern.permute.xlu0 0
        %945 = vperm.xlu0 %944, %v508
        %v946 = vpop.permute.xlu0 %945
        %949 = vset.pattern.permute.xlu0 0
        %950 = vperm.xlu0 %949, %v509
        %v951 = vpop.permute.xlu0 %950
        %954 = vset.pattern.permute.xlu0 0
        %955 = vperm.xlu0 %954, %v510
        %v956 = vpop.permute.xlu0 %955
        %959 = vset.pattern.permute.xlu0 0
        %960 = vperm.xlu0 %959, %v511
        %v961 = vpop.permute.xlu0 %960
        %964 = vset.pattern.permute.xlu0 0
        %965 = vperm.xlu0 %964, %v512
        %v966 = vpop.permute.xlu0 %965
        %969 = vset.pattern.permute.xlu0 0
        %970 = vperm.xlu0 %969, %v513
        %v971 = vpop.permute.xlu0 %970
        %974 = vset.pattern.permute.xlu0 0
        %975 = vperm.xlu0 %974, %v514
        %v976 = vpop.permute.xlu0 %975
        %979 = vset.pattern.permute.xlu0 0
        %980 = vperm.xlu0 %979, %v515
        %v981 = vpop.permute.xlu0 %980
        %984 = vset.pattern.permute.xlu0 0
        %985 = vperm.xlu0 %984, %v516
        %v986 = vpop.permute.xlu0 %985
        %989 = vset.pattern.permute.xlu0 0
        %990 = vperm.xlu0 %989, %v517
        %v991 = vpop.permute.xlu0 %990
        %994 = vset.pattern.permute.xlu0 0
        %995 = vperm.xlu0 %994, %v518
        %v996 = vpop.permute.xlu0 %995
        %999 = vset.pattern.permute.xlu0 0
        %1000 = vperm.xlu0 %999, %v519
        %v1001 = vpop.permute.xlu0 %1000
        %1004 = vset.pattern.permute.xlu0 0
        %1005 = vperm.xlu0 %1004, %v520
        %v1006 = vpop.permute.xlu0 %1005
        %1009 = vset.pattern.permute.xlu0 0
        %1010 = vperm.xlu0 %1009, %v521
        %v1011 = vpop.permute.xlu0 %1010
        %1014 = vset.pattern.permute.xlu0 0
        %1015 = vperm.xlu0 %1014, %v522
        %v1016 = vpop.permute.xlu0 %1015
        %1019 = vset.pattern.permute.xlu0 0
        %1020 = vperm.xlu0 %1019, %v523
        %v1021 = vpop.permute.xlu0 %1020
        %1024 = vset.pattern.permute.xlu0 0
        %1025 = vperm.xlu0 %1024, %v524
        %v1026 = vpop.permute.xlu0 %1025
        %1029 = vset.pattern.permute.xlu0 0
        %1030 = vperm.xlu0 %1029, %v525
        %v1031 = vpop.permute.xlu0 %1030
        %1034 = vset.pattern.permute.xlu0 0
        %1035 = vperm.xlu0 %1034, %v526
        %v1036 = vpop.permute.xlu0 %1035
        %1039 = vset.pattern.permute.xlu0 0
        %1040 = vperm.xlu0 %1039, %v527
        %v1041 = vpop.permute.xlu0 %1040
        %1044 = vset.pattern.permute.xlu0 0
        %1045 = vperm.xlu0 %1044, %v528
        %v1046 = vpop.permute.xlu0 %1045
        %1049 = vset.pattern.permute.xlu0 0
        %1050 = vperm.xlu0 %1049, %v529
        %v1051 = vpop.permute.xlu0 %1050
        %v1053 = vmul.f32 %v867, %v901
        %v1054 = vmul.f32 %v868, %v906
        %v1055 = vmul.f32 %v869, %v911
        %v1056 = vmul.f32 %v870, %v916
        %v1057 = vmul.f32 %v871, %v921
        %v1058 = vmul.f32 %v872, %v926
        %v1059 = vmul.f32 %v873, %v931
        %v1060 = vmul.f32 %v874, %v936
        %v1061 = vmul.f32 %v875, %v941
        %v1062 = vmul.f32 %v876, %v946
        %v1063 = vmul.f32 %v877, %v951
        %v1064 = vmul.f32 %v878, %v956
        %v1065 = vmul.f32 %v879, %v961
        %v1066 = vmul.f32 %v880, %v966
        %v1067 = vmul.f32 %v881, %v971
        %v1068 = vmul.f32 %v882, %v976
        %v1069 = vmul.f32 %v883, %v981
        %v1070 = vmul.f32 %v884, %v986
        %v1071 = vmul.f32 %v885, %v991
        %v1072 = vmul.f32 %v886, %v996
        %v1073 = vmul.f32 %v887, %v1001
        %v1074 = vmul.f32 %v888, %v1006
        %v1075 = vmul.f32 %v889, %v1011
        %v1076 = vmul.f32 %v890, %v1016
        %v1077 = vmul.f32 %v891, %v1021
        %v1078 = vmul.f32 %v892, %v1026
        %v1079 = vmul.f32 %v893, %v1031
        %v1080 = vmul.f32 %v894, %v1036
        %v1081 = vmul.f32 %v895, %v1041
        %v1082 = vmul.f32 %v896, %v1046
        %v1083 = vmul.f32 %v897, %v1051
        %v1084 = vpack.c.bf16 %v1054, %v1053
        %v1085 = vpack.c.bf16 %v1056, %v1055
        %v1086 = vpack.c.bf16 %v1058, %v1057
        %v1087 = vpack.c.bf16 %v1060, %v1059
        %v1088 = vpack.c.bf16 %v1062, %v1061
        %v1089 = vpack.c.bf16 %v1064, %v1063
        %v1090 = vpack.c.bf16 %v1066, %v1065
        %v1091 = vpack.c.bf16 %v1068, %v1067
        %v1092 = vpack.c.bf16 %v1070, %v1069
        %v1093 = vpack.c.bf16 %v1072, %v1071
        %v1094 = vpack.c.bf16 %v1074, %v1073
        %v1095 = vpack.c.bf16 %v1076, %v1075
        %v1096 = vld [vmem:[#allocation5] sm:$0xf]
        %v1097 = vld [vmem:[#allocation5 + $0x4] sm:$0xf]
        %v1098 = vld [vmem:[#allocation5 + $0x8] sm:$0xf]
        %v1099 = vld [vmem:[#allocation5 + $0xc] sm:$0xf]
        %v1100 = vld [vmem:[#allocation5 + $0x10] sm:$0xf]
        %v1101 = vld [vmem:[#allocation5 + $0x14] sm:$0xf]
        %v1102 = vld [vmem:[#allocation5 + $0x18] sm:$0xf]
        %v1103 = vld [vmem:[#allocation5 + $0x1c] sm:$0xf]
        %v1104 = vld [vmem:[#allocation5 + $0x20] sm:$0xf]
        %v1105 = vld [vmem:[#allocation5 + $0x24] sm:$0xf]
        %v1106 = vld [vmem:[#allocation5 + $0x28] sm:$0xf]
        %v1107 = vld [vmem:[#allocation5 + $0x2c] sm:$0xf]
        %v1108 = vld [vmem:[#allocation5 + $0x30] sm:$0xf]
        %v1109 = vld [vmem:[#allocation5 + $0x34] sm:$0xf]
        %v1110 = vld [vmem:[#allocation5 + $0x38] sm:$0xf]
        %v1111 = vld [vmem:[#allocation5 + $0x3c] sm:$0xf]
        %v1112 = vpack.c.bf16 %v1077, %v1077
        %s1113 = scalar_lea.vmem [#allocation5], 64
        %v1114 = vld [vmem:[%s1113] sm:$0xf]
        %v1115 = vld [vmem:[%s1113 + $0x4] sm:$0xf]
        %v1116 = vld [vmem:[%s1113 + $0x8] sm:$0xf]
        %v1117 = vld [vmem:[%s1113 + $0xc] sm:$0xf]
        %v1118 = vld [vmem:[%s1113 + $0x10] sm:$0xf]
        %v1119 = vld [vmem:[%s1113 + $0x14] sm:$0xf]
        %v1120 = vld [vmem:[%s1113 + $0x18] sm:$0xf]
        %v1121 = vld [vmem:[%s1113 + $0x1c] sm:$0xf]
        %v1122 = vld [vmem:[%s1113 + $0x20] sm:$0xf]
        %v1123 = vld [vmem:[%s1113 + $0x24] sm:$0xf]
        %v1124 = vld [vmem:[%s1113 + $0x28] sm:$0xf]
        %v1125 = vld [vmem:[%s1113 + $0x2c] sm:$0xf]
        %v1126 = vld [vmem:[%s1113 + $0x30] sm:$0xf]
        %v1127 = vld [vmem:[%s1113 + $0x34] sm:$0xf]
        %v1128 = vld [vmem:[%s1113 + $0x38] sm:$0xf]
        %v1129 = vld [vmem:[%s1113 + $0x3c] sm:$0xf]
        %vm1130 = vsmask.f32 7424
        %v1132 = vshrl.u32 %v1084, 16
        %v1134 = vshll.u32 %v1084, 16
        %v1136 = vrot.slane %v1134, 1
        %v1137 = vor.u32 %v1132, %v1136
        %v1139 = vshll.u32 %v1085, 16
        %v1141 = vrot.slane %v1139, 1
        %v1142 = vsel %vm1130, %v1137, %v1141
        %v1143 = vshrl.u32 %v1085, 16
        %v1145 = vor.u32 %v1143, %v1141
        %v1147 = vshll.u32 %v1086, 16
        %v1149 = vrot.slane %v1147, 1
        %v1150 = vsel %vm1130, %v1145, %v1149
        %v1151 = vshrl.u32 %v1086, 16
        %v1153 = vor.u32 %v1151, %v1149
        %v1155 = vshll.u32 %v1087, 16
        %v1157 = vrot.slane %v1155, 1
        %v1158 = vsel %vm1130, %v1153, %v1157
        %v1159 = vshrl.u32 %v1087, 16
        %v1161 = vor.u32 %v1159, %v1157
        %v1163 = vshll.u32 %v1088, 16
        %v1165 = vrot.slane %v1163, 1
        %v1166 = vsel %vm1130, %v1161, %v1165
        %v1167 = vshrl.u32 %v1088, 16
        %v1169 = vor.u32 %v1167, %v1165
        %v1171 = vshll.u32 %v1089, 16
        %v1173 = vrot.slane %v1171, 1
        %v1174 = vsel %vm1130, %v1169, %v1173
        %v1175 = vshrl.u32 %v1089, 16
        %v1177 = vor.u32 %v1175, %v1173
        %v1179 = vshll.u32 %v1090, 16
        %v1181 = vrot.slane %v1179, 1
        %v1182 = vsel %vm1130, %v1177, %v1181
        %v1183 = vshrl.u32 %v1090, 16
        %v1185 = vor.u32 %v1183, %v1181
        %v1187 = vshll.u32 %v1091, 16
        %v1189 = vrot.slane %v1187, 1
        %v1190 = vsel %vm1130, %v1185, %v1189
        %v1191 = vshrl.u32 %v1091, 16
        %v1193 = vor.u32 %v1191, %v1189
        %v1195 = vshll.u32 %v1092, 16
        %v1197 = vrot.slane %v1195, 1
        %v1198 = vsel %vm1130, %v1193, %v1197
        %v1199 = vshrl.u32 %v1092, 16
        %v1201 = vor.u32 %v1199, %v1197
        %v1203 = vshll.u32 %v1093, 16
        %v1205 = vrot.slane %v1203, 1
        %v1206 = vsel %vm1130, %v1201, %v1205
        %v1207 = vshrl.u32 %v1093, 16
        %v1209 = vor.u32 %v1207, %v1205
        %v1211 = vshll.u32 %v1094, 16
        %v1213 = vrot.slane %v1211, 1
        %v1214 = vsel %vm1130, %v1209, %v1213
        %v1215 = vshrl.u32 %v1094, 16
        %v1217 = vor.u32 %v1215, %v1213
        %v1219 = vshll.u32 %v1095, 16
        %v1221 = vrot.slane %v1219, 1
        %v1222 = vsel %vm1130, %v1217, %v1221
        %v1223 = vshrl.u32 %v1095, 16
        %v1225 = vor.u32 %v1223, %v1221
        %v1227 = vshll.u32 %v1112, 16
        %v1229 = vrot.slane %v1227, 1
        %v1230 = vsel %vm1130, %v1225, %v1229
        %v1259 = vunpack.c.l.b16 %v1114
        %v1260 = vunpack.c.l.b16 %v1115
        %v1261 = vunpack.c.l.b16 %v1116
        %v1262 = vunpack.c.l.b16 %v1117
        %v1263 = vunpack.c.l.b16 %v1118
        %v1264 = vunpack.c.l.b16 %v1119
        %v1265 = vunpack.c.l.b16 %v1120
        %v1266 = vunpack.c.l.b16 %v1121
        %v1267 = vunpack.c.l.b16 %v1122
        %v1268 = vunpack.c.l.b16 %v1123
        %v1269 = vunpack.c.l.b16 %v1124
        %v1270 = vunpack.c.l.b16 %v1125
        %v1271 = vunpack.c.l.b16 %v1126
        %v1272 = vunpack.c.l.b16 %v1127
        %v1273 = vunpack.c.l.b16 %v1128
        %v1274 = vunpack.c.l.b16 %v1129
        %v1275 = vpack.c.b16 %v1260, %v1259
        %v1276 = vpack.c.b16 %v1262, %v1261
        %v1277 = vpack.c.b16 %v1264, %v1263
        %v1278 = vpack.c.b16 %v1266, %v1265
        %v1279 = vpack.c.b16 %v1268, %v1267
        %v1280 = vpack.c.b16 %v1270, %v1269
        %v1281 = vpack.c.b16 %v1272, %v1271
        %v1282 = vpack.c.b16 %v1274, %v1273
        %1291 = vmatprep.subr.bf16.mxu0 0
        %1292 = vmatpush1.bf16.msra.mxu0 %v1282
        %1293 = vmatprep.subr.bf16.mxu0 0
        %1294 = vmatpush1.bf16.msra.mxu0 %v1281
        %1295 = vmatprep.subr.bf16.mxu0 0
        %1296 = vmatpush1.bf16.msra.mxu0 %v1280
        %1297 = vmatprep.subr.bf16.mxu0 0
        %1298 = vmatpush1.bf16.msra.mxu0 %v1279
        %1299 = vmatprep.subr.bf16.mxu0 0
        %1300 = vmatpush1.bf16.msra.mxu0 %v1278
        %1301 = vmatprep.subr.bf16.mxu0 0
        %1302 = vmatpush1.bf16.msra.mxu0 %v1277
        %1303 = vmatprep.subr.bf16.mxu0 0
        %1304 = vmatpush1.bf16.msra.mxu0 %v1276
        %1305 = vmatprep.subr.bf16.mxu0 0
        %1306 = vmatpush1.bf16.msra.mxu0 %v1275
        %1307 = vmatprep.subr.bf16.mxu0 0
        %1308 = vmatpush2.bf16.msra.mxu0 0
        %1309 = vmatprep.subr.bf16.mxu0 0
        %1310 = vmatpush2.bf16.msra.mxu0 0
        %1311 = vmatprep.subr.bf16.mxu0 0
        %1312 = vmatpush2.bf16.msra.mxu0 0
        %1313 = vmatprep.subr.bf16.mxu0 0
        %1314 = vmatpush2.bf16.msra.mxu0 0
        %1315 = vmatprep.subr.bf16.mxu0 0
        %1316 = vmatpush2.bf16.msra.mxu0 0
        %1317 = vmatprep.subr.bf16.mxu0 0
        %1318 = vmatpush2.bf16.msra.mxu0 0
        %1319 = vmatprep.subr.bf16.mxu0 0
        %1320 = vmatpush2.bf16.msra.mxu0 0
        %1321 = vmatprep.subr.bf16.mxu0 0
        %1322 = vmatpush2.bf16.msra.mxu0 0
        %1323 = vmatprep.mubr.bf16.mxu0 0
        %1324 = vmatmul.mubr.bf16.gmra.mxu0 %v1142
        %v1325 = vpop.f32.mrf.mxu0
        %v1326 = vadd.f32 0.0, %v1325
        %v1327 = vpop.f32.mrf.mxu0
        %v1328 = vpop.f32.mrf.mxu0
        %v1329 = vadd.f32 0.0, %v1328
        %v1330 = vpop.f32.mrf.mxu0
        %1331 = vmatprep.mubr.bf16.mxu0 0
        %1332 = vmatmul.mubr.bf16.gmra.mxu0 %v1150
        %v1333 = vpop.f32.mrf.mxu0
        %v1334 = vadd.f32 0.0, %v1333
        %v1335 = vpop.f32.mrf.mxu0
        %v1336 = vpop.f32.mrf.mxu0
        %v1337 = vadd.f32 0.0, %v1336
        %v1338 = vpop.f32.mrf.mxu0
        %1339 = vmatprep.mubr.bf16.mxu0 0
        %1340 = vmatmul.mubr.bf16.gmra.mxu0 %v1158
        %v1341 = vpop.f32.mrf.mxu0
        %v1342 = vadd.f32 0.0, %v1341
        %v1343 = vpop.f32.mrf.mxu0
        %v1344 = vpop.f32.mrf.mxu0
        %v1345 = vadd.f32 0.0, %v1344
        %v1346 = vpop.f32.mrf.mxu0
        %1347 = vmatprep.mubr.bf16.mxu0 0
        %1348 = vmatmul.mubr.bf16.gmra.mxu0 %v1166
        %v1349 = vpop.f32.mrf.mxu0
        %v1350 = vadd.f32 0.0, %v1349
        %v1351 = vpop.f32.mrf.mxu0
        %v1352 = vpop.f32.mrf.mxu0
        %v1353 = vadd.f32 0.0, %v1352
        %v1354 = vpop.f32.mrf.mxu0
        %1355 = vmatprep.mubr.bf16.mxu0 0
        %1356 = vmatmul.mubr.bf16.gmra.mxu0 %v1174
        %v1357 = vpop.f32.mrf.mxu0
        %v1358 = vadd.f32 0.0, %v1357
        %v1359 = vpop.f32.mrf.mxu0
        %v1360 = vpop.f32.mrf.mxu0
        %v1361 = vadd.f32 0.0, %v1360
        %v1362 = vpop.f32.mrf.mxu0
        %1363 = vmatprep.mubr.bf16.mxu0 0
        %1364 = vmatmul.mubr.bf16.gmra.mxu0 %v1182
        %v1365 = vpop.f32.mrf.mxu0
        %v1366 = vadd.f32 0.0, %v1365
        %v1367 = vpop.f32.mrf.mxu0
        %v1368 = vpop.f32.mrf.mxu0
        %v1369 = vadd.f32 0.0, %v1368
        %v1370 = vpop.f32.mrf.mxu0
        %1371 = vmatprep.mubr.bf16.mxu0 0
        %1372 = vmatmul.mubr.bf16.gmra.mxu0 %v1190
        %v1373 = vpop.f32.mrf.mxu0
        %v1374 = vadd.f32 0.0, %v1373
        %v1375 = vpop.f32.mrf.mxu0
        %v1376 = vpop.f32.mrf.mxu0
        %v1377 = vadd.f32 0.0, %v1376
        %v1378 = vpop.f32.mrf.mxu0
        %1379 = vmatprep.mubr.bf16.mxu0 0
        %1380 = vmatmul.mubr.bf16.gmra.mxu0 %v1198
        %v1381 = vpop.f32.mrf.mxu0
        %v1382 = vadd.f32 0.0, %v1381
        %v1383 = vpop.f32.mrf.mxu0
        %v1384 = vpop.f32.mrf.mxu0
        %v1385 = vadd.f32 0.0, %v1384
        %v1386 = vpop.f32.mrf.mxu0
        %1387 = vmatprep.mubr.bf16.mxu0 0
        %1388 = vmatmul.mubr.bf16.gmra.mxu0 %v1206
        %v1389 = vpop.f32.mrf.mxu0
        %v1390 = vadd.f32 0.0, %v1389
        %v1391 = vpop.f32.mrf.mxu0
        %v1392 = vpop.f32.mrf.mxu0
        %v1393 = vadd.f32 0.0, %v1392
        %v1394 = vpop.f32.mrf.mxu0
        %1395 = vmatprep.mubr.bf16.mxu0 0
        %1396 = vmatmul.mubr.bf16.gmra.mxu0 %v1214
        %v1397 = vpop.f32.mrf.mxu0
        %v1398 = vadd.f32 0.0, %v1397
        %v1399 = vpop.f32.mrf.mxu0
        %v1400 = vpop.f32.mrf.mxu0
        %v1401 = vadd.f32 0.0, %v1400
        %v1402 = vpop.f32.mrf.mxu0
        %1403 = vmatprep.mubr.bf16.mxu0 0
        %1404 = vmatmul.mubr.bf16.gmra.mxu0 %v1222
        %v1405 = vpop.f32.mrf.mxu0
        %v1406 = vadd.f32 0.0, %v1405
        %v1407 = vpop.f32.mrf.mxu0
        %v1408 = vpop.f32.mrf.mxu0
        %v1409 = vadd.f32 0.0, %v1408
        %v1410 = vpop.f32.mrf.mxu0
        %1411 = vmatprep.mubr.bf16.mxu0 0
        %1412 = vmatmul.mubr.bf16.gmra.mxu0 %v1230
        %v1413 = vpop.f32.mrf.mxu0
        %v1414 = vadd.f32 0.0, %v1413
        %v1415 = vpop.f32.mrf.mxu0
        %v1416 = vpop.f32.mrf.mxu0
        %v1417 = vadd.f32 0.0, %v1416
        %v1418 = vpop.f32.mrf.mxu0
        %1419 = vdwg.mxu0
        %v1436 = vunpack.c.l.b16 %v1096
        %v1437 = vunpack.c.l.b16 %v1097
        %v1438 = vunpack.c.l.b16 %v1098
        %v1439 = vunpack.c.l.b16 %v1099
        %v1440 = vunpack.c.l.b16 %v1100
        %v1441 = vunpack.c.l.b16 %v1101
        %v1442 = vunpack.c.l.b16 %v1102
        %v1443 = vunpack.c.l.b16 %v1103
        %v1444 = vunpack.c.l.b16 %v1104
        %v1445 = vunpack.c.l.b16 %v1105
        %v1446 = vunpack.c.l.b16 %v1106
        %v1447 = vunpack.c.l.b16 %v1107
        %v1448 = vunpack.c.l.b16 %v1108
        %v1449 = vunpack.c.l.b16 %v1109
        %v1450 = vunpack.c.l.b16 %v1110
        %v1451 = vunpack.c.l.b16 %v1111
        %v1452 = vpack.c.b16 %v1437, %v1436
        %v1453 = vpack.c.b16 %v1439, %v1438
        %v1454 = vpack.c.b16 %v1441, %v1440
        %v1455 = vpack.c.b16 %v1443, %v1442
        %v1456 = vpack.c.b16 %v1445, %v1444
        %v1457 = vpack.c.b16 %v1447, %v1446
        %v1458 = vpack.c.b16 %v1449, %v1448
        %v1459 = vpack.c.b16 %v1451, %v1450
        %1468 = vmatprep.subr.bf16.mxu0 0
        %1469 = vmatpush1.bf16.msra.mxu0 %v1459
        %1470 = vmatprep.subr.bf16.mxu0 0
        %1471 = vmatpush1.bf16.msra.mxu0 %v1458
        %1472 = vmatprep.subr.bf16.mxu0 0
        %1473 = vmatpush1.bf16.msra.mxu0 %v1457
        %1474 = vmatprep.subr.bf16.mxu0 0
        %1475 = vmatpush1.bf16.msra.mxu0 %v1456
        %1476 = vmatprep.subr.bf16.mxu0 0
        %1477 = vmatpush1.bf16.msra.mxu0 %v1455
        %1478 = vmatprep.subr.bf16.mxu0 0
        %1479 = vmatpush1.bf16.msra.mxu0 %v1454
        %1480 = vmatprep.subr.bf16.mxu0 0
        %1481 = vmatpush1.bf16.msra.mxu0 %v1453
        %1482 = vmatprep.subr.bf16.mxu0 0
        %1483 = vmatpush1.bf16.msra.mxu0 %v1452
        %1484 = vmatprep.subr.bf16.mxu0 0
        %1485 = vmatpush2.bf16.msra.mxu0 0
        %1486 = vmatprep.subr.bf16.mxu0 0
        %1487 = vmatpush2.bf16.msra.mxu0 0
        %1488 = vmatprep.subr.bf16.mxu0 0
        %1489 = vmatpush2.bf16.msra.mxu0 0
        %1490 = vmatprep.subr.bf16.mxu0 0
        %1491 = vmatpush2.bf16.msra.mxu0 0
        %1492 = vmatprep.subr.bf16.mxu0 0
        %1493 = vmatpush2.bf16.msra.mxu0 0
        %1494 = vmatprep.subr.bf16.mxu0 0
        %1495 = vmatpush2.bf16.msra.mxu0 0
        %1496 = vmatprep.subr.bf16.mxu0 0
        %1497 = vmatpush2.bf16.msra.mxu0 0
        %1498 = vmatprep.subr.bf16.mxu0 0
        %1499 = vmatpush2.bf16.msra.mxu0 0
        %1500 = vmatprep.mubr.bf16.mxu0 0
        %1501 = vmatmul.mubr.bf16.gmra.mxu0 %v1084
        %v1502 = vpop.f32.mrf.mxu0
        %v1503 = vadd.f32 %v1326, %v1502
        %v1504 = vpop.f32.mrf.mxu0
        %v1505 = vpop.f32.mrf.mxu0
        %v1506 = vadd.f32 %v1329, %v1505
        %v1507 = vpop.f32.mrf.mxu0
        %1508 = vmatprep.mubr.bf16.mxu0 0
        %1509 = vmatmul.mubr.bf16.gmra.mxu0 %v1085
        %v1510 = vpop.f32.mrf.mxu0
        %v1511 = vadd.f32 %v1334, %v1510
        %v1512 = vpop.f32.mrf.mxu0
        %v1513 = vpop.f32.mrf.mxu0
        %v1514 = vadd.f32 %v1337, %v1513
        %v1515 = vpop.f32.mrf.mxu0
        %1516 = vmatprep.mubr.bf16.mxu0 0
        %1517 = vmatmul.mubr.bf16.gmra.mxu0 %v1086
        %v1518 = vpop.f32.mrf.mxu0
        %v1519 = vadd.f32 %v1342, %v1518
        %v1520 = vpop.f32.mrf.mxu0
        %v1521 = vpop.f32.mrf.mxu0
        %v1522 = vadd.f32 %v1345, %v1521
        %v1523 = vpop.f32.mrf.mxu0
        %1524 = vmatprep.mubr.bf16.mxu0 0
        %1525 = vmatmul.mubr.bf16.gmra.mxu0 %v1087
        %v1526 = vpop.f32.mrf.mxu0
        %v1527 = vadd.f32 %v1350, %v1526
        %v1528 = vpop.f32.mrf.mxu0
        %v1529 = vpop.f32.mrf.mxu0
        %v1530 = vadd.f32 %v1353, %v1529
        %v1531 = vpop.f32.mrf.mxu0
        %1532 = vmatprep.mubr.bf16.mxu0 0
        %1533 = vmatmul.mubr.bf16.gmra.mxu0 %v1088
        %v1534 = vpop.f32.mrf.mxu0
        %v1535 = vadd.f32 %v1358, %v1534
        %v1536 = vpop.f32.mrf.mxu0
        %v1537 = vpop.f32.mrf.mxu0
        %v1538 = vadd.f32 %v1361, %v1537
        %v1539 = vpop.f32.mrf.mxu0
        %1540 = vmatprep.mubr.bf16.mxu0 0
        %1541 = vmatmul.mubr.bf16.gmra.mxu0 %v1089
        %v1542 = vpop.f32.mrf.mxu0
        %v1543 = vadd.f32 %v1366, %v1542
        %v1544 = vpop.f32.mrf.mxu0
        %v1545 = vpop.f32.mrf.mxu0
        %v1546 = vadd.f32 %v1369, %v1545
        %v1547 = vpop.f32.mrf.mxu0
        %1548 = vmatprep.mubr.bf16.mxu0 0
        %1549 = vmatmul.mubr.bf16.gmra.mxu0 %v1090
        %v1550 = vpop.f32.mrf.mxu0
        %v1551 = vadd.f32 %v1374, %v1550
        %v1552 = vpop.f32.mrf.mxu0
        %v1553 = vpop.f32.mrf.mxu0
        %v1554 = vadd.f32 %v1377, %v1553
        %v1555 = vpop.f32.mrf.mxu0
        %1556 = vmatprep.mubr.bf16.mxu0 0
        %1557 = vmatmul.mubr.bf16.gmra.mxu0 %v1091
        %v1558 = vpop.f32.mrf.mxu0
        %v1559 = vadd.f32 %v1382, %v1558
        %v1560 = vpop.f32.mrf.mxu0
        %v1561 = vpop.f32.mrf.mxu0
        %v1562 = vadd.f32 %v1385, %v1561
        %v1563 = vpop.f32.mrf.mxu0
        %1564 = vmatprep.mubr.bf16.mxu0 0
        %1565 = vmatmul.mubr.bf16.gmra.mxu0 %v1092
        %v1566 = vpop.f32.mrf.mxu0
        %v1567 = vadd.f32 %v1390, %v1566
        %v1568 = vpop.f32.mrf.mxu0
        %v1569 = vpop.f32.mrf.mxu0
        %v1570 = vadd.f32 %v1393, %v1569
        %v1571 = vpop.f32.mrf.mxu0
        %1572 = vmatprep.mubr.bf16.mxu0 0
        %1573 = vmatmul.mubr.bf16.gmra.mxu0 %v1093
        %v1574 = vpop.f32.mrf.mxu0
        %v1575 = vadd.f32 %v1398, %v1574
        %v1576 = vpop.f32.mrf.mxu0
        %v1577 = vpop.f32.mrf.mxu0
        %v1578 = vadd.f32 %v1401, %v1577
        %v1579 = vpop.f32.mrf.mxu0
        %1580 = vmatprep.mubr.bf16.mxu0 0
        %1581 = vmatmul.mubr.bf16.gmra.mxu0 %v1094
        %v1582 = vpop.f32.mrf.mxu0
        %v1583 = vadd.f32 %v1406, %v1582
        %v1584 = vpop.f32.mrf.mxu0
        %v1585 = vpop.f32.mrf.mxu0
        %v1586 = vadd.f32 %v1409, %v1585
        %v1587 = vpop.f32.mrf.mxu0
        %1588 = vmatprep.mubr.bf16.mxu0 0
        %1589 = vmatmul.mubr.bf16.gmra.mxu0 %v1095
        %v1590 = vpop.f32.mrf.mxu0
        %v1591 = vadd.f32 %v1414, %v1590
        %v1592 = vpop.f32.mrf.mxu0
        %v1593 = vpop.f32.mrf.mxu0
        %v1594 = vadd.f32 %v1417, %v1593
        %v1595 = vpop.f32.mrf.mxu0
        %1596 = vdwg.mxu0
        %s1597 = scalar_lea.vmem [#allocation5], 128
        %v1598 = vld [vmem:[%s1597] sm:$0xf]
        %v1599 = vld [vmem:[%s1597 + $0x4] sm:$0xf]
        %v1600 = vld [vmem:[%s1597 + $0x8] sm:$0xf]
        %v1601 = vld [vmem:[%s1597 + $0xc] sm:$0xf]
        %v1602 = vld [vmem:[%s1597 + $0x10] sm:$0xf]
        %v1603 = vld [vmem:[%s1597 + $0x14] sm:$0xf]
        %v1604 = vld [vmem:[%s1597 + $0x18] sm:$0xf]
        %v1605 = vld [vmem:[%s1597 + $0x1c] sm:$0xf]
        %v1606 = vld [vmem:[%s1597 + $0x20] sm:$0xf]
        %v1607 = vld [vmem:[%s1597 + $0x24] sm:$0xf]
        %v1608 = vld [vmem:[%s1597 + $0x28] sm:$0xf]
        %v1609 = vld [vmem:[%s1597 + $0x2c] sm:$0xf]
        %v1610 = vld [vmem:[%s1597 + $0x30] sm:$0xf]
        %v1611 = vld [vmem:[%s1597 + $0x34] sm:$0xf]
        %v1612 = vld [vmem:[%s1597 + $0x38] sm:$0xf]
        %v1613 = vld [vmem:[%s1597 + $0x3c] sm:$0xf]
        %vm1627 = vcmask 1046528
        %v1628 = vrot.slane %v1084, 1
        %v1629 = vrot.slane %v1085, 1
        %v1630 = vsel %vm1627, %v1628, %v1629
        %v1631 = vrot.slane %v1086, 1
        %v1632 = vsel %vm1627, %v1629, %v1631
        %v1633 = vrot.slane %v1087, 1
        %v1634 = vsel %vm1627, %v1631, %v1633
        %v1635 = vrot.slane %v1088, 1
        %v1636 = vsel %vm1627, %v1633, %v1635
        %v1637 = vrot.slane %v1089, 1
        %v1638 = vsel %vm1627, %v1635, %v1637
        %v1639 = vrot.slane %v1090, 1
        %v1640 = vsel %vm1627, %v1637, %v1639
        %v1641 = vrot.slane %v1091, 1
        %v1642 = vsel %vm1627, %v1639, %v1641
        %v1643 = vrot.slane %v1092, 1
        %v1644 = vsel %vm1627, %v1641, %v1643
        %v1645 = vrot.slane %v1093, 1
        %v1646 = vsel %vm1627, %v1643, %v1645
        %v1647 = vrot.slane %v1094, 1
        %v1648 = vsel %vm1627, %v1645, %v1647
        %v1649 = vrot.slane %v1095, 1
        %v1650 = vsel %vm1627, %v1647, %v1649
        %v1651 = vrot.slane %v1112, 1
        %v1652 = vsel %vm1627, %v1649, %v1651
        %v1681 = vunpack.c.l.b16 %v1598
        %v1682 = vunpack.c.l.b16 %v1599
        %v1683 = vunpack.c.l.b16 %v1600
        %v1684 = vunpack.c.l.b16 %v1601
        %v1685 = vunpack.c.l.b16 %v1602
        %v1686 = vunpack.c.l.b16 %v1603
        %v1687 = vunpack.c.l.b16 %v1604
        %v1688 = vunpack.c.l.b16 %v1605
        %v1689 = vunpack.c.l.b16 %v1606
        %v1690 = vunpack.c.l.b16 %v1607
        %v1691 = vunpack.c.l.b16 %v1608
        %v1692 = vunpack.c.l.b16 %v1609
        %v1693 = vunpack.c.l.b16 %v1610
        %v1694 = vunpack.c.l.b16 %v1611
        %v1695 = vunpack.c.l.b16 %v1612
        %v1696 = vunpack.c.l.b16 %v1613
        %v1697 = vpack.c.b16 %v1682, %v1681
        %v1698 = vpack.c.b16 %v1684, %v1683
        %v1699 = vpack.c.b16 %v1686, %v1685
        %v1700 = vpack.c.b16 %v1688, %v1687
        %v1701 = vpack.c.b16 %v1690, %v1689
        %v1702 = vpack.c.b16 %v1692, %v1691
        %v1703 = vpack.c.b16 %v1694, %v1693
        %v1704 = vpack.c.b16 %v1696, %v1695
        %1713 = vmatprep.subr.bf16.mxu0 0
        %1714 = vmatpush1.bf16.msra.mxu0 %v1704
        %1715 = vmatprep.subr.bf16.mxu0 0
        %1716 = vmatpush1.bf16.msra.mxu0 %v1703
        %1717 = vmatprep.subr.bf16.mxu0 0
        %1718 = vmatpush1.bf16.msra.mxu0 %v1702
        %1719 = vmatprep.subr.bf16.mxu0 0
        %1720 = vmatpush1.bf16.msra.mxu0 %v1701
        %1721 = vmatprep.subr.bf16.mxu0 0
        %1722 = vmatpush1.bf16.msra.mxu0 %v1700
        %1723 = vmatprep.subr.bf16.mxu0 0
        %1724 = vmatpush1.bf16.msra.mxu0 %v1699
        %1725 = vmatprep.subr.bf16.mxu0 0
        %1726 = vmatpush1.bf16.msra.mxu0 %v1698
        %1727 = vmatprep.subr.bf16.mxu0 0
        %1728 = vmatpush1.bf16.msra.mxu0 %v1697
        %1729 = vmatprep.subr.bf16.mxu0 0
        %1730 = vmatpush2.bf16.msra.mxu0 0
        %1731 = vmatprep.subr.bf16.mxu0 0
        %1732 = vmatpush2.bf16.msra.mxu0 0
        %1733 = vmatprep.subr.bf16.mxu0 0
        %1734 = vmatpush2.bf16.msra.mxu0 0
        %1735 = vmatprep.subr.bf16.mxu0 0
        %1736 = vmatpush2.bf16.msra.mxu0 0
        %1737 = vmatprep.subr.bf16.mxu0 0
        %1738 = vmatpush2.bf16.msra.mxu0 0
        %1739 = vmatprep.subr.bf16.mxu0 0
        %1740 = vmatpush2.bf16.msra.mxu0 0
        %1741 = vmatprep.subr.bf16.mxu0 0
        %1742 = vmatpush2.bf16.msra.mxu0 0
        %1743 = vmatprep.subr.bf16.mxu0 0
        %1744 = vmatpush2.bf16.msra.mxu0 0
        %1745 = vmatprep.mubr.bf16.mxu0 0
        %1746 = vmatmul.mubr.bf16.gmra.mxu0 %v1630
        %v1747 = vpop.f32.mrf.mxu0
        %v1748 = vadd.f32 0.0, %v1747
        %v1749 = vpop.f32.mrf.mxu0
        %v1750 = vpop.f32.mrf.mxu0
        %v1751 = vadd.f32 0.0, %v1750
        %v1752 = vpop.f32.mrf.mxu0
        %1753 = vmatprep.mubr.bf16.mxu0 0
        %1754 = vmatmul.mubr.bf16.gmra.mxu0 %v1632
        %v1755 = vpop.f32.mrf.mxu0
        %v1756 = vadd.f32 0.0, %v1755
        %v1757 = vpop.f32.mrf.mxu0
        %v1758 = vpop.f32.mrf.mxu0
        %v1759 = vadd.f32 0.0, %v1758
        %v1760 = vpop.f32.mrf.mxu0
        %1761 = vmatprep.mubr.bf16.mxu0 0
        %1762 = vmatmul.mubr.bf16.gmra.mxu0 %v1634
        %v1763 = vpop.f32.mrf.mxu0
        %v1764 = vadd.f32 0.0, %v1763
        %v1765 = vpop.f32.mrf.mxu0
        %v1766 = vpop.f32.mrf.mxu0
        %v1767 = vadd.f32 0.0, %v1766
        %v1768 = vpop.f32.mrf.mxu0
        %1769 = vmatprep.mubr.bf16.mxu0 0
        %1770 = vmatmul.mubr.bf16.gmra.mxu0 %v1636
        %v1771 = vpop.f32.mrf.mxu0
        %v1772 = vadd.f32 0.0, %v1771
        %v1773 = vpop.f32.mrf.mxu0
        %v1774 = vpop.f32.mrf.mxu0
        %v1775 = vadd.f32 0.0, %v1774
        %v1776 = vpop.f32.mrf.mxu0
        %1777 = vmatprep.mubr.bf16.mxu0 0
        %1778 = vmatmul.mubr.bf16.gmra.mxu0 %v1638
        %v1779 = vpop.f32.mrf.mxu0
        %v1780 = vadd.f32 0.0, %v1779
        %v1781 = vpop.f32.mrf.mxu0
        %v1782 = vpop.f32.mrf.mxu0
        %v1783 = vadd.f32 0.0, %v1782
        %v1784 = vpop.f32.mrf.mxu0
        %1785 = vmatprep.mubr.bf16.mxu0 0
        %1786 = vmatmul.mubr.bf16.gmra.mxu0 %v1640
        %v1787 = vpop.f32.mrf.mxu0
        %v1788 = vadd.f32 0.0, %v1787
        %v1789 = vpop.f32.mrf.mxu0
        %v1790 = vpop.f32.mrf.mxu0
        %v1791 = vadd.f32 0.0, %v1790
        %v1792 = vpop.f32.mrf.mxu0
        %1793 = vmatprep.mubr.bf16.mxu0 0
        %1794 = vmatmul.mubr.bf16.gmra.mxu0 %v1642
        %v1795 = vpop.f32.mrf.mxu0
        %v1796 = vadd.f32 0.0, %v1795
        %v1797 = vpop.f32.mrf.mxu0
        %v1798 = vpop.f32.mrf.mxu0
        %v1799 = vadd.f32 0.0, %v1798
        %v1800 = vpop.f32.mrf.mxu0
        %1801 = vmatprep.mubr.bf16.mxu0 0
        %1802 = vmatmul.mubr.bf16.gmra.mxu0 %v1644
        %v1803 = vpop.f32.mrf.mxu0
        %v1804 = vadd.f32 0.0, %v1803
        %v1805 = vpop.f32.mrf.mxu0
        %v1806 = vpop.f32.mrf.mxu0
        %v1807 = vadd.f32 0.0, %v1806
        %v1808 = vpop.f32.mrf.mxu0
        %1809 = vmatprep.mubr.bf16.mxu0 0
        %1810 = vmatmul.mubr.bf16.gmra.mxu0 %v1646
        %v1811 = vpop.f32.mrf.mxu0
        %v1812 = vadd.f32 0.0, %v1811
        %v1813 = vpop.f32.mrf.mxu0
        %v1814 = vpop.f32.mrf.mxu0
        %v1815 = vadd.f32 0.0, %v1814
        %v1816 = vpop.f32.mrf.mxu0
        %1817 = vmatprep.mubr.bf16.mxu0 0
        %1818 = vmatmul.mubr.bf16.gmra.mxu0 %v1648
        %v1819 = vpop.f32.mrf.mxu0
        %v1820 = vadd.f32 0.0, %v1819
        %v1821 = vpop.f32.mrf.mxu0
        %v1822 = vpop.f32.mrf.mxu0
        %v1823 = vadd.f32 0.0, %v1822
        %v1824 = vpop.f32.mrf.mxu0
        %1825 = vmatprep.mubr.bf16.mxu0 0
        %1826 = vmatmul.mubr.bf16.gmra.mxu0 %v1650
        %v1827 = vpop.f32.mrf.mxu0
        %v1828 = vadd.f32 0.0, %v1827
        %v1829 = vpop.f32.mrf.mxu0
        %v1830 = vpop.f32.mrf.mxu0
        %v1831 = vadd.f32 0.0, %v1830
        %v1832 = vpop.f32.mrf.mxu0
        %1833 = vmatprep.mubr.bf16.mxu0 0
        %1834 = vmatmul.mubr.bf16.gmra.mxu0 %v1652
        %v1835 = vpop.f32.mrf.mxu0
        %v1836 = vadd.f32 0.0, %v1835
        %v1837 = vpop.f32.mrf.mxu0
        %v1838 = vpop.f32.mrf.mxu0
        %v1839 = vadd.f32 0.0, %v1838
        %v1840 = vpop.f32.mrf.mxu0
        %1841 = vdwg.mxu0
        %v1842 = vadd.f32 %v1503, %v1748
        %v1843 = vadd.f32 %v1506, %v1751
        %v1844 = vadd.f32 %v1511, %v1756
        %v1845 = vadd.f32 %v1514, %v1759
        %v1846 = vadd.f32 %v1519, %v1764
        %v1847 = vadd.f32 %v1522, %v1767
        %v1848 = vadd.f32 %v1527, %v1772
        %v1849 = vadd.f32 %v1530, %v1775
        %v1850 = vadd.f32 %v1535, %v1780
        %v1851 = vadd.f32 %v1538, %v1783
        %v1852 = vadd.f32 %v1543, %v1788
        %v1853 = vadd.f32 %v1546, %v1791
        %v1854 = vadd.f32 %v1551, %v1796
        %v1855 = vadd.f32 %v1554, %v1799
        %v1856 = vadd.f32 %v1559, %v1804
        %v1857 = vadd.f32 %v1562, %v1807
        %v1858 = vadd.f32 %v1567, %v1812
        %v1859 = vadd.f32 %v1570, %v1815
        %v1860 = vadd.f32 %v1575, %v1820
        %v1861 = vadd.f32 %v1578, %v1823
        %v1862 = vadd.f32 %v1583, %v1828
        %v1863 = vadd.f32 %v1586, %v1831
        %v1864 = vadd.f32 %v1591, %v1836
        %v1865 = vadd.f32 %v1594, %v1839
        %v1866 = vpack.c.bf16 %v1057, %v1056
        %v1867 = vpack.c.bf16 %v1059, %v1058
        %v1868 = vpack.c.bf16 %v1061, %v1060
        %v1869 = vpack.c.bf16 %v1063, %v1062
        %v1870 = vpack.c.bf16 %v1065, %v1064
        %v1871 = vpack.c.bf16 %v1067, %v1066
        %v1872 = vpack.c.bf16 %v1069, %v1068
        %v1873 = vpack.c.bf16 %v1071, %v1070
        %v1874 = vpack.c.bf16 %v1073, %v1072
        %v1875 = vpack.c.bf16 %v1075, %v1074
        %v1876 = vpack.c.bf16 %v1077, %v1076
        %v1877 = vpack.c.bf16 %v1079, %v1078
        %s1878 = scalar_lea.vmem [#allocation5], 192
        %v1879 = vld [vmem:[%s1878] sm:$0xf]
        %v1880 = vld [vmem:[%s1878 + $0x4] sm:$0xf]
        %v1881 = vld [vmem:[%s1878 + $0x8] sm:$0xf]
        %v1882 = vld [vmem:[%s1878 + $0xc] sm:$0xf]
        %v1883 = vld [vmem:[%s1878 + $0x10] sm:$0xf]
        %v1884 = vld [vmem:[%s1878 + $0x14] sm:$0xf]
        %v1885 = vld [vmem:[%s1878 + $0x18] sm:$0xf]
        %v1886 = vld [vmem:[%s1878 + $0x1c] sm:$0xf]
        %v1887 = vld [vmem:[%s1878 + $0x20] sm:$0xf]
        %v1888 = vld [vmem:[%s1878 + $0x24] sm:$0xf]
        %v1889 = vld [vmem:[%s1878 + $0x28] sm:$0xf]
        %v1890 = vld [vmem:[%s1878 + $0x2c] sm:$0xf]
        %v1891 = vld [vmem:[%s1878 + $0x30] sm:$0xf]
        %v1892 = vld [vmem:[%s1878 + $0x34] sm:$0xf]
        %v1893 = vld [vmem:[%s1878 + $0x38] sm:$0xf]
        %v1894 = vld [vmem:[%s1878 + $0x3c] sm:$0xf]
        %v1911 = vunpack.c.l.b16 %v1879
        %v1912 = vunpack.c.l.b16 %v1880
        %v1913 = vunpack.c.l.b16 %v1881
        %v1914 = vunpack.c.l.b16 %v1882
        %v1915 = vunpack.c.l.b16 %v1883
        %v1916 = vunpack.c.l.b16 %v1884
        %v1917 = vunpack.c.l.b16 %v1885
        %v1918 = vunpack.c.l.b16 %v1886
        %v1919 = vunpack.c.l.b16 %v1887
        %v1920 = vunpack.c.l.b16 %v1888
        %v1921 = vunpack.c.l.b16 %v1889
        %v1922 = vunpack.c.l.b16 %v1890
        %v1923 = vunpack.c.l.b16 %v1891
        %v1924 = vunpack.c.l.b16 %v1892
        %v1925 = vunpack.c.l.b16 %v1893
        %v1926 = vunpack.c.l.b16 %v1894
        %v1927 = vpack.c.b16 %v1912, %v1911
        %v1928 = vpack.c.b16 %v1914, %v1913
        %v1929 = vpack.c.b16 %v1916, %v1915
        %v1930 = vpack.c.b16 %v1918, %v1917
        %v1931 = vpack.c.b16 %v1920, %v1919
        %v1932 = vpack.c.b16 %v1922, %v1921
        %v1933 = vpack.c.b16 %v1924, %v1923
        %v1934 = vpack.c.b16 %v1926, %v1925
        %1943 = vmatprep.subr.bf16.mxu0 0
        %1944 = vmatpush1.bf16.msra.mxu0 %v1934
        %1945 = vmatprep.subr.bf16.mxu0 0
        %1946 = vmatpush1.bf16.msra.mxu0 %v1933
        %1947 = vmatprep.subr.bf16.mxu0 0
        %1948 = vmatpush1.bf16.msra.mxu0 %v1932
        %1949 = vmatprep.subr.bf16.mxu0 0
        %1950 = vmatpush1.bf16.msra.mxu0 %v1931
        %1951 = vmatprep.subr.bf16.mxu0 0
        %1952 = vmatpush1.bf16.msra.mxu0 %v1930
        %1953 = vmatprep.subr.bf16.mxu0 0
        %1954 = vmatpush1.bf16.msra.mxu0 %v1929
        %1955 = vmatprep.subr.bf16.mxu0 0
        %1956 = vmatpush1.bf16.msra.mxu0 %v1928
        %1957 = vmatprep.subr.bf16.mxu0 0
        %1958 = vmatpush1.bf16.msra.mxu0 %v1927
        %1959 = vmatprep.subr.bf16.mxu0 0
        %1960 = vmatpush2.bf16.msra.mxu0 0
        %1961 = vmatprep.subr.bf16.mxu0 0
        %1962 = vmatpush2.bf16.msra.mxu0 0
        %1963 = vmatprep.subr.bf16.mxu0 0
        %1964 = vmatpush2.bf16.msra.mxu0 0
        %1965 = vmatprep.subr.bf16.mxu0 0
        %1966 = vmatpush2.bf16.msra.mxu0 0
        %1967 = vmatprep.subr.bf16.mxu0 0
        %1968 = vmatpush2.bf16.msra.mxu0 0
        %1969 = vmatprep.subr.bf16.mxu0 0
        %1970 = vmatpush2.bf16.msra.mxu0 0
        %1971 = vmatprep.subr.bf16.mxu0 0
        %1972 = vmatpush2.bf16.msra.mxu0 0
        %1973 = vmatprep.subr.bf16.mxu0 0
        %1974 = vmatpush2.bf16.msra.mxu0 0
        %1975 = vmatprep.mubr.bf16.mxu0 0
        %1976 = vmatmul.mubr.bf16.gmra.mxu0 %v1866
        %v1977 = vpop.f32.mrf.mxu0
        %v1978 = vadd.f32 0.0, %v1977
        %v1979 = vpop.f32.mrf.mxu0
        %v1980 = vpop.f32.mrf.mxu0
        %v1981 = vadd.f32 0.0, %v1980
        %v1982 = vpop.f32.mrf.mxu0
        %1983 = vmatprep.mubr.bf16.mxu0 0
        %1984 = vmatmul.mubr.bf16.gmra.mxu0 %v1867
        %v1985 = vpop.f32.mrf.mxu0
        %v1986 = vadd.f32 0.0, %v1985
        %v1987 = vpop.f32.mrf.mxu0
        %v1988 = vpop.f32.mrf.mxu0
        %v1989 = vadd.f32 0.0, %v1988
        %v1990 = vpop.f32.mrf.mxu0
        %1991 = vmatprep.mubr.bf16.mxu0 0
        %1992 = vmatmul.mubr.bf16.gmra.mxu0 %v1868
        %v1993 = vpop.f32.mrf.mxu0
        %v1994 = vadd.f32 0.0, %v1993
        %v1995 = vpop.f32.mrf.mxu0
        %v1996 = vpop.f32.mrf.mxu0
        %v1997 = vadd.f32 0.0, %v1996
        %v1998 = vpop.f32.mrf.mxu0
        %1999 = vmatprep.mubr.bf16.mxu0 0
        %2000 = vmatmul.mubr.bf16.gmra.mxu0 %v1869
        %v2001 = vpop.f32.mrf.mxu0
        %v2002 = vadd.f32 0.0, %v2001
        %v2003 = vpop.f32.mrf.mxu0
        %v2004 = vpop.f32.mrf.mxu0
        %v2005 = vadd.f32 0.0, %v2004
        %v2006 = vpop.f32.mrf.mxu0
        %2007 = vmatprep.mubr.bf16.mxu0 0
        %2008 = vmatmul.mubr.bf16.gmra.mxu0 %v1870
        %v2009 = vpop.f32.mrf.mxu0
        %v2010 = vadd.f32 0.0, %v2009
        %v2011 = vpop.f32.mrf.mxu0
        %v2012 = vpop.f32.mrf.mxu0
        %v2013 = vadd.f32 0.0, %v2012
        %v2014 = vpop.f32.mrf.mxu0
        %2015 = vmatprep.mubr.bf16.mxu0 0
        %2016 = vmatmul.mubr.bf16.gmra.mxu0 %v1871
        %v2017 = vpop.f32.mrf.mxu0
        %v2018 = vadd.f32 0.0, %v2017
        %v2019 = vpop.f32.mrf.mxu0
        %v2020 = vpop.f32.mrf.mxu0
        %v2021 = vadd.f32 0.0, %v2020
        %v2022 = vpop.f32.mrf.mxu0
        %2023 = vmatprep.mubr.bf16.mxu0 0
        %2024 = vmatmul.mubr.bf16.gmra.mxu0 %v1872
        %v2025 = vpop.f32.mrf.mxu0
        %v2026 = vadd.f32 0.0, %v2025
        %v2027 = vpop.f32.mrf.mxu0
        %v2028 = vpop.f32.mrf.mxu0
        %v2029 = vadd.f32 0.0, %v2028
        %v2030 = vpop.f32.mrf.mxu0
        %2031 = vmatprep.mubr.bf16.mxu0 0
        %2032 = vmatmul.mubr.bf16.gmra.mxu0 %v1873
        %v2033 = vpop.f32.mrf.mxu0
        %v2034 = vadd.f32 0.0, %v2033
        %v2035 = vpop.f32.mrf.mxu0
        %v2036 = vpop.f32.mrf.mxu0
        %v2037 = vadd.f32 0.0, %v2036
        %v2038 = vpop.f32.mrf.mxu0
        %2039 = vmatprep.mubr.bf16.mxu0 0
        %2040 = vmatmul.mubr.bf16.gmra.mxu0 %v1874
        %v2041 = vpop.f32.mrf.mxu0
        %v2042 = vadd.f32 0.0, %v2041
        %v2043 = vpop.f32.mrf.mxu0
        %v2044 = vpop.f32.mrf.mxu0
        %v2045 = vadd.f32 0.0, %v2044
        %v2046 = vpop.f32.mrf.mxu0
        %2047 = vmatprep.mubr.bf16.mxu0 0
        %2048 = vmatmul.mubr.bf16.gmra.mxu0 %v1875
        %v2049 = vpop.f32.mrf.mxu0
        %v2050 = vadd.f32 0.0, %v2049
        %v2051 = vpop.f32.mrf.mxu0
        %v2052 = vpop.f32.mrf.mxu0
        %v2053 = vadd.f32 0.0, %v2052
        %v2054 = vpop.f32.mrf.mxu0
        %2055 = vmatprep.mubr.bf16.mxu0 0
        %2056 = vmatmul.mubr.bf16.gmra.mxu0 %v1876
        %v2057 = vpop.f32.mrf.mxu0
        %v2058 = vadd.f32 0.0, %v2057
        %v2059 = vpop.f32.mrf.mxu0
        %v2060 = vpop.f32.mrf.mxu0
        %v2061 = vadd.f32 0.0, %v2060
        %v2062 = vpop.f32.mrf.mxu0
        %2063 = vmatprep.mubr.bf16.mxu0 0
        %2064 = vmatmul.mubr.bf16.gmra.mxu0 %v1877
        %v2065 = vpop.f32.mrf.mxu0
        %v2066 = vadd.f32 0.0, %v2065
        %v2067 = vpop.f32.mrf.mxu0
        %v2068 = vpop.f32.mrf.mxu0
        %v2069 = vadd.f32 0.0, %v2068
        %v2070 = vpop.f32.mrf.mxu0
        %2071 = vdwg.mxu0
        %v2072 = vadd.f32 %v1842, %v1978
        %v2073 = vadd.f32 %v1843, %v1981
        %v2074 = vadd.f32 %v1844, %v1986
        %v2075 = vadd.f32 %v1845, %v1989
        %v2076 = vadd.f32 %v1846, %v1994
        %v2077 = vadd.f32 %v1847, %v1997
        %v2078 = vadd.f32 %v1848, %v2002
        %v2079 = vadd.f32 %v1849, %v2005
        %v2080 = vadd.f32 %v1850, %v2010
        %v2081 = vadd.f32 %v1851, %v2013
        %v2082 = vadd.f32 %v1852, %v2018
        %v2083 = vadd.f32 %v1853, %v2021
        %v2084 = vadd.f32 %v1854, %v2026
        %v2085 = vadd.f32 %v1855, %v2029
        %v2086 = vadd.f32 %v1856, %v2034
        %v2087 = vadd.f32 %v1857, %v2037
        %v2088 = vadd.f32 %v1858, %v2042
        %v2089 = vadd.f32 %v1859, %v2045
        %v2090 = vadd.f32 %v1860, %v2050
        %v2091 = vadd.f32 %v1861, %v2053
        %v2092 = vadd.f32 %v1862, %v2058
        %v2093 = vadd.f32 %v1863, %v2061
        %v2094 = vadd.f32 %v1864, %v2066
        %v2095 = vadd.f32 %v1865, %v2069
        %v2096 = vpack.c.bf16 %v1080, %v1080
        %s2097 = scalar_lea.vmem [#allocation5], 256
        %v2098 = vld [vmem:[%s2097] sm:$0xf]
        %v2099 = vld [vmem:[%s2097 + $0x4] sm:$0xf]
        %v2100 = vld [vmem:[%s2097 + $0x8] sm:$0xf]
        %v2101 = vld [vmem:[%s2097 + $0xc] sm:$0xf]
        %v2102 = vld [vmem:[%s2097 + $0x10] sm:$0xf]
        %v2103 = vld [vmem:[%s2097 + $0x14] sm:$0xf]
        %v2104 = vld [vmem:[%s2097 + $0x18] sm:$0xf]
        %v2105 = vld [vmem:[%s2097 + $0x1c] sm:$0xf]
        %v2106 = vld [vmem:[%s2097 + $0x20] sm:$0xf]
        %v2107 = vld [vmem:[%s2097 + $0x24] sm:$0xf]
        %v2108 = vld [vmem:[%s2097 + $0x28] sm:$0xf]
        %v2109 = vld [vmem:[%s2097 + $0x2c] sm:$0xf]
        %v2110 = vld [vmem:[%s2097 + $0x30] sm:$0xf]
        %v2111 = vld [vmem:[%s2097 + $0x34] sm:$0xf]
        %v2112 = vld [vmem:[%s2097 + $0x38] sm:$0xf]
        %v2113 = vld [vmem:[%s2097 + $0x3c] sm:$0xf]
        %v2115 = vshrl.u32 %v1866, 16
        %v2117 = vshll.u32 %v1866, 16
        %v2119 = vrot.slane %v2117, 1
        %v2120 = vor.u32 %v2115, %v2119
        %v2122 = vshll.u32 %v1867, 16
        %v2124 = vrot.slane %v2122, 1
        %v2125 = vsel %vm1130, %v2120, %v2124
        %v2126 = vshrl.u32 %v1867, 16
        %v2128 = vor.u32 %v2126, %v2124
        %v2130 = vshll.u32 %v1868, 16
        %v2132 = vrot.slane %v2130, 1
        %v2133 = vsel %vm1130, %v2128, %v2132
        %v2134 = vshrl.u32 %v1868, 16
        %v2136 = vor.u32 %v2134, %v2132
        %v2138 = vshll.u32 %v1869, 16
        %v2140 = vrot.slane %v2138, 1
        %v2141 = vsel %vm1130, %v2136, %v2140
        %v2142 = vshrl.u32 %v1869, 16
        %v2144 = vor.u32 %v2142, %v2140
        %v2146 = vshll.u32 %v1870, 16
        %v2148 = vrot.slane %v2146, 1
        %v2149 = vsel %vm1130, %v2144, %v2148
        %v2150 = vshrl.u32 %v1870, 16
        %v2152 = vor.u32 %v2150, %v2148
        %v2154 = vshll.u32 %v1871, 16
        %v2156 = vrot.slane %v2154, 1
        %v2157 = vsel %vm1130, %v2152, %v2156
        %v2158 = vshrl.u32 %v1871, 16
        %v2160 = vor.u32 %v2158, %v2156
        %v2162 = vshll.u32 %v1872, 16
        %v2164 = vrot.slane %v2162, 1
        %v2165 = vsel %vm1130, %v2160, %v2164
        %v2166 = vshrl.u32 %v1872, 16
        %v2168 = vor.u32 %v2166, %v2164
        %v2170 = vshll.u32 %v1873, 16
        %v2172 = vrot.slane %v2170, 1
        %v2173 = vsel %vm1130, %v2168, %v2172
        %v2174 = vshrl.u32 %v1873, 16
        %v2176 = vor.u32 %v2174, %v2172
        %v2178 = vshll.u32 %v1874, 16
        %v2180 = vrot.slane %v2178, 1
        %v2181 = vsel %vm1130, %v2176, %v2180
        %v2182 = vshrl.u32 %v1874, 16
        %v2184 = vor.u32 %v2182, %v2180
        %v2186 = vshll.u32 %v1875, 16
        %v2188 = vrot.slane %v2186, 1
        %v2189 = vsel %vm1130, %v2184, %v2188
        %v2190 = vshrl.u32 %v1875, 16
        %v2192 = vor.u32 %v2190, %v2188
        %v2194 = vshll.u32 %v1876, 16
        %v2196 = vrot.slane %v2194, 1
        %v2197 = vsel %vm1130, %v2192, %v2196
        %v2198 = vshrl.u32 %v1876, 16
        %v2200 = vor.u32 %v2198, %v2196
        %v2202 = vshll.u32 %v1877, 16
        %v2204 = vrot.slane %v2202, 1
        %v2205 = vsel %vm1130, %v2200, %v2204
        %v2206 = vshrl.u32 %v1877, 16
        %v2208 = vor.u32 %v2206, %v2204
        %v2210 = vshll.u32 %v2096, 16
        %v2212 = vrot.slane %v2210, 1
        %v2213 = vsel %vm1130, %v2208, %v2212
        %v2242 = vunpack.c.l.b16 %v2098
        %v2243 = vunpack.c.l.b16 %v2099
        %v2244 = vunpack.c.l.b16 %v2100
        %v2245 = vunpack.c.l.b16 %v2101
        %v2246 = vunpack.c.l.b16 %v2102
        %v2247 = vunpack.c.l.b16 %v2103
        %v2248 = vunpack.c.l.b16 %v2104
        %v2249 = vunpack.c.l.b16 %v2105
        %v2250 = vunpack.c.l.b16 %v2106
        %v2251 = vunpack.c.l.b16 %v2107
        %v2252 = vunpack.c.l.b16 %v2108
        %v2253 = vunpack.c.l.b16 %v2109
        %v2254 = vunpack.c.l.b16 %v2110
        %v2255 = vunpack.c.l.b16 %v2111
        %v2256 = vunpack.c.l.b16 %v2112
        %v2257 = vunpack.c.l.b16 %v2113
        %v2258 = vpack.c.b16 %v2243, %v2242
        %v2259 = vpack.c.b16 %v2245, %v2244
        %v2260 = vpack.c.b16 %v2247, %v2246
        %v2261 = vpack.c.b16 %v2249, %v2248
        %v2262 = vpack.c.b16 %v2251, %v2250
        %v2263 = vpack.c.b16 %v2253, %v2252
        %v2264 = vpack.c.b16 %v2255, %v2254
        %v2265 = vpack.c.b16 %v2257, %v2256
        %2274 = vmatprep.subr.bf16.mxu0 0
        %2275 = vmatpush1.bf16.msra.mxu0 %v2265
        %2276 = vmatprep.subr.bf16.mxu0 0
        %2277 = vmatpush1.bf16.msra.mxu0 %v2264
        %2278 = vmatprep.subr.bf16.mxu0 0
        %2279 = vmatpush1.bf16.msra.mxu0 %v2263
        %2280 = vmatprep.subr.bf16.mxu0 0
        %2281 = vmatpush1.bf16.msra.mxu0 %v2262
        %2282 = vmatprep.subr.bf16.mxu0 0
        %2283 = vmatpush1.bf16.msra.mxu0 %v2261
        %2284 = vmatprep.subr.bf16.mxu0 0
        %2285 = vmatpush1.bf16.msra.mxu0 %v2260
        %2286 = vmatprep.subr.bf16.mxu0 0
        %2287 = vmatpush1.bf16.msra.mxu0 %v2259
        %2288 = vmatprep.subr.bf16.mxu0 0
        %2289 = vmatpush1.bf16.msra.mxu0 %v2258
        %2290 = vmatprep.subr.bf16.mxu0 0
        %2291 = vmatpush2.bf16.msra.mxu0 0
        %2292 = vmatprep.subr.bf16.mxu0 0
        %2293 = vmatpush2.bf16.msra.mxu0 0
        %2294 = vmatprep.subr.bf16.mxu0 0
        %2295 = vmatpush2.bf16.msra.mxu0 0
        %2296 = vmatprep.subr.bf16.mxu0 0
        %2297 = vmatpush2.bf16.msra.mxu0 0
        %2298 = vmatprep.subr.bf16.mxu0 0
        %2299 = vmatpush2.bf16.msra.mxu0 0
        %2300 = vmatprep.subr.bf16.mxu0 0
        %2301 = vmatpush2.bf16.msra.mxu0 0
        %2302 = vmatprep.subr.bf16.mxu0 0
        %2303 = vmatpush2.bf16.msra.mxu0 0
        %2304 = vmatprep.subr.bf16.mxu0 0
        %2305 = vmatpush2.bf16.msra.mxu0 0
        %2306 = vmatprep.mubr.bf16.mxu0 0
        %2307 = vmatmul.mubr.bf16.gmra.mxu0 %v2125
        %v2308 = vpop.f32.mrf.mxu0
        %v2309 = vadd.f32 0.0, %v2308
        %v2310 = vpop.f32.mrf.mxu0
        %v2311 = vpop.f32.mrf.mxu0
        %v2312 = vadd.f32 0.0, %v2311
        %v2313 = vpop.f32.mrf.mxu0
        %2314 = vmatprep.mubr.bf16.mxu0 0
        %2315 = vmatmul.mubr.bf16.gmra.mxu0 %v2133
        %v2316 = vpop.f32.mrf.mxu0
        %v2317 = vadd.f32 0.0, %v2316
        %v2318 = vpop.f32.mrf.mxu0
        %v2319 = vpop.f32.mrf.mxu0
        %v2320 = vadd.f32 0.0, %v2319
        %v2321 = vpop.f32.mrf.mxu0
        %2322 = vmatprep.mubr.bf16.mxu0 0
        %2323 = vmatmul.mubr.bf16.gmra.mxu0 %v2141
        %v2324 = vpop.f32.mrf.mxu0
        %v2325 = vadd.f32 0.0, %v2324
        %v2326 = vpop.f32.mrf.mxu0
        %v2327 = vpop.f32.mrf.mxu0
        %v2328 = vadd.f32 0.0, %v2327
        %v2329 = vpop.f32.mrf.mxu0
        %2330 = vmatprep.mubr.bf16.mxu0 0
        %2331 = vmatmul.mubr.bf16.gmra.mxu0 %v2149
        %v2332 = vpop.f32.mrf.mxu0
        %v2333 = vadd.f32 0.0, %v2332
        %v2334 = vpop.f32.mrf.mxu0
        %v2335 = vpop.f32.mrf.mxu0
        %v2336 = vadd.f32 0.0, %v2335
        %v2337 = vpop.f32.mrf.mxu0
        %2338 = vmatprep.mubr.bf16.mxu0 0
        %2339 = vmatmul.mubr.bf16.gmra.mxu0 %v2157
        %v2340 = vpop.f32.mrf.mxu0
        %v2341 = vadd.f32 0.0, %v2340
        %v2342 = vpop.f32.mrf.mxu0
        %v2343 = vpop.f32.mrf.mxu0
        %v2344 = vadd.f32 0.0, %v2343
        %v2345 = vpop.f32.mrf.mxu0
        %2346 = vmatprep.mubr.bf16.mxu0 0
        %2347 = vmatmul.mubr.bf16.gmra.mxu0 %v2165
        %v2348 = vpop.f32.mrf.mxu0
        %v2349 = vadd.f32 0.0, %v2348
        %v2350 = vpop.f32.mrf.mxu0
        %v2351 = vpop.f32.mrf.mxu0
        %v2352 = vadd.f32 0.0, %v2351
        %v2353 = vpop.f32.mrf.mxu0
        %2354 = vmatprep.mubr.bf16.mxu0 0
        %2355 = vmatmul.mubr.bf16.gmra.mxu0 %v2173
        %v2356 = vpop.f32.mrf.mxu0
        %v2357 = vadd.f32 0.0, %v2356
        %v2358 = vpop.f32.mrf.mxu0
        %v2359 = vpop.f32.mrf.mxu0
        %v2360 = vadd.f32 0.0, %v2359
        %v2361 = vpop.f32.mrf.mxu0
        %2362 = vmatprep.mubr.bf16.mxu0 0
        %2363 = vmatmul.mubr.bf16.gmra.mxu0 %v2181
        %v2364 = vpop.f32.mrf.mxu0
        %v2365 = vadd.f32 0.0, %v2364
        %v2366 = vpop.f32.mrf.mxu0
        %v2367 = vpop.f32.mrf.mxu0
        %v2368 = vadd.f32 0.0, %v2367
        %v2369 = vpop.f32.mrf.mxu0
        %2370 = vmatprep.mubr.bf16.mxu0 0
        %2371 = vmatmul.mubr.bf16.gmra.mxu0 %v2189
        %v2372 = vpop.f32.mrf.mxu0
        %v2373 = vadd.f32 0.0, %v2372
        %v2374 = vpop.f32.mrf.mxu0
        %v2375 = vpop.f32.mrf.mxu0
        %v2376 = vadd.f32 0.0, %v2375
        %v2377 = vpop.f32.mrf.mxu0
        %2378 = vmatprep.mubr.bf16.mxu0 0
        %2379 = vmatmul.mubr.bf16.gmra.mxu0 %v2197
        %v2380 = vpop.f32.mrf.mxu0
        %v2381 = vadd.f32 0.0, %v2380
        %v2382 = vpop.f32.mrf.mxu0
        %v2383 = vpop.f32.mrf.mxu0
        %v2384 = vadd.f32 0.0, %v2383
        %v2385 = vpop.f32.mrf.mxu0
        %2386 = vmatprep.mubr.bf16.mxu0 0
        %2387 = vmatmul.mubr.bf16.gmra.mxu0 %v2205
        %v2388 = vpop.f32.mrf.mxu0
        %v2389 = vadd.f32 0.0, %v2388
        %v2390 = vpop.f32.mrf.mxu0
        %v2391 = vpop.f32.mrf.mxu0
        %v2392 = vadd.f32 0.0, %v2391
        %v2393 = vpop.f32.mrf.mxu0
        %2394 = vmatprep.mubr.bf16.mxu0 0
        %2395 = vmatmul.mubr.bf16.gmra.mxu0 %v2213
        %v2396 = vpop.f32.mrf.mxu0
        %v2397 = vadd.f32 0.0, %v2396
        %v2398 = vpop.f32.mrf.mxu0
        %v2399 = vpop.f32.mrf.mxu0
        %v2400 = vadd.f32 0.0, %v2399
        %v2401 = vpop.f32.mrf.mxu0
        %2402 = vdwg.mxu0
        %v2403 = vadd.f32 %v2072, %v2309
        %v2404 = vadd.f32 %v2073, %v2312
        %v2405 = vadd.f32 %v2074, %v2317
        %v2406 = vadd.f32 %v2075, %v2320
        %v2407 = vadd.f32 %v2076, %v2325
        %v2408 = vadd.f32 %v2077, %v2328
        %v2409 = vadd.f32 %v2078, %v2333
        %v2410 = vadd.f32 %v2079, %v2336
        %v2411 = vadd.f32 %v2080, %v2341
        %v2412 = vadd.f32 %v2081, %v2344
        %v2413 = vadd.f32 %v2082, %v2349
        %v2414 = vadd.f32 %v2083, %v2352
        %v2415 = vadd.f32 %v2084, %v2357
        %v2416 = vadd.f32 %v2085, %v2360
        %v2417 = vadd.f32 %v2086, %v2365
        %v2418 = vadd.f32 %v2087, %v2368
        %v2419 = vadd.f32 %v2088, %v2373
        %v2420 = vadd.f32 %v2089, %v2376
        %v2421 = vadd.f32 %v2090, %v2381
        %v2422 = vadd.f32 %v2091, %v2384
        %v2423 = vadd.f32 %v2092, %v2389
        %v2424 = vadd.f32 %v2093, %v2392
        %v2425 = vadd.f32 %v2094, %v2397
        %v2426 = vadd.f32 %v2095, %v2400
        %s2427 = scalar_lea.vmem [#allocation5], 320
        %v2428 = vld [vmem:[%s2427] sm:$0xf]
        %v2429 = vld [vmem:[%s2427 + $0x4] sm:$0xf]
        %v2430 = vld [vmem:[%s2427 + $0x8] sm:$0xf]
        %v2431 = vld [vmem:[%s2427 + $0xc] sm:$0xf]
        %v2432 = vld [vmem:[%s2427 + $0x10] sm:$0xf]
        %v2433 = vld [vmem:[%s2427 + $0x14] sm:$0xf]
        %v2434 = vld [vmem:[%s2427 + $0x18] sm:$0xf]
        %v2435 = vld [vmem:[%s2427 + $0x1c] sm:$0xf]
        %v2436 = vld [vmem:[%s2427 + $0x20] sm:$0xf]
        %v2437 = vld [vmem:[%s2427 + $0x24] sm:$0xf]
        %v2438 = vld [vmem:[%s2427 + $0x28] sm:$0xf]
        %v2439 = vld [vmem:[%s2427 + $0x2c] sm:$0xf]
        %v2440 = vld [vmem:[%s2427 + $0x30] sm:$0xf]
        %v2441 = vld [vmem:[%s2427 + $0x34] sm:$0xf]
        %v2442 = vld [vmem:[%s2427 + $0x38] sm:$0xf]
        %v2443 = vld [vmem:[%s2427 + $0x3c] sm:$0xf]
        %v2457 = vrot.slane %v1866, 1
        %v2458 = vrot.slane %v1867, 1
        %v2459 = vsel %vm1627, %v2457, %v2458
        %v2460 = vrot.slane %v1868, 1
        %v2461 = vsel %vm1627, %v2458, %v2460
        %v2462 = vrot.slane %v1869, 1
        %v2463 = vsel %vm1627, %v2460, %v2462
        %v2464 = vrot.slane %v1870, 1
        %v2465 = vsel %vm1627, %v2462, %v2464
        %v2466 = vrot.slane %v1871, 1
        %v2467 = vsel %vm1627, %v2464, %v2466
        %v2468 = vrot.slane %v1872, 1
        %v2469 = vsel %vm1627, %v2466, %v2468
        %v2470 = vrot.slane %v1873, 1
        %v2471 = vsel %vm1627, %v2468, %v2470
        %v2472 = vrot.slane %v1874, 1
        %v2473 = vsel %vm1627, %v2470, %v2472
        %v2474 = vrot.slane %v1875, 1
        %v2475 = vsel %vm1627, %v2472, %v2474
        %v2476 = vrot.slane %v1876, 1
        %v2477 = vsel %vm1627, %v2474, %v2476
        %v2478 = vrot.slane %v1877, 1
        %v2479 = vsel %vm1627, %v2476, %v2478
        %v2480 = vrot.slane %v2096, 1
        %v2481 = vsel %vm1627, %v2478, %v2480
        %v2510 = vunpack.c.l.b16 %v2428
        %v2511 = vunpack.c.l.b16 %v2429
        %v2512 = vunpack.c.l.b16 %v2430
        %v2513 = vunpack.c.l.b16 %v2431
        %v2514 = vunpack.c.l.b16 %v2432
        %v2515 = vunpack.c.l.b16 %v2433
        %v2516 = vunpack.c.l.b16 %v2434
        %v2517 = vunpack.c.l.b16 %v2435
        %v2518 = vunpack.c.l.b16 %v2436
        %v2519 = vunpack.c.l.b16 %v2437
        %v2520 = vunpack.c.l.b16 %v2438
        %v2521 = vunpack.c.l.b16 %v2439
        %v2522 = vunpack.c.l.b16 %v2440
        %v2523 = vunpack.c.l.b16 %v2441
        %v2524 = vunpack.c.l.b16 %v2442
        %v2525 = vunpack.c.l.b16 %v2443
        %v2526 = vpack.c.b16 %v2511, %v2510
        %v2527 = vpack.c.b16 %v2513, %v2512
        %v2528 = vpack.c.b16 %v2515, %v2514
        %v2529 = vpack.c.b16 %v2517, %v2516
        %v2530 = vpack.c.b16 %v2519, %v2518
        %v2531 = vpack.c.b16 %v2521, %v2520
        %v2532 = vpack.c.b16 %v2523, %v2522
        %v2533 = vpack.c.b16 %v2525, %v2524
        %2542 = vmatprep.subr.bf16.mxu0 0
        %2543 = vmatpush1.bf16.msra.mxu0 %v2533
        %2544 = vmatprep.subr.bf16.mxu0 0
        %2545 = vmatpush1.bf16.msra.mxu0 %v2532
        %2546 = vmatprep.subr.bf16.mxu0 0
        %2547 = vmatpush1.bf16.msra.mxu0 %v2531
        %2548 = vmatprep.subr.bf16.mxu0 0
        %2549 = vmatpush1.bf16.msra.mxu0 %v2530
        %2550 = vmatprep.subr.bf16.mxu0 0
        %2551 = vmatpush1.bf16.msra.mxu0 %v2529
        %2552 = vmatprep.subr.bf16.mxu0 0
        %2553 = vmatpush1.bf16.msra.mxu0 %v2528
        %2554 = vmatprep.subr.bf16.mxu0 0
        %2555 = vmatpush1.bf16.msra.mxu0 %v2527
        %2556 = vmatprep.subr.bf16.mxu0 0
        %2557 = vmatpush1.bf16.msra.mxu0 %v2526
        %2558 = vmatprep.subr.bf16.mxu0 0
        %2559 = vmatpush2.bf16.msra.mxu0 0
        %2560 = vmatprep.subr.bf16.mxu0 0
        %2561 = vmatpush2.bf16.msra.mxu0 0
        %2562 = vmatprep.subr.bf16.mxu0 0
        %2563 = vmatpush2.bf16.msra.mxu0 0
        %2564 = vmatprep.subr.bf16.mxu0 0
        %2565 = vmatpush2.bf16.msra.mxu0 0
        %2566 = vmatprep.subr.bf16.mxu0 0
        %2567 = vmatpush2.bf16.msra.mxu0 0
        %2568 = vmatprep.subr.bf16.mxu0 0
        %2569 = vmatpush2.bf16.msra.mxu0 0
        %2570 = vmatprep.subr.bf16.mxu0 0
        %2571 = vmatpush2.bf16.msra.mxu0 0
        %2572 = vmatprep.subr.bf16.mxu0 0
        %2573 = vmatpush2.bf16.msra.mxu0 0
        %2574 = vmatprep.mubr.bf16.mxu0 0
        %2575 = vmatmul.mubr.bf16.gmra.mxu0 %v2459
        %v2576 = vpop.f32.mrf.mxu0
        %v2577 = vadd.f32 0.0, %v2576
        %v2578 = vpop.f32.mrf.mxu0
        %v2579 = vpop.f32.mrf.mxu0
        %v2580 = vadd.f32 0.0, %v2579
        %v2581 = vpop.f32.mrf.mxu0
        %2582 = vmatprep.mubr.bf16.mxu0 0
        %2583 = vmatmul.mubr.bf16.gmra.mxu0 %v2461
        %v2584 = vpop.f32.mrf.mxu0
        %v2585 = vadd.f32 0.0, %v2584
        %v2586 = vpop.f32.mrf.mxu0
        %v2587 = vpop.f32.mrf.mxu0
        %v2588 = vadd.f32 0.0, %v2587
        %v2589 = vpop.f32.mrf.mxu0
        %2590 = vmatprep.mubr.bf16.mxu0 0
        %2591 = vmatmul.mubr.bf16.gmra.mxu0 %v2463
        %v2592 = vpop.f32.mrf.mxu0
        %v2593 = vadd.f32 0.0, %v2592
        %v2594 = vpop.f32.mrf.mxu0
        %v2595 = vpop.f32.mrf.mxu0
        %v2596 = vadd.f32 0.0, %v2595
        %v2597 = vpop.f32.mrf.mxu0
        %2598 = vmatprep.mubr.bf16.mxu0 0
        %2599 = vmatmul.mubr.bf16.gmra.mxu0 %v2465
        %v2600 = vpop.f32.mrf.mxu0
        %v2601 = vadd.f32 0.0, %v2600
        %v2602 = vpop.f32.mrf.mxu0
        %v2603 = vpop.f32.mrf.mxu0
        %v2604 = vadd.f32 0.0, %v2603
        %v2605 = vpop.f32.mrf.mxu0
        %2606 = vmatprep.mubr.bf16.mxu0 0
        %2607 = vmatmul.mubr.bf16.gmra.mxu0 %v2467
        %v2608 = vpop.f32.mrf.mxu0
        %v2609 = vadd.f32 0.0, %v2608
        %v2610 = vpop.f32.mrf.mxu0
        %v2611 = vpop.f32.mrf.mxu0
        %v2612 = vadd.f32 0.0, %v2611
        %v2613 = vpop.f32.mrf.mxu0
        %2614 = vmatprep.mubr.bf16.mxu0 0
        %2615 = vmatmul.mubr.bf16.gmra.mxu0 %v2469
        %v2616 = vpop.f32.mrf.mxu0
        %v2617 = vadd.f32 0.0, %v2616
        %v2618 = vpop.f32.mrf.mxu0
        %v2619 = vpop.f32.mrf.mxu0
        %v2620 = vadd.f32 0.0, %v2619
        %v2621 = vpop.f32.mrf.mxu0
        %2622 = vmatprep.mubr.bf16.mxu0 0
        %2623 = vmatmul.mubr.bf16.gmra.mxu0 %v2471
        %v2624 = vpop.f32.mrf.mxu0
        %v2625 = vadd.f32 0.0, %v2624
        %v2626 = vpop.f32.mrf.mxu0
        %v2627 = vpop.f32.mrf.mxu0
        %v2628 = vadd.f32 0.0, %v2627
        %v2629 = vpop.f32.mrf.mxu0
        %2630 = vmatprep.mubr.bf16.mxu0 0
        %2631 = vmatmul.mubr.bf16.gmra.mxu0 %v2473
        %v2632 = vpop.f32.mrf.mxu0
        %v2633 = vadd.f32 0.0, %v2632
        %v2634 = vpop.f32.mrf.mxu0
        %v2635 = vpop.f32.mrf.mxu0
        %v2636 = vadd.f32 0.0, %v2635
        %v2637 = vpop.f32.mrf.mxu0
        %2638 = vmatprep.mubr.bf16.mxu0 0
        %2639 = vmatmul.mubr.bf16.gmra.mxu0 %v2475
        %v2640 = vpop.f32.mrf.mxu0
        %v2641 = vadd.f32 0.0, %v2640
        %v2642 = vpop.f32.mrf.mxu0
        %v2643 = vpop.f32.mrf.mxu0
        %v2644 = vadd.f32 0.0, %v2643
        %v2645 = vpop.f32.mrf.mxu0
        %2646 = vmatprep.mubr.bf16.mxu0 0
        %2647 = vmatmul.mubr.bf16.gmra.mxu0 %v2477
        %v2648 = vpop.f32.mrf.mxu0
        %v2649 = vadd.f32 0.0, %v2648
        %v2650 = vpop.f32.mrf.mxu0
        %v2651 = vpop.f32.mrf.mxu0
        %v2652 = vadd.f32 0.0, %v2651
        %v2653 = vpop.f32.mrf.mxu0
        %2654 = vmatprep.mubr.bf16.mxu0 0
        %2655 = vmatmul.mubr.bf16.gmra.mxu0 %v2479
        %v2656 = vpop.f32.mrf.mxu0
        %v2657 = vadd.f32 0.0, %v2656
        %v2658 = vpop.f32.mrf.mxu0
        %v2659 = vpop.f32.mrf.mxu0
        %v2660 = vadd.f32 0.0, %v2659
        %v2661 = vpop.f32.mrf.mxu0
        %2662 = vmatprep.mubr.bf16.mxu0 0
        %2663 = vmatmul.mubr.bf16.gmra.mxu0 %v2481
        %v2664 = vpop.f32.mrf.mxu0
        %v2665 = vadd.f32 0.0, %v2664
        %v2666 = vpop.f32.mrf.mxu0
        %v2667 = vpop.f32.mrf.mxu0
        %v2668 = vadd.f32 0.0, %v2667
        %v2669 = vpop.f32.mrf.mxu0
        %2670 = vdwg.mxu0
        %v2671 = vadd.f32 %v2403, %v2577
        %v2672 = vadd.f32 %v2404, %v2580
        %v2673 = vadd.f32 %v2405, %v2585
        %v2674 = vadd.f32 %v2406, %v2588
        %v2675 = vadd.f32 %v2407, %v2593
        %v2676 = vadd.f32 %v2408, %v2596
        %v2677 = vadd.f32 %v2409, %v2601
        %v2678 = vadd.f32 %v2410, %v2604
        %v2679 = vadd.f32 %v2411, %v2609
        %v2680 = vadd.f32 %v2412, %v2612
        %v2681 = vadd.f32 %v2413, %v2617
        %v2682 = vadd.f32 %v2414, %v2620
        %v2683 = vadd.f32 %v2415, %v2625
        %v2684 = vadd.f32 %v2416, %v2628
        %v2685 = vadd.f32 %v2417, %v2633
        %v2686 = vadd.f32 %v2418, %v2636
        %v2687 = vadd.f32 %v2419, %v2641
        %v2688 = vadd.f32 %v2420, %v2644
        %v2689 = vadd.f32 %v2421, %v2649
        %v2690 = vadd.f32 %v2422, %v2652
        %v2691 = vadd.f32 %v2423, %v2657
        %v2692 = vadd.f32 %v2424, %v2660
        %v2693 = vadd.f32 %v2425, %v2665
        %v2694 = vadd.f32 %v2426, %v2668
        %v2695 = vpack.c.bf16 %v1078, %v1077
        %v2696 = vpack.c.bf16 %v1080, %v1079
        %v2697 = vpack.c.bf16 %v1082, %v1081
        %s2698 = scalar_lea.vmem [#allocation5], 384
        %v2699 = vld [vmem:[%s2698] sm:$0xf]
        %v2700 = vld [vmem:[%s2698 + $0x4] sm:$0xf]
        %v2701 = vld [vmem:[%s2698 + $0x8] sm:$0xf]
        %v2702 = vld [vmem:[%s2698 + $0xc] sm:$0xf]
        %v2703 = vld [vmem:[%s2698 + $0x10] sm:$0xf]
        %v2704 = vld [vmem:[%s2698 + $0x14] sm:$0xf]
        %v2705 = vld [vmem:[%s2698 + $0x18] sm:$0xf]
        %v2706 = vld [vmem:[%s2698 + $0x1c] sm:$0xf]
        %v2707 = vld [vmem:[%s2698 + $0x20] sm:$0xf]
        %v2708 = vld [vmem:[%s2698 + $0x24] sm:$0xf]
        %v2709 = vld [vmem:[%s2698 + $0x28] sm:$0xf]
        %v2710 = vld [vmem:[%s2698 + $0x2c] sm:$0xf]
        %v2711 = vld [vmem:[%s2698 + $0x30] sm:$0xf]
        %v2712 = vld [vmem:[%s2698 + $0x34] sm:$0xf]
        %v2713 = vld [vmem:[%s2698 + $0x38] sm:$0xf]
        %v2714 = vld [vmem:[%s2698 + $0x3c] sm:$0xf]
        %v2731 = vunpack.c.l.b16 %v2699
        %v2732 = vunpack.c.l.b16 %v2700
        %v2733 = vunpack.c.l.b16 %v2701
        %v2734 = vunpack.c.l.b16 %v2702
        %v2735 = vunpack.c.l.b16 %v2703
        %v2736 = vunpack.c.l.b16 %v2704
        %v2737 = vunpack.c.l.b16 %v2705
        %v2738 = vunpack.c.l.b16 %v2706
        %v2739 = vunpack.c.l.b16 %v2707
        %v2740 = vunpack.c.l.b16 %v2708
        %v2741 = vunpack.c.l.b16 %v2709
        %v2742 = vunpack.c.l.b16 %v2710
        %v2743 = vunpack.c.l.b16 %v2711
        %v2744 = vunpack.c.l.b16 %v2712
        %v2745 = vunpack.c.l.b16 %v2713
        %v2746 = vunpack.c.l.b16 %v2714
        %v2747 = vpack.c.b16 %v2732, %v2731
        %v2748 = vpack.c.b16 %v2734, %v2733
        %v2749 = vpack.c.b16 %v2736, %v2735
        %v2750 = vpack.c.b16 %v2738, %v2737
        %v2751 = vpack.c.b16 %v2740, %v2739
        %v2752 = vpack.c.b16 %v2742, %v2741
        %v2753 = vpack.c.b16 %v2744, %v2743
        %v2754 = vpack.c.b16 %v2746, %v2745
        %2763 = vmatprep.subr.bf16.mxu0 0
        %2764 = vmatpush1.bf16.msra.mxu0 %v2754
        %2765 = vmatprep.subr.bf16.mxu0 0
        %2766 = vmatpush1.bf16.msra.mxu0 %v2753
        %2767 = vmatprep.subr.bf16.mxu0 0
        %2768 = vmatpush1.bf16.msra.mxu0 %v2752
        %2769 = vmatprep.subr.bf16.mxu0 0
        %2770 = vmatpush1.bf16.msra.mxu0 %v2751
        %2771 = vmatprep.subr.bf16.mxu0 0
        %2772 = vmatpush1.bf16.msra.mxu0 %v2750
        %2773 = vmatprep.subr.bf16.mxu0 0
        %2774 = vmatpush1.bf16.msra.mxu0 %v2749
        %2775 = vmatprep.subr.bf16.mxu0 0
        %2776 = vmatpush1.bf16.msra.mxu0 %v2748
        %2777 = vmatprep.subr.bf16.mxu0 0
        %2778 = vmatpush1.bf16.msra.mxu0 %v2747
        %2779 = vmatprep.subr.bf16.mxu0 0
        %2780 = vmatpush2.bf16.msra.mxu0 0
        %2781 = vmatprep.subr.bf16.mxu0 0
        %2782 = vmatpush2.bf16.msra.mxu0 0
        %2783 = vmatprep.subr.bf16.mxu0 0
        %2784 = vmatpush2.bf16.msra.mxu0 0
        %2785 = vmatprep.subr.bf16.mxu0 0
        %2786 = vmatpush2.bf16.msra.mxu0 0
        %2787 = vmatprep.subr.bf16.mxu0 0
        %2788 = vmatpush2.bf16.msra.mxu0 0
        %2789 = vmatprep.subr.bf16.mxu0 0
        %2790 = vmatpush2.bf16.msra.mxu0 0
        %2791 = vmatprep.subr.bf16.mxu0 0
        %2792 = vmatpush2.bf16.msra.mxu0 0
        %2793 = vmatprep.subr.bf16.mxu0 0
        %2794 = vmatpush2.bf16.msra.mxu0 0
        %2795 = vmatprep.mubr.bf16.mxu0 0
        %2796 = vmatmul.mubr.bf16.gmra.mxu0 %v1087
        %v2797 = vpop.f32.mrf.mxu0
        %v2798 = vadd.f32 0.0, %v2797
        %v2799 = vpop.f32.mrf.mxu0
        %v2800 = vpop.f32.mrf.mxu0
        %v2801 = vadd.f32 0.0, %v2800
        %v2802 = vpop.f32.mrf.mxu0
        %2803 = vmatprep.mubr.bf16.mxu0 0
        %2804 = vmatmul.mubr.bf16.gmra.mxu0 %v1088
        %v2805 = vpop.f32.mrf.mxu0
        %v2806 = vadd.f32 0.0, %v2805
        %v2807 = vpop.f32.mrf.mxu0
        %v2808 = vpop.f32.mrf.mxu0
        %v2809 = vadd.f32 0.0, %v2808
        %v2810 = vpop.f32.mrf.mxu0
        %2811 = vmatprep.mubr.bf16.mxu0 0
        %2812 = vmatmul.mubr.bf16.gmra.mxu0 %v1089
        %v2813 = vpop.f32.mrf.mxu0
        %v2814 = vadd.f32 0.0, %v2813
        %v2815 = vpop.f32.mrf.mxu0
        %v2816 = vpop.f32.mrf.mxu0
        %v2817 = vadd.f32 0.0, %v2816
        %v2818 = vpop.f32.mrf.mxu0
        %2819 = vmatprep.mubr.bf16.mxu0 0
        %2820 = vmatmul.mubr.bf16.gmra.mxu0 %v1090
        %v2821 = vpop.f32.mrf.mxu0
        %v2822 = vadd.f32 0.0, %v2821
        %v2823 = vpop.f32.mrf.mxu0
        %v2824 = vpop.f32.mrf.mxu0
        %v2825 = vadd.f32 0.0, %v2824
        %v2826 = vpop.f32.mrf.mxu0
        %2827 = vmatprep.mubr.bf16.mxu0 0
        %2828 = vmatmul.mubr.bf16.gmra.mxu0 %v1091
        %v2829 = vpop.f32.mrf.mxu0
        %v2830 = vadd.f32 0.0, %v2829
        %v2831 = vpop.f32.mrf.mxu0
        %v2832 = vpop.f32.mrf.mxu0
        %v2833 = vadd.f32 0.0, %v2832
        %v2834 = vpop.f32.mrf.mxu0
        %2835 = vmatprep.mubr.bf16.mxu0 0
        %2836 = vmatmul.mubr.bf16.gmra.mxu0 %v1092
        %v2837 = vpop.f32.mrf.mxu0
        %v2838 = vadd.f32 0.0, %v2837
        %v2839 = vpop.f32.mrf.mxu0
        %v2840 = vpop.f32.mrf.mxu0
        %v2841 = vadd.f32 0.0, %v2840
        %v2842 = vpop.f32.mrf.mxu0
        %2843 = vmatprep.mubr.bf16.mxu0 0
        %2844 = vmatmul.mubr.bf16.gmra.mxu0 %v1093
        %v2845 = vpop.f32.mrf.mxu0
        %v2846 = vadd.f32 0.0, %v2845
        %v2847 = vpop.f32.mrf.mxu0
        %v2848 = vpop.f32.mrf.mxu0
        %v2849 = vadd.f32 0.0, %v2848
        %v2850 = vpop.f32.mrf.mxu0
        %2851 = vmatprep.mubr.bf16.mxu0 0
        %2852 = vmatmul.mubr.bf16.gmra.mxu0 %v1094
        %v2853 = vpop.f32.mrf.mxu0
        %v2854 = vadd.f32 0.0, %v2853
        %v2855 = vpop.f32.mrf.mxu0
        %v2856 = vpop.f32.mrf.mxu0
        %v2857 = vadd.f32 0.0, %v2856
        %v2858 = vpop.f32.mrf.mxu0
        %2859 = vmatprep.mubr.bf16.mxu0 0
        %2860 = vmatmul.mubr.bf16.gmra.mxu0 %v1095
        %v2861 = vpop.f32.mrf.mxu0
        %v2862 = vadd.f32 0.0, %v2861
        %v2863 = vpop.f32.mrf.mxu0
        %v2864 = vpop.f32.mrf.mxu0
        %v2865 = vadd.f32 0.0, %v2864
        %v2866 = vpop.f32.mrf.mxu0
        %2867 = vmatprep.mubr.bf16.mxu0 0
        %2868 = vmatmul.mubr.bf16.gmra.mxu0 %v2695
        %v2869 = vpop.f32.mrf.mxu0
        %v2870 = vadd.f32 0.0, %v2869
        %v2871 = vpop.f32.mrf.mxu0
        %v2872 = vpop.f32.mrf.mxu0
        %v2873 = vadd.f32 0.0, %v2872
        %v2874 = vpop.f32.mrf.mxu0
        %2875 = vmatprep.mubr.bf16.mxu0 0
        %2876 = vmatmul.mubr.bf16.gmra.mxu0 %v2696
        %v2877 = vpop.f32.mrf.mxu0
        %v2878 = vadd.f32 0.0, %v2877
        %v2879 = vpop.f32.mrf.mxu0
        %v2880 = vpop.f32.mrf.mxu0
        %v2881 = vadd.f32 0.0, %v2880
        %v2882 = vpop.f32.mrf.mxu0
        %2883 = vmatprep.mubr.bf16.mxu0 0
        %2884 = vmatmul.mubr.bf16.gmra.mxu0 %v2697
        %v2885 = vpop.f32.mrf.mxu0
        %v2886 = vadd.f32 0.0, %v2885
        %v2887 = vpop.f32.mrf.mxu0
        %v2888 = vpop.f32.mrf.mxu0
        %v2889 = vadd.f32 0.0, %v2888
        %v2890 = vpop.f32.mrf.mxu0
        %2891 = vdwg.mxu0
        %v2892 = vadd.f32 %v2671, %v2798
        %v2893 = vadd.f32 %v2672, %v2801
        %v2894 = vadd.f32 %v2673, %v2806
        %v2895 = vadd.f32 %v2674, %v2809
        %v2896 = vadd.f32 %v2675, %v2814
        %v2897 = vadd.f32 %v2676, %v2817
        %v2898 = vadd.f32 %v2677, %v2822
        %v2899 = vadd.f32 %v2678, %v2825
        %v2900 = vadd.f32 %v2679, %v2830
        %v2901 = vadd.f32 %v2680, %v2833
        %v2902 = vadd.f32 %v2681, %v2838
        %v2903 = vadd.f32 %v2682, %v2841
        %v2904 = vadd.f32 %v2683, %v2846
        %v2905 = vadd.f32 %v2684, %v2849
        %v2906 = vadd.f32 %v2685, %v2854
        %v2907 = vadd.f32 %v2686, %v2857
        %v2908 = vadd.f32 %v2687, %v2862
        %v2909 = vadd.f32 %v2688, %v2865
        %v2910 = vadd.f32 %v2689, %v2870
        %v2911 = vadd.f32 %v2690, %v2873
        %v2912 = vadd.f32 %v2691, %v2878
        %v2913 = vadd.f32 %v2692, %v2881
        %v2914 = vadd.f32 %v2693, %v2886
        %v2915 = vadd.f32 %v2694, %v2889
        %v2916 = vpack.c.bf16 %v1083, %v1083
        %s2917 = scalar_lea.vmem [#allocation5], 448
        %v2918 = vld [vmem:[%s2917] sm:$0xf]
        %v2919 = vld [vmem:[%s2917 + $0x4] sm:$0xf]
        %v2920 = vld [vmem:[%s2917 + $0x8] sm:$0xf]
        %v2921 = vld [vmem:[%s2917 + $0xc] sm:$0xf]
        %v2922 = vld [vmem:[%s2917 + $0x10] sm:$0xf]
        %v2923 = vld [vmem:[%s2917 + $0x14] sm:$0xf]
        %v2924 = vld [vmem:[%s2917 + $0x18] sm:$0xf]
        %v2925 = vld [vmem:[%s2917 + $0x1c] sm:$0xf]
        %v2926 = vld [vmem:[%s2917 + $0x20] sm:$0xf]
        %v2927 = vld [vmem:[%s2917 + $0x24] sm:$0xf]
        %v2928 = vld [vmem:[%s2917 + $0x28] sm:$0xf]
        %v2929 = vld [vmem:[%s2917 + $0x2c] sm:$0xf]
        %v2930 = vld [vmem:[%s2917 + $0x30] sm:$0xf]
        %v2931 = vld [vmem:[%s2917 + $0x34] sm:$0xf]
        %v2932 = vld [vmem:[%s2917 + $0x38] sm:$0xf]
        %v2933 = vld [vmem:[%s2917 + $0x3c] sm:$0xf]
        %v2935 = vshll.u32 %v2695, 16
        %v2937 = vrot.slane %v2935, 1
        %v2938 = vsel %vm1130, %v1225, %v2937
        %v2939 = vshrl.u32 %v2695, 16
        %v2941 = vor.u32 %v2939, %v2937
        %v2943 = vshll.u32 %v2696, 16
        %v2945 = vrot.slane %v2943, 1
        %v2946 = vsel %vm1130, %v2941, %v2945
        %v2947 = vshrl.u32 %v2696, 16
        %v2949 = vor.u32 %v2947, %v2945
        %v2951 = vshll.u32 %v2697, 16
        %v2953 = vrot.slane %v2951, 1
        %v2954 = vsel %vm1130, %v2949, %v2953
        %v2955 = vshrl.u32 %v2697, 16
        %v2957 = vor.u32 %v2955, %v2953
        %v2959 = vshll.u32 %v2916, 16
        %v2961 = vrot.slane %v2959, 1
        %v2962 = vsel %vm1130, %v2957, %v2961
        %v2983 = vunpack.c.l.b16 %v2918
        %v2984 = vunpack.c.l.b16 %v2919
        %v2985 = vunpack.c.l.b16 %v2920
        %v2986 = vunpack.c.l.b16 %v2921
        %v2987 = vunpack.c.l.b16 %v2922
        %v2988 = vunpack.c.l.b16 %v2923
        %v2989 = vunpack.c.l.b16 %v2924
        %v2990 = vunpack.c.l.b16 %v2925
        %v2991 = vunpack.c.l.b16 %v2926
        %v2992 = vunpack.c.l.b16 %v2927
        %v2993 = vunpack.c.l.b16 %v2928
        %v2994 = vunpack.c.l.b16 %v2929
        %v2995 = vunpack.c.l.b16 %v2930
        %v2996 = vunpack.c.l.b16 %v2931
        %v2997 = vunpack.c.l.b16 %v2932
        %v2998 = vunpack.c.l.b16 %v2933
        %v2999 = vpack.c.b16 %v2984, %v2983
        %v3000 = vpack.c.b16 %v2986, %v2985
        %v3001 = vpack.c.b16 %v2988, %v2987
        %v3002 = vpack.c.b16 %v2990, %v2989
        %v3003 = vpack.c.b16 %v2992, %v2991
        %v3004 = vpack.c.b16 %v2994, %v2993
        %v3005 = vpack.c.b16 %v2996, %v2995
        %v3006 = vpack.c.b16 %v2998, %v2997
        %3015 = vmatprep.subr.bf16.mxu0 0
        %3016 = vmatpush1.bf16.msra.mxu0 %v3006
        %3017 = vmatprep.subr.bf16.mxu0 0
        %3018 = vmatpush1.bf16.msra.mxu0 %v3005
        %3019 = vmatprep.subr.bf16.mxu0 0
        %3020 = vmatpush1.bf16.msra.mxu0 %v3004
        %3021 = vmatprep.subr.bf16.mxu0 0
        %3022 = vmatpush1.bf16.msra.mxu0 %v3003
        %3023 = vmatprep.subr.bf16.mxu0 0
        %3024 = vmatpush1.bf16.msra.mxu0 %v3002
        %3025 = vmatprep.subr.bf16.mxu0 0
        %3026 = vmatpush1.bf16.msra.mxu0 %v3001
        %3027 = vmatprep.subr.bf16.mxu0 0
        %3028 = vmatpush1.bf16.msra.mxu0 %v3000
        %3029 = vmatprep.subr.bf16.mxu0 0
        %3030 = vmatpush1.bf16.msra.mxu0 %v2999
        %3031 = vmatprep.subr.bf16.mxu0 0
        %3032 = vmatpush2.bf16.msra.mxu0 0
        %3033 = vmatprep.subr.bf16.mxu0 0
        %3034 = vmatpush2.bf16.msra.mxu0 0
        %3035 = vmatprep.subr.bf16.mxu0 0
        %3036 = vmatpush2.bf16.msra.mxu0 0
        %3037 = vmatprep.subr.bf16.mxu0 0
        %3038 = vmatpush2.bf16.msra.mxu0 0
        %3039 = vmatprep.subr.bf16.mxu0 0
        %3040 = vmatpush2.bf16.msra.mxu0 0
        %3041 = vmatprep.subr.bf16.mxu0 0
        %3042 = vmatpush2.bf16.msra.mxu0 0
        %3043 = vmatprep.subr.bf16.mxu0 0
        %3044 = vmatpush2.bf16.msra.mxu0 0
        %3045 = vmatprep.subr.bf16.mxu0 0
        %3046 = vmatpush2.bf16.msra.mxu0 0
        %3047 = vmatprep.mubr.bf16.mxu0 0
        %3048 = vmatmul.mubr.bf16.gmra.mxu0 %v1166
        %v3049 = vpop.f32.mrf.mxu0
        %v3050 = vadd.f32 0.0, %v3049
        %v3051 = vpop.f32.mrf.mxu0
        %v3052 = vpop.f32.mrf.mxu0
        %v3053 = vadd.f32 0.0, %v3052
        %v3054 = vpop.f32.mrf.mxu0
        %3055 = vmatprep.mubr.bf16.mxu0 0
        %3056 = vmatmul.mubr.bf16.gmra.mxu0 %v1174
        %v3057 = vpop.f32.mrf.mxu0
        %v3058 = vadd.f32 0.0, %v3057
        %v3059 = vpop.f32.mrf.mxu0
        %v3060 = vpop.f32.mrf.mxu0
        %v3061 = vadd.f32 0.0, %v3060
        %v3062 = vpop.f32.mrf.mxu0
        %3063 = vmatprep.mubr.bf16.mxu0 0
        %3064 = vmatmul.mubr.bf16.gmra.mxu0 %v1182
        %v3065 = vpop.f32.mrf.mxu0
        %v3066 = vadd.f32 0.0, %v3065
        %v3067 = vpop.f32.mrf.mxu0
        %v3068 = vpop.f32.mrf.mxu0
        %v3069 = vadd.f32 0.0, %v3068
        %v3070 = vpop.f32.mrf.mxu0
        %3071 = vmatprep.mubr.bf16.mxu0 0
        %3072 = vmatmul.mubr.bf16.gmra.mxu0 %v1190
        %v3073 = vpop.f32.mrf.mxu0
        %v3074 = vadd.f32 0.0, %v3073
        %v3075 = vpop.f32.mrf.mxu0
        %v3076 = vpop.f32.mrf.mxu0
        %v3077 = vadd.f32 0.0, %v3076
        %v3078 = vpop.f32.mrf.mxu0
        %3079 = vmatprep.mubr.bf16.mxu0 0
        %3080 = vmatmul.mubr.bf16.gmra.mxu0 %v1198
        %v3081 = vpop.f32.mrf.mxu0
        %v3082 = vadd.f32 0.0, %v3081
        %v3083 = vpop.f32.mrf.mxu0
        %v3084 = vpop.f32.mrf.mxu0
        %v3085 = vadd.f32 0.0, %v3084
        %v3086 = vpop.f32.mrf.mxu0
        %3087 = vmatprep.mubr.bf16.mxu0 0
        %3088 = vmatmul.mubr.bf16.gmra.mxu0 %v1206
        %v3089 = vpop.f32.mrf.mxu0
        %v3090 = vadd.f32 0.0, %v3089
        %v3091 = vpop.f32.mrf.mxu0
        %v3092 = vpop.f32.mrf.mxu0
        %v3093 = vadd.f32 0.0, %v3092
        %v3094 = vpop.f32.mrf.mxu0
        %3095 = vmatprep.mubr.bf16.mxu0 0
        %3096 = vmatmul.mubr.bf16.gmra.mxu0 %v1214
        %v3097 = vpop.f32.mrf.mxu0
        %v3098 = vadd.f32 0.0, %v3097
        %v3099 = vpop.f32.mrf.mxu0
        %v3100 = vpop.f32.mrf.mxu0
        %v3101 = vadd.f32 0.0, %v3100
        %v3102 = vpop.f32.mrf.mxu0
        %3103 = vmatprep.mubr.bf16.mxu0 0
        %3104 = vmatmul.mubr.bf16.gmra.mxu0 %v1222
        %v3105 = vpop.f32.mrf.mxu0
        %v3106 = vadd.f32 0.0, %v3105
        %v3107 = vpop.f32.mrf.mxu0
        %v3108 = vpop.f32.mrf.mxu0
        %v3109 = vadd.f32 0.0, %v3108
        %v3110 = vpop.f32.mrf.mxu0
        %3111 = vmatprep.mubr.bf16.mxu0 0
        %3112 = vmatmul.mubr.bf16.gmra.mxu0 %v2938
        %v3113 = vpop.f32.mrf.mxu0
        %v3114 = vadd.f32 0.0, %v3113
        %v3115 = vpop.f32.mrf.mxu0
        %v3116 = vpop.f32.mrf.mxu0
        %v3117 = vadd.f32 0.0, %v3116
        %v3118 = vpop.f32.mrf.mxu0
        %3119 = vmatprep.mubr.bf16.mxu0 0
        %3120 = vmatmul.mubr.bf16.gmra.mxu0 %v2946
        %v3121 = vpop.f32.mrf.mxu0
        %v3122 = vadd.f32 0.0, %v3121
        %v3123 = vpop.f32.mrf.mxu0
        %v3124 = vpop.f32.mrf.mxu0
        %v3125 = vadd.f32 0.0, %v3124
        %v3126 = vpop.f32.mrf.mxu0
        %3127 = vmatprep.mubr.bf16.mxu0 0
        %3128 = vmatmul.mubr.bf16.gmra.mxu0 %v2954
        %v3129 = vpop.f32.mrf.mxu0
        %v3130 = vadd.f32 0.0, %v3129
        %v3131 = vpop.f32.mrf.mxu0
        %v3132 = vpop.f32.mrf.mxu0
        %v3133 = vadd.f32 0.0, %v3132
        %v3134 = vpop.f32.mrf.mxu0
        %3135 = vmatprep.mubr.bf16.mxu0 0
        %3136 = vmatmul.mubr.bf16.gmra.mxu0 %v2962
        %v3137 = vpop.f32.mrf.mxu0
        %v3138 = vadd.f32 0.0, %v3137
        %v3139 = vpop.f32.mrf.mxu0
        %v3140 = vpop.f32.mrf.mxu0
        %v3141 = vadd.f32 0.0, %v3140
        %v3142 = vpop.f32.mrf.mxu0
        %3143 = vdwg.mxu0
        %v3144 = vadd.f32 %v2892, %v3050
        %v3145 = vadd.f32 %v2893, %v3053
        %v3146 = vadd.f32 %v2894, %v3058
        %v3147 = vadd.f32 %v2895, %v3061
        %v3148 = vadd.f32 %v2896, %v3066
        %v3149 = vadd.f32 %v2897, %v3069
        %v3150 = vadd.f32 %v2898, %v3074
        %v3151 = vadd.f32 %v2899, %v3077
        %v3152 = vadd.f32 %v2900, %v3082
        %v3153 = vadd.f32 %v2901, %v3085
        %v3154 = vadd.f32 %v2902, %v3090
        %v3155 = vadd.f32 %v2903, %v3093
        %v3156 = vadd.f32 %v2904, %v3098
        %v3157 = vadd.f32 %v2905, %v3101
        %v3158 = vadd.f32 %v2906, %v3106
        %v3159 = vadd.f32 %v2907, %v3109
        %v3160 = vadd.f32 %v2908, %v3114
        %v3161 = vadd.f32 %v2909, %v3117
        %v3162 = vadd.f32 %v2910, %v3122
        %v3163 = vadd.f32 %v2911, %v3125
        %v3164 = vadd.f32 %v2912, %v3130
        %v3165 = vadd.f32 %v2913, %v3133
        %v3166 = vadd.f32 %v2914, %v3138
        %v3167 = vadd.f32 %v2915, %v3141
        %s3168 = scalar_lea.vmem [#allocation5], 512
        %v3169 = vld [vmem:[%s3168] sm:$0xf]
        %v3170 = vld [vmem:[%s3168 + $0x4] sm:$0xf]
        %v3171 = vld [vmem:[%s3168 + $0x8] sm:$0xf]
        %v3172 = vld [vmem:[%s3168 + $0xc] sm:$0xf]
        %v3173 = vld [vmem:[%s3168 + $0x10] sm:$0xf]
        %v3174 = vld [vmem:[%s3168 + $0x14] sm:$0xf]
        %v3175 = vld [vmem:[%s3168 + $0x18] sm:$0xf]
        %v3176 = vld [vmem:[%s3168 + $0x1c] sm:$0xf]
        %v3177 = vld [vmem:[%s3168 + $0x20] sm:$0xf]
        %v3178 = vld [vmem:[%s3168 + $0x24] sm:$0xf]
        %v3179 = vld [vmem:[%s3168 + $0x28] sm:$0xf]
        %v3180 = vld [vmem:[%s3168 + $0x2c] sm:$0xf]
        %v3181 = vld [vmem:[%s3168 + $0x30] sm:$0xf]
        %v3182 = vld [vmem:[%s3168 + $0x34] sm:$0xf]
        %v3183 = vld [vmem:[%s3168 + $0x38] sm:$0xf]
        %v3184 = vld [vmem:[%s3168 + $0x3c] sm:$0xf]
        %v3189 = vrot.slane %v2695, 1
        %v3190 = vsel %vm1627, %v1649, %v3189
        %v3191 = vrot.slane %v2696, 1
        %v3192 = vsel %vm1627, %v3189, %v3191
        %v3193 = vrot.slane %v2697, 1
        %v3194 = vsel %vm1627, %v3191, %v3193
        %v3195 = vrot.slane %v2916, 1
        %v3196 = vsel %vm1627, %v3193, %v3195
        %v3217 = vunpack.c.l.b16 %v3169
        %v3218 = vunpack.c.l.b16 %v3170
        %v3219 = vunpack.c.l.b16 %v3171
        %v3220 = vunpack.c.l.b16 %v3172
        %v3221 = vunpack.c.l.b16 %v3173
        %v3222 = vunpack.c.l.b16 %v3174
        %v3223 = vunpack.c.l.b16 %v3175
        %v3224 = vunpack.c.l.b16 %v3176
        %v3225 = vunpack.c.l.b16 %v3177
        %v3226 = vunpack.c.l.b16 %v3178
        %v3227 = vunpack.c.l.b16 %v3179
        %v3228 = vunpack.c.l.b16 %v3180
        %v3229 = vunpack.c.l.b16 %v3181
        %v3230 = vunpack.c.l.b16 %v3182
        %v3231 = vunpack.c.l.b16 %v3183
        %v3232 = vunpack.c.l.b16 %v3184
        %v3233 = vpack.c.b16 %v3218, %v3217
        %v3234 = vpack.c.b16 %v3220, %v3219
        %v3235 = vpack.c.b16 %v3222, %v3221
        %v3236 = vpack.c.b16 %v3224, %v3223
        %v3237 = vpack.c.b16 %v3226, %v3225
        %v3238 = vpack.c.b16 %v3228, %v3227
        %v3239 = vpack.c.b16 %v3230, %v3229
        %v3240 = vpack.c.b16 %v3232, %v3231
        %3249 = vmatprep.subr.bf16.mxu0 0
        %3250 = vmatpush1.bf16.msra.mxu0 %v3240
        %3251 = vmatprep.subr.bf16.mxu0 0
        %3252 = vmatpush1.bf16.msra.mxu0 %v3239
        %3253 = vmatprep.subr.bf16.mxu0 0
        %3254 = vmatpush1.bf16.msra.mxu0 %v3238
        %3255 = vmatprep.subr.bf16.mxu0 0
        %3256 = vmatpush1.bf16.msra.mxu0 %v3237
        %3257 = vmatprep.subr.bf16.mxu0 0
        %3258 = vmatpush1.bf16.msra.mxu0 %v3236
        %3259 = vmatprep.subr.bf16.mxu0 0
        %3260 = vmatpush1.bf16.msra.mxu0 %v3235
        %3261 = vmatprep.subr.bf16.mxu0 0
        %3262 = vmatpush1.bf16.msra.mxu0 %v3234
        %3263 = vmatprep.subr.bf16.mxu0 0
        %3264 = vmatpush1.bf16.msra.mxu0 %v3233
        %3265 = vmatprep.subr.bf16.mxu0 0
        %3266 = vmatpush2.bf16.msra.mxu0 0
        %3267 = vmatprep.subr.bf16.mxu0 0
        %3268 = vmatpush2.bf16.msra.mxu0 0
        %3269 = vmatprep.subr.bf16.mxu0 0
        %3270 = vmatpush2.bf16.msra.mxu0 0
        %3271 = vmatprep.subr.bf16.mxu0 0
        %3272 = vmatpush2.bf16.msra.mxu0 0
        %3273 = vmatprep.subr.bf16.mxu0 0
        %3274 = vmatpush2.bf16.msra.mxu0 0
        %3275 = vmatprep.subr.bf16.mxu0 0
        %3276 = vmatpush2.bf16.msra.mxu0 0
        %3277 = vmatprep.subr.bf16.mxu0 0
        %3278 = vmatpush2.bf16.msra.mxu0 0
        %3279 = vmatprep.subr.bf16.mxu0 0
        %3280 = vmatpush2.bf16.msra.mxu0 0
        %3281 = vmatprep.mubr.bf16.mxu0 0
        %3282 = vmatmul.mubr.bf16.gmra.mxu0 %v1636
        %v3283 = vpop.f32.mrf.mxu0
        %v3284 = vadd.f32 0.0, %v3283
        %v3285 = vpop.f32.mrf.mxu0
        %v3286 = vpop.f32.mrf.mxu0
        %v3287 = vadd.f32 0.0, %v3286
        %v3288 = vpop.f32.mrf.mxu0
        %3289 = vmatprep.mubr.bf16.mxu0 0
        %3290 = vmatmul.mubr.bf16.gmra.mxu0 %v1638
        %v3291 = vpop.f32.mrf.mxu0
        %v3292 = vadd.f32 0.0, %v3291
        %v3293 = vpop.f32.mrf.mxu0
        %v3294 = vpop.f32.mrf.mxu0
        %v3295 = vadd.f32 0.0, %v3294
        %v3296 = vpop.f32.mrf.mxu0
        %3297 = vmatprep.mubr.bf16.mxu0 0
        %3298 = vmatmul.mubr.bf16.gmra.mxu0 %v1640
        %v3299 = vpop.f32.mrf.mxu0
        %v3300 = vadd.f32 0.0, %v3299
        %v3301 = vpop.f32.mrf.mxu0
        %v3302 = vpop.f32.mrf.mxu0
        %v3303 = vadd.f32 0.0, %v3302
        %v3304 = vpop.f32.mrf.mxu0
        %3305 = vmatprep.mubr.bf16.mxu0 0
        %3306 = vmatmul.mubr.bf16.gmra.mxu0 %v1642
        %v3307 = vpop.f32.mrf.mxu0
        %v3308 = vadd.f32 0.0, %v3307
        %v3309 = vpop.f32.mrf.mxu0
        %v3310 = vpop.f32.mrf.mxu0
        %v3311 = vadd.f32 0.0, %v3310
        %v3312 = vpop.f32.mrf.mxu0
        %3313 = vmatprep.mubr.bf16.mxu0 0
        %3314 = vmatmul.mubr.bf16.gmra.mxu0 %v1644
        %v3315 = vpop.f32.mrf.mxu0
        %v3316 = vadd.f32 0.0, %v3315
        %v3317 = vpop.f32.mrf.mxu0
        %v3318 = vpop.f32.mrf.mxu0
        %v3319 = vadd.f32 0.0, %v3318
        %v3320 = vpop.f32.mrf.mxu0
        %3321 = vmatprep.mubr.bf16.mxu0 0
        %3322 = vmatmul.mubr.bf16.gmra.mxu0 %v1646
        %v3323 = vpop.f32.mrf.mxu0
        %v3324 = vadd.f32 0.0, %v3323
        %v3325 = vpop.f32.mrf.mxu0
        %v3326 = vpop.f32.mrf.mxu0
        %v3327 = vadd.f32 0.0, %v3326
        %v3328 = vpop.f32.mrf.mxu0
        %3329 = vmatprep.mubr.bf16.mxu0 0
        %3330 = vmatmul.mubr.bf16.gmra.mxu0 %v1648
        %v3331 = vpop.f32.mrf.mxu0
        %v3332 = vadd.f32 0.0, %v3331
        %v3333 = vpop.f32.mrf.mxu0
        %v3334 = vpop.f32.mrf.mxu0
        %v3335 = vadd.f32 0.0, %v3334
        %v3336 = vpop.f32.mrf.mxu0
        %3337 = vmatprep.mubr.bf16.mxu0 0
        %3338 = vmatmul.mubr.bf16.gmra.mxu0 %v1650
        %v3339 = vpop.f32.mrf.mxu0
        %v3340 = vadd.f32 0.0, %v3339
        %v3341 = vpop.f32.mrf.mxu0
        %v3342 = vpop.f32.mrf.mxu0
        %v3343 = vadd.f32 0.0, %v3342
        %v3344 = vpop.f32.mrf.mxu0
        %3345 = vmatprep.mubr.bf16.mxu0 0
        %3346 = vmatmul.mubr.bf16.gmra.mxu0 %v3190
        %v3347 = vpop.f32.mrf.mxu0
        %v3348 = vadd.f32 0.0, %v3347
        %v3349 = vpop.f32.mrf.mxu0
        %v3350 = vpop.f32.mrf.mxu0
        %v3351 = vadd.f32 0.0, %v3350
        %v3352 = vpop.f32.mrf.mxu0
        %3353 = vmatprep.mubr.bf16.mxu0 0
        %3354 = vmatmul.mubr.bf16.gmra.mxu0 %v3192
        %v3355 = vpop.f32.mrf.mxu0
        %v3356 = vadd.f32 0.0, %v3355
        %v3357 = vpop.f32.mrf.mxu0
        %v3358 = vpop.f32.mrf.mxu0
        %v3359 = vadd.f32 0.0, %v3358
        %v3360 = vpop.f32.mrf.mxu0
        %3361 = vmatprep.mubr.bf16.mxu0 0
        %3362 = vmatmul.mubr.bf16.gmra.mxu0 %v3194
        %v3363 = vpop.f32.mrf.mxu0
        %v3364 = vadd.f32 0.0, %v3363
        %v3365 = vpop.f32.mrf.mxu0
        %v3366 = vpop.f32.mrf.mxu0
        %v3367 = vadd.f32 0.0, %v3366
        %v3368 = vpop.f32.mrf.mxu0
        %3369 = vmatprep.mubr.bf16.mxu0 0
        %3370 = vmatmul.mubr.bf16.gmra.mxu0 %v3196
        %v3371 = vpop.f32.mrf.mxu0
        %v3372 = vadd.f32 0.0, %v3371
        %v3373 = vpop.f32.mrf.mxu0
        %v3374 = vpop.f32.mrf.mxu0
        %v3375 = vadd.f32 0.0, %v3374
        %v3376 = vpop.f32.mrf.mxu0
        %3377 = vdwg.mxu0
        %v3378 = vadd.f32 %v3144, %v3284
        %v3379 = vadd.f32 %v3145, %v3287
        %v3380 = vadd.f32 %v3146, %v3292
        %v3381 = vadd.f32 %v3147, %v3295
        %v3382 = vadd.f32 %v3148, %v3300
        %v3383 = vadd.f32 %v3149, %v3303
        %v3384 = vadd.f32 %v3150, %v3308
        %v3385 = vadd.f32 %v3151, %v3311
        %v3386 = vadd.f32 %v3152, %v3316
        %v3387 = vadd.f32 %v3153, %v3319
        %v3388 = vadd.f32 %v3154, %v3324
        %v3389 = vadd.f32 %v3155, %v3327
        %v3390 = vadd.f32 %v3156, %v3332
        %v3391 = vadd.f32 %v3157, %v3335
        %v3392 = vadd.f32 %v3158, %v3340
        %v3393 = vadd.f32 %v3159, %v3343
        %v3394 = vadd.f32 %v3160, %v3348
        %v3395 = vadd.f32 %v3161, %v3351
        %v3396 = vadd.f32 %v3162, %v3356
        %v3397 = vadd.f32 %v3163, %v3359
        %v3398 = vadd.f32 %v3164, %v3364
        %v3399 = vadd.f32 %v3165, %v3367
        %v3400 = vadd.f32 %v3166, %v3372
        %v3401 = vadd.f32 %v3167, %v3375
        %v3402 = vld [vmem:[%s5] sm:$0x1]
        %v3404 = vlaneseq
        %v3405 = vshrl.u32 %v3404, 7
        %v3406 = vsub.s32 0, %v3405
        %v3407 = vrot.slane %v3402, %v3406
        %v3409 = vadd.f32 %v3378, %v3407
        %v3410 = vadd.f32 %v3379, %v3407
        %v3411 = vadd.f32 %v3380, %v3407
        %v3412 = vadd.f32 %v3381, %v3407
        %v3413 = vadd.f32 %v3382, %v3407
        %v3414 = vadd.f32 %v3383, %v3407
        %v3415 = vadd.f32 %v3384, %v3407
        %v3416 = vadd.f32 %v3385, %v3407
        %v3417 = vadd.f32 %v3386, %v3407
        %v3418 = vadd.f32 %v3387, %v3407
        %v3419 = vadd.f32 %v3388, %v3407
        %v3420 = vadd.f32 %v3389, %v3407
        %v3421 = vadd.f32 %v3390, %v3407
        %v3422 = vadd.f32 %v3391, %v3407
        %v3423 = vadd.f32 %v3392, %v3407
        %v3424 = vadd.f32 %v3393, %v3407
        %v3425 = vadd.f32 %v3394, %v3407
        %v3426 = vadd.f32 %v3395, %v3407
        %v3427 = vadd.f32 %v3396, %v3407
        %v3428 = vadd.f32 %v3397, %v3407
        %v3429 = vadd.f32 %v3398, %v3407
        %v3430 = vadd.f32 %v3399, %v3407
        %v3431 = vadd.f32 %v3400, %v3407
        %v3432 = vadd.f32 %v3401, %v3407
        %v3433 = vmax.f32 %v3409, 0.0
        %v3434 = vmax.f32 %v3410, 0.0
        %v3435 = vmax.f32 %v3411, 0.0
        %v3436 = vmax.f32 %v3412, 0.0
        %v3437 = vmax.f32 %v3413, 0.0
        %v3438 = vmax.f32 %v3414, 0.0
        %v3439 = vmax.f32 %v3415, 0.0
        %v3440 = vmax.f32 %v3416, 0.0
        %v3441 = vmax.f32 %v3417, 0.0
        %v3442 = vmax.f32 %v3418, 0.0
        %v3443 = vmax.f32 %v3419, 0.0
        %v3444 = vmax.f32 %v3420, 0.0
        %v3445 = vmax.f32 %v3421, 0.0
        %v3446 = vmax.f32 %v3422, 0.0
        %v3447 = vmax.f32 %v3423, 0.0
        %v3448 = vmax.f32 %v3424, 0.0
        %v3449 = vmax.f32 %v3425, 0.0
        %v3450 = vmax.f32 %v3426, 0.0
        %v3451 = vmax.f32 %v3427, 0.0
        %v3452 = vmax.f32 %v3428, 0.0
        %v3453 = vmax.f32 %v3429, 0.0
        %v3454 = vmax.f32 %v3430, 0.0
        %v3455 = vmax.f32 %v3431, 0.0
        %v3456 = vmax.f32 %v3432, 0.0
        %v3457 = vpack.c.bf16 %v3434, %v3433
        %v3458 = vpack.c.bf16 %v3436, %v3435
        %v3459 = vpack.c.bf16 %v3438, %v3437
        %v3460 = vpack.c.bf16 %v3440, %v3439
        %v3461 = vpack.c.bf16 %v3442, %v3441
        %v3462 = vpack.c.bf16 %v3444, %v3443
        %v3463 = vpack.c.bf16 %v3446, %v3445
        %v3464 = vpack.c.bf16 %v3448, %v3447
        %v3465 = vpack.c.bf16 %v3450, %v3449
        %v3466 = vpack.c.bf16 %v3452, %v3451
        %v3467 = vpack.c.bf16 %v3454, %v3453
        %v3468 = vpack.c.bf16 %v3456, %v3455
        %v3469 = vld [vmem:[#allocation7] sm:$0xf]
        %v3470 = vld [vmem:[#allocation7 + $0x4] sm:$0xf]
        %v3471 = vld [vmem:[#allocation7 + $0x8] sm:$0xf]
        %v3472 = vld [vmem:[#allocation7 + $0xc] sm:$0xf]
        %v3473 = vld [vmem:[#allocation7 + $0x10] sm:$0xf]
        %v3474 = vld [vmem:[#allocation7 + $0x14] sm:$0xf]
        %v3475 = vld [vmem:[#allocation7 + $0x18] sm:$0xf]
        %v3476 = vld [vmem:[#allocation7 + $0x1c] sm:$0xf]
        %v3477 = vld [vmem:[#allocation7 + $0x20] sm:$0xf]
        %v3478 = vld [vmem:[#allocation7 + $0x24] sm:$0xf]
        %v3479 = vld [vmem:[#allocation7 + $0x28] sm:$0xf]
        %v3480 = vld [vmem:[#allocation7 + $0x2c] sm:$0xf]
        %v3481 = vld [vmem:[#allocation7 + $0x30] sm:$0xf]
        %v3482 = vld [vmem:[#allocation7 + $0x34] sm:$0xf]
        %v3483 = vld [vmem:[#allocation7 + $0x38] sm:$0xf]
        %v3484 = vld [vmem:[#allocation7 + $0x3c] sm:$0xf]
        %v3485 = vld [vmem:[%s7] sm:$0x1]
        %v3487 = vlaneseq
        %v3488 = vshrl.u32 %v3487, 7
        %v3489 = vsub.s32 0, %v3488
        %v3490 = vrot.slane %v3485, %v3489
        %v3508 = vunpack.c.l.b16 %v3469
        %v3509 = vunpack.c.l.b16 %v3470
        %v3510 = vunpack.c.l.b16 %v3471
        %v3511 = vunpack.c.l.b16 %v3472
        %v3512 = vunpack.c.l.b16 %v3473
        %v3513 = vunpack.c.l.b16 %v3474
        %v3514 = vunpack.c.l.b16 %v3475
        %v3515 = vunpack.c.l.b16 %v3476
        %v3516 = vunpack.c.l.b16 %v3477
        %v3517 = vunpack.c.l.b16 %v3478
        %v3518 = vunpack.c.l.b16 %v3479
        %v3519 = vunpack.c.l.b16 %v3480
        %v3520 = vunpack.c.l.b16 %v3481
        %v3521 = vunpack.c.l.b16 %v3482
        %v3522 = vunpack.c.l.b16 %v3483
        %v3523 = vunpack.c.l.b16 %v3484
        %v3524 = vpack.c.b16 %v3509, %v3508
        %v3525 = vpack.c.b16 %v3511, %v3510
        %v3526 = vpack.c.b16 %v3513, %v3512
        %v3527 = vpack.c.b16 %v3515, %v3514
        %v3528 = vpack.c.b16 %v3517, %v3516
        %v3529 = vpack.c.b16 %v3519, %v3518
        %v3530 = vpack.c.b16 %v3521, %v3520
        %v3531 = vpack.c.b16 %v3523, %v3522
        %3540 = vmatprep.subr.bf16.mxu0 0
        %3541 = vmatpush1.bf16.msra.mxu0 %v3531
        %3542 = vmatprep.subr.bf16.mxu0 0
        %3543 = vmatpush1.bf16.msra.mxu0 %v3530
        %3544 = vmatprep.subr.bf16.mxu0 0
        %3545 = vmatpush1.bf16.msra.mxu0 %v3529
        %3546 = vmatprep.subr.bf16.mxu0 0
        %3547 = vmatpush1.bf16.msra.mxu0 %v3528
        %3548 = vmatprep.subr.bf16.mxu0 0
        %3549 = vmatpush1.bf16.msra.mxu0 %v3527
        %3550 = vmatprep.subr.bf16.mxu0 0
        %3551 = vmatpush1.bf16.msra.mxu0 %v3526
        %3552 = vmatprep.subr.bf16.mxu0 0
        %3553 = vmatpush1.bf16.msra.mxu0 %v3525
        %3554 = vmatprep.subr.bf16.mxu0 0
        %3555 = vmatpush1.bf16.msra.mxu0 %v3524
        %3556 = vmatprep.subr.bf16.mxu0 0
        %3557 = vmatpush2.bf16.msra.mxu0 0
        %3558 = vmatprep.subr.bf16.mxu0 0
        %3559 = vmatpush2.bf16.msra.mxu0 0
        %3560 = vmatprep.subr.bf16.mxu0 0
        %3561 = vmatpush2.bf16.msra.mxu0 0
        %3562 = vmatprep.subr.bf16.mxu0 0
        %3563 = vmatpush2.bf16.msra.mxu0 0
        %3564 = vmatprep.subr.bf16.mxu0 0
        %3565 = vmatpush2.bf16.msra.mxu0 0
        %3566 = vmatprep.subr.bf16.mxu0 0
        %3567 = vmatpush2.bf16.msra.mxu0 0
        %3568 = vmatprep.subr.bf16.mxu0 0
        %3569 = vmatpush2.bf16.msra.mxu0 0
        %3570 = vmatprep.subr.bf16.mxu0 0
        %3571 = vmatpush2.bf16.msra.mxu0 0
        %3572 = vmatprep.mubr.bf16.mxu0 0
        %3573 = vmatmul.mubr.bf16.gmra.mxu0 %v3457
        %v3574 = vpop.f32.mrf.mxu0
        %v3575 = vadd.f32 %v3490, %v3574
        %v3576 = vpop.f32.mrf.mxu0
        %v3577 = vpop.f32.mrf.mxu0
        %v3578 = vadd.f32 %v3490, %v3577
        %v3579 = vpop.f32.mrf.mxu0
        %3580 = vmatprep.mubr.bf16.mxu0 0
        %3581 = vmatmul.mubr.bf16.gmra.mxu0 %v3458
        %v3582 = vpop.f32.mrf.mxu0
        %v3583 = vadd.f32 %v3490, %v3582
        %v3584 = vpop.f32.mrf.mxu0
        %v3585 = vpop.f32.mrf.mxu0
        %v3586 = vadd.f32 %v3490, %v3585
        %v3587 = vpop.f32.mrf.mxu0
        %3588 = vmatprep.mubr.bf16.mxu0 0
        %3589 = vmatmul.mubr.bf16.gmra.mxu0 %v3459
        %v3590 = vpop.f32.mrf.mxu0
        %v3591 = vadd.f32 %v3490, %v3590
        %v3592 = vpop.f32.mrf.mxu0
        %v3593 = vpop.f32.mrf.mxu0
        %v3594 = vadd.f32 %v3490, %v3593
        %v3595 = vpop.f32.mrf.mxu0
        %3596 = vmatprep.mubr.bf16.mxu0 0
        %3597 = vmatmul.mubr.bf16.gmra.mxu0 %v3460
        %v3598 = vpop.f32.mrf.mxu0
        %v3599 = vadd.f32 %v3490, %v3598
        %v3600 = vpop.f32.mrf.mxu0
        %v3601 = vpop.f32.mrf.mxu0
        %v3602 = vadd.f32 %v3490, %v3601
        %v3603 = vpop.f32.mrf.mxu0
        %3604 = vmatprep.mubr.bf16.mxu0 0
        %3605 = vmatmul.mubr.bf16.gmra.mxu0 %v3461
        %v3606 = vpop.f32.mrf.mxu0
        %v3607 = vadd.f32 %v3490, %v3606
        %v3608 = vpop.f32.mrf.mxu0
        %v3609 = vpop.f32.mrf.mxu0
        %v3610 = vadd.f32 %v3490, %v3609
        %v3611 = vpop.f32.mrf.mxu0
        %3612 = vmatprep.mubr.bf16.mxu0 0
        %3613 = vmatmul.mubr.bf16.gmra.mxu0 %v3462
        %v3614 = vpop.f32.mrf.mxu0
        %v3615 = vadd.f32 %v3490, %v3614
        %v3616 = vpop.f32.mrf.mxu0
        %v3617 = vpop.f32.mrf.mxu0
        %v3618 = vadd.f32 %v3490, %v3617
        %v3619 = vpop.f32.mrf.mxu0
        %3620 = vmatprep.mubr.bf16.mxu0 0
        %3621 = vmatmul.mubr.bf16.gmra.mxu0 %v3463
        %v3622 = vpop.f32.mrf.mxu0
        %v3623 = vadd.f32 %v3490, %v3622
        %v3624 = vpop.f32.mrf.mxu0
        %v3625 = vpop.f32.mrf.mxu0
        %v3626 = vadd.f32 %v3490, %v3625
        %v3627 = vpop.f32.mrf.mxu0
        %3628 = vmatprep.mubr.bf16.mxu0 0
        %3629 = vmatmul.mubr.bf16.gmra.mxu0 %v3464
        %v3630 = vpop.f32.mrf.mxu0
        %v3631 = vadd.f32 %v3490, %v3630
        %v3632 = vpop.f32.mrf.mxu0
        %v3633 = vpop.f32.mrf.mxu0
        %v3634 = vadd.f32 %v3490, %v3633
        %v3635 = vpop.f32.mrf.mxu0
        %3636 = vmatprep.mubr.bf16.mxu0 0
        %3637 = vmatmul.mubr.bf16.gmra.mxu0 %v3465
        %v3638 = vpop.f32.mrf.mxu0
        %v3639 = vadd.f32 %v3490, %v3638
        %v3640 = vpop.f32.mrf.mxu0
        %v3641 = vpop.f32.mrf.mxu0
        %v3642 = vadd.f32 %v3490, %v3641
        %v3643 = vpop.f32.mrf.mxu0
        %3644 = vmatprep.mubr.bf16.mxu0 0
        %3645 = vmatmul.mubr.bf16.gmra.mxu0 %v3466
        %v3646 = vpop.f32.mrf.mxu0
        %v3647 = vadd.f32 %v3490, %v3646
        %v3648 = vpop.f32.mrf.mxu0
        %v3649 = vpop.f32.mrf.mxu0
        %v3650 = vadd.f32 %v3490, %v3649
        %v3651 = vpop.f32.mrf.mxu0
        %3652 = vmatprep.mubr.bf16.mxu0 0
        %3653 = vmatmul.mubr.bf16.gmra.mxu0 %v3467
        %v3654 = vpop.f32.mrf.mxu0
        %v3655 = vadd.f32 %v3490, %v3654
        %v3656 = vpop.f32.mrf.mxu0
        %v3657 = vpop.f32.mrf.mxu0
        %v3658 = vadd.f32 %v3490, %v3657
        %v3659 = vpop.f32.mrf.mxu0
        %3660 = vmatprep.mubr.bf16.mxu0 0
        %3661 = vmatmul.mubr.bf16.gmra.mxu0 %v3468
        %v3662 = vpop.f32.mrf.mxu0
        %v3663 = vadd.f32 %v3490, %v3662
        %v3664 = vpop.f32.mrf.mxu0
        %v3665 = vpop.f32.mrf.mxu0
        %v3666 = vadd.f32 %v3490, %v3665
        %v3667 = vpop.f32.mrf.mxu0
        %3668 = vdwg.mxu0
        %v3669 = vld [vmem:[#allocation8] sm:$0xf]
        %v3670 = vld [vmem:[#allocation8 + $0x4] sm:$0xf]
        %v3671 = vld [vmem:[#allocation8 + $0x8] sm:$0xf]
        %v3672 = vld [vmem:[#allocation8 + $0xc] sm:$0xf]
        %v3673 = vld [vmem:[#allocation8 + $0x10] sm:$0xf]
        %v3674 = vld [vmem:[#allocation8 + $0x14] sm:$0xf]
        %v3675 = vld [vmem:[#allocation8 + $0x18] sm:$0xf]
        %v3676 = vld [vmem:[#allocation8 + $0x1c] sm:$0xf]
        %v3677 = vld [vmem:[#allocation8 + $0x20] sm:$0xf]
        %v3678 = vld [vmem:[#allocation8 + $0x24] sm:$0xf]
        %v3679 = vld [vmem:[#allocation8 + $0x28] sm:$0xf]
        %v3680 = vld [vmem:[#allocation8 + $0x2c] sm:$0xf]
        %v3681 = vld [vmem:[#allocation8 + $0x30] sm:$0xf]
        %v3682 = vld [vmem:[#allocation8 + $0x34] sm:$0xf]
        %v3683 = vld [vmem:[#allocation8 + $0x38] sm:$0xf]
        %v3684 = vld [vmem:[#allocation8 + $0x3c] sm:$0xf]
        %v3701 = vunpack.c.l.b16 %v3669
        %v3702 = vunpack.c.l.b16 %v3670
        %v3703 = vunpack.c.l.b16 %v3671
        %v3704 = vunpack.c.l.b16 %v3672
        %v3705 = vunpack.c.l.b16 %v3673
        %v3706 = vunpack.c.l.b16 %v3674
        %v3707 = vunpack.c.l.b16 %v3675
        %v3708 = vunpack.c.l.b16 %v3676
        %v3709 = vunpack.c.l.b16 %v3677
        %v3710 = vunpack.c.l.b16 %v3678
        %v3711 = vunpack.c.l.b16 %v3679
        %v3712 = vunpack.c.l.b16 %v3680
        %v3713 = vunpack.c.l.b16 %v3681
        %v3714 = vunpack.c.l.b16 %v3682
        %v3715 = vunpack.c.l.b16 %v3683
        %v3716 = vunpack.c.l.b16 %v3684
        %v3717 = vpack.c.b16 %v3702, %v3701
        %v3718 = vpack.c.b16 %v3704, %v3703
        %v3719 = vpack.c.b16 %v3706, %v3705
        %v3720 = vpack.c.b16 %v3708, %v3707
        %v3721 = vpack.c.b16 %v3710, %v3709
        %v3722 = vpack.c.b16 %v3712, %v3711
        %v3723 = vpack.c.b16 %v3714, %v3713
        %v3724 = vpack.c.b16 %v3716, %v3715
        %3733 = vmatprep.subr.bf16.mxu0 0
        %3734 = vmatpush1.bf16.msra.mxu0 %v3724
        %3735 = vmatprep.subr.bf16.mxu0 0
        %3736 = vmatpush1.bf16.msra.mxu0 %v3723
        %3737 = vmatprep.subr.bf16.mxu0 0
        %3738 = vmatpush1.bf16.msra.mxu0 %v3722
        %3739 = vmatprep.subr.bf16.mxu0 0
        %3740 = vmatpush1.bf16.msra.mxu0 %v3721
        %3741 = vmatprep.subr.bf16.mxu0 0
        %3742 = vmatpush1.bf16.msra.mxu0 %v3720
        %3743 = vmatprep.subr.bf16.mxu0 0
        %3744 = vmatpush1.bf16.msra.mxu0 %v3719
        %3745 = vmatprep.subr.bf16.mxu0 0
        %3746 = vmatpush1.bf16.msra.mxu0 %v3718
        %3747 = vmatprep.subr.bf16.mxu0 0
        %3748 = vmatpush1.bf16.msra.mxu0 %v3717
        %3749 = vmatprep.subr.bf16.mxu0 0
        %3750 = vmatpush2.bf16.msra.mxu0 0
        %3751 = vmatprep.subr.bf16.mxu0 0
        %3752 = vmatpush2.bf16.msra.mxu0 0
        %3753 = vmatprep.subr.bf16.mxu0 0
        %3754 = vmatpush2.bf16.msra.mxu0 0
        %3755 = vmatprep.subr.bf16.mxu0 0
        %3756 = vmatpush2.bf16.msra.mxu0 0
        %3757 = vmatprep.subr.bf16.mxu0 0
        %3758 = vmatpush2.bf16.msra.mxu0 0
        %3759 = vmatprep.subr.bf16.mxu0 0
        %3760 = vmatpush2.bf16.msra.mxu0 0
        %3761 = vmatprep.subr.bf16.mxu0 0
        %3762 = vmatpush2.bf16.msra.mxu0 0
        %3763 = vmatprep.subr.bf16.mxu0 0
        %3764 = vmatpush2.bf16.msra.mxu0 0
        %3765 = vmatprep.mubr.bf16.mxu0 0
        %3766 = vmatmul.mubr.bf16.gmra.mxu0 %v619
        %v3767 = vpop.f32.mrf.mxu0
        %v3768 = vpop.f32.mrf.mxu0
        %v3769 = vpop.f32.mrf.mxu0
        %v3770 = vpop.f32.mrf.mxu0
        %3771 = vmatprep.mubr.bf16.mxu0 0
        %3772 = vmatmul.mubr.bf16.gmra.mxu0 %v620
        %v3773 = vpop.f32.mrf.mxu0
        %v3774 = vpop.f32.mrf.mxu0
        %v3775 = vpop.f32.mrf.mxu0
        %v3776 = vadd.f32 0.0, %v3775
        %v3777 = vpop.f32.mrf.mxu0
        %3778 = vmatprep.mubr.bf16.mxu0 0
        %3779 = vmatmul.mubr.bf16.gmra.mxu0 %v621
        %v3780 = vpop.f32.mrf.mxu0
        %v3781 = vadd.f32 0.0, %v3780
        %v3782 = vpop.f32.mrf.mxu0
        %v3783 = vpop.f32.mrf.mxu0
        %v3784 = vadd.f32 0.0, %v3783
        %v3785 = vpop.f32.mrf.mxu0
        %3786 = vmatprep.mubr.bf16.mxu0 0
        %3787 = vmatmul.mubr.bf16.gmra.mxu0 %v622
        %v3788 = vpop.f32.mrf.mxu0
        %v3789 = vadd.f32 0.0, %v3788
        %v3790 = vpop.f32.mrf.mxu0
        %v3791 = vpop.f32.mrf.mxu0
        %v3792 = vadd.f32 0.0, %v3791
        %v3793 = vpop.f32.mrf.mxu0
        %3794 = vmatprep.mubr.bf16.mxu0 0
        %3795 = vmatmul.mubr.bf16.gmra.mxu0 %v623
        %v3796 = vpop.f32.mrf.mxu0
        %v3797 = vadd.f32 0.0, %v3796
        %v3798 = vpop.f32.mrf.mxu0
        %v3799 = vpop.f32.mrf.mxu0
        %v3800 = vadd.f32 0.0, %v3799
        %v3801 = vpop.f32.mrf.mxu0
        %3802 = vmatprep.mubr.bf16.mxu0 0
        %3803 = vmatmul.mubr.bf16.gmra.mxu0 %v624
        %v3804 = vpop.f32.mrf.mxu0
        %v3805 = vadd.f32 0.0, %v3804
        %v3806 = vpop.f32.mrf.mxu0
        %v3807 = vpop.f32.mrf.mxu0
        %v3808 = vadd.f32 0.0, %v3807
        %v3809 = vpop.f32.mrf.mxu0
        %3810 = vmatprep.mubr.bf16.mxu0 0
        %3811 = vmatmul.mubr.bf16.gmra.mxu0 %v625
        %v3812 = vpop.f32.mrf.mxu0
        %v3813 = vadd.f32 0.0, %v3812
        %v3814 = vpop.f32.mrf.mxu0
        %v3815 = vpop.f32.mrf.mxu0
        %v3816 = vadd.f32 0.0, %v3815
        %v3817 = vpop.f32.mrf.mxu0
        %3818 = vmatprep.mubr.bf16.mxu0 0
        %3819 = vmatmul.mubr.bf16.gmra.mxu0 %v626
        %v3820 = vpop.f32.mrf.mxu0
        %v3821 = vadd.f32 0.0, %v3820
        %v3822 = vpop.f32.mrf.mxu0
        %v3823 = vpop.f32.mrf.mxu0
        %v3824 = vadd.f32 0.0, %v3823
        %v3825 = vpop.f32.mrf.mxu0
        %3826 = vmatprep.mubr.bf16.mxu0 0
        %3827 = vmatmul.mubr.bf16.gmra.mxu0 %v627
        %v3828 = vpop.f32.mrf.mxu0
        %v3829 = vadd.f32 0.0, %v3828
        %v3830 = vpop.f32.mrf.mxu0
        %v3831 = vpop.f32.mrf.mxu0
        %v3832 = vadd.f32 0.0, %v3831
        %v3833 = vpop.f32.mrf.mxu0
        %3834 = vmatprep.mubr.bf16.mxu0 0
        %3835 = vmatmul.mubr.bf16.gmra.mxu0 %v628
        %v3836 = vpop.f32.mrf.mxu0
        %v3837 = vadd.f32 0.0, %v3836
        %v3838 = vpop.f32.mrf.mxu0
        %v3839 = vpop.f32.mrf.mxu0
        %v3840 = vadd.f32 0.0, %v3839
        %v3841 = vpop.f32.mrf.mxu0
        %3842 = vmatprep.mubr.bf16.mxu0 0
        %3843 = vmatmul.mubr.bf16.gmra.mxu0 %v629
        %v3844 = vpop.f32.mrf.mxu0
        %v3845 = vadd.f32 0.0, %v3844
        %v3846 = vpop.f32.mrf.mxu0
        %v3847 = vpop.f32.mrf.mxu0
        %v3848 = vadd.f32 0.0, %v3847
        %v3849 = vpop.f32.mrf.mxu0
        %3850 = vmatprep.mubr.bf16.mxu0 0
        %3851 = vmatmul.mubr.bf16.gmra.mxu0 %v630
        %v3852 = vpop.f32.mrf.mxu0
        %v3853 = vadd.f32 0.0, %v3852
        %v3854 = vpop.f32.mrf.mxu0
        %v3855 = vpop.f32.mrf.mxu0
        %v3856 = vadd.f32 0.0, %v3855
        %v3857 = vpop.f32.mrf.mxu0
        %3858 = vmatprep.mubr.bf16.mxu0 0
        %3859 = vmatmul.mubr.bf16.gmra.mxu0 %v631
        %v3860 = vpop.f32.mrf.mxu0
        %v3861 = vadd.f32 0.0, %v3860
        %v3862 = vpop.f32.mrf.mxu0
        %v3863 = vpop.f32.mrf.mxu0
        %v3864 = vadd.f32 0.0, %v3863
        %v3865 = vpop.f32.mrf.mxu0
        %3866 = vmatprep.mubr.bf16.mxu0 0
        %3867 = vmatmul.mubr.bf16.gmra.mxu0 %v632
        %v3868 = vpop.f32.mrf.mxu0
        %v3869 = vadd.f32 0.0, %v3868
        %v3870 = vpop.f32.mrf.mxu0
        %v3871 = vpop.f32.mrf.mxu0
        %v3872 = vadd.f32 0.0, %v3871
        %v3873 = vpop.f32.mrf.mxu0
        %3874 = vmatprep.mubr.bf16.mxu0 0
        %3875 = vmatmul.mubr.bf16.gmra.mxu0 %v633
        %v3876 = vpop.f32.mrf.mxu0
        %v3877 = vpop.f32.mrf.mxu0
        %v3878 = vpop.f32.mrf.mxu0
        %v3879 = vpop.f32.mrf.mxu0
        %3880 = vmatprep.mubr.bf16.mxu0 0
        %3881 = vmatmul.mubr.bf16.gmra.mxu0 %v634
        %v3882 = vpop.f32.mrf.mxu0
        %v3883 = vpop.f32.mrf.mxu0
        %v3884 = vpop.f32.mrf.mxu0
        %v3885 = vpop.f32.mrf.mxu0
        %3886 = vmatprep.mubr.bf16.mxu0 0
        %3887 = vmatmul.mubr.bf16.gmra.mxu0 %v635
        %v3888 = vpop.f32.mrf.mxu0
        %v3889 = vpop.f32.mrf.mxu0
        %v3890 = vpop.f32.mrf.mxu0
        %v3891 = vpop.f32.mrf.mxu0
        %3892 = vdwg.mxu0
        %v3893 = vld [vmem:[%s9] sm:$0x1]
        %v3895 = vlaneseq
        %v3896 = vshrl.u32 %v3895, 7
        %v3897 = vsub.s32 0, %v3896
        %v3898 = vrot.slane %v3893, %v3897
        %v3900 = vadd.f32 %v3776, %v3898
        %v3901 = vadd.f32 %v3781, %v3898
        %v3902 = vadd.f32 %v3784, %v3898
        %v3903 = vadd.f32 %v3789, %v3898
        %v3904 = vadd.f32 %v3792, %v3898
        %v3905 = vadd.f32 %v3797, %v3898
        %v3906 = vadd.f32 %v3800, %v3898
        %v3907 = vadd.f32 %v3805, %v3898
        %v3908 = vadd.f32 %v3808, %v3898
        %v3909 = vadd.f32 %v3813, %v3898
        %v3910 = vadd.f32 %v3816, %v3898
        %v3911 = vadd.f32 %v3821, %v3898
        %v3912 = vadd.f32 %v3824, %v3898
        %v3913 = vadd.f32 %v3829, %v3898
        %v3914 = vadd.f32 %v3832, %v3898
        %v3915 = vadd.f32 %v3837, %v3898
        %v3916 = vadd.f32 %v3840, %v3898
        %v3917 = vadd.f32 %v3845, %v3898
        %v3918 = vadd.f32 %v3848, %v3898
        %v3919 = vadd.f32 %v3853, %v3898
        %v3920 = vadd.f32 %v3856, %v3898
        %v3921 = vadd.f32 %v3861, %v3898
        %v3922 = vadd.f32 %v3864, %v3898
        %v3923 = vadd.f32 %v3869, %v3898
        %v3924 = vadd.f32 %v3872, %v3898
        %vm3950 = vcmask 1046528
        %v3951 = vrot.slane %v3900, 1
        %v3952 = vrot.slane %v3901, 1
        %v3953 = vsel %vm3950, %v3951, %v3952
        %v3954 = vrot.slane %v3902, 1
        %v3955 = vsel %vm3950, %v3952, %v3954
        %v3956 = vrot.slane %v3903, 1
        %v3957 = vsel %vm3950, %v3954, %v3956
        %v3958 = vrot.slane %v3904, 1
        %v3959 = vsel %vm3950, %v3956, %v3958
        %v3960 = vrot.slane %v3905, 1
        %v3961 = vsel %vm3950, %v3958, %v3960
        %v3962 = vrot.slane %v3906, 1
        %v3963 = vsel %vm3950, %v3960, %v3962
        %v3964 = vrot.slane %v3907, 1
        %v3965 = vsel %vm3950, %v3962, %v3964
        %v3966 = vrot.slane %v3908, 1
        %v3967 = vsel %vm3950, %v3964, %v3966
        %v3968 = vrot.slane %v3909, 1
        %v3969 = vsel %vm3950, %v3966, %v3968
        %v3970 = vrot.slane %v3910, 1
        %v3971 = vsel %vm3950, %v3968, %v3970
        %v3972 = vrot.slane %v3911, 1
        %v3973 = vsel %vm3950, %v3970, %v3972
        %v3974 = vrot.slane %v3912, 1
        %v3975 = vsel %vm3950, %v3972, %v3974
        %v3976 = vrot.slane %v3913, 1
        %v3977 = vsel %vm3950, %v3974, %v3976
        %v3978 = vrot.slane %v3914, 1
        %v3979 = vsel %vm3950, %v3976, %v3978
        %v3980 = vrot.slane %v3915, 1
        %v3981 = vsel %vm3950, %v3978, %v3980
        %v3982 = vrot.slane %v3916, 1
        %v3983 = vsel %vm3950, %v3980, %v3982
        %v3984 = vrot.slane %v3917, 1
        %v3985 = vsel %vm3950, %v3982, %v3984
        %v3986 = vrot.slane %v3918, 1
        %v3987 = vsel %vm3950, %v3984, %v3986
        %v3988 = vrot.slane %v3919, 1
        %v3989 = vsel %vm3950, %v3986, %v3988
        %v3990 = vrot.slane %v3920, 1
        %v3991 = vsel %vm3950, %v3988, %v3990
        %v3992 = vrot.slane %v3921, 1
        %v3993 = vsel %vm3950, %v3990, %v3992
        %v3994 = vrot.slane %v3922, 1
        %v3995 = vsel %vm3950, %v3992, %v3994
        %v3996 = vrot.slane %v3923, 1
        %v3997 = vsel %vm3950, %v3994, %v3996
        %v3998 = vrot.slane %v3924, 1
        %v3999 = vsel %vm3950, %v3996, %v3998
        %v4024 = vadd.f32 %v3575, %v3953
        %v4025 = vadd.f32 %v3578, %v3955
        %v4026 = vadd.f32 %v3583, %v3957
        %v4027 = vadd.f32 %v3586, %v3959
        %v4028 = vadd.f32 %v3591, %v3961
        %v4029 = vadd.f32 %v3594, %v3963
        %v4030 = vadd.f32 %v3599, %v3965
        %v4031 = vadd.f32 %v3602, %v3967
        %v4032 = vadd.f32 %v3607, %v3969
        %v4033 = vadd.f32 %v3610, %v3971
        %v4034 = vadd.f32 %v3615, %v3973
        %v4035 = vadd.f32 %v3618, %v3975
        %v4036 = vadd.f32 %v3623, %v3977
        %v4037 = vadd.f32 %v3626, %v3979
        %v4038 = vadd.f32 %v3631, %v3981
        %v4039 = vadd.f32 %v3634, %v3983
        %v4040 = vadd.f32 %v3639, %v3985
        %v4041 = vadd.f32 %v3642, %v3987
        %v4042 = vadd.f32 %v3647, %v3989
        %v4043 = vadd.f32 %v3650, %v3991
        %v4044 = vadd.f32 %v3655, %v3993
        %v4045 = vadd.f32 %v3658, %v3995
        %v4046 = vadd.f32 %v3663, %v3997
        %v4047 = vadd.f32 %v3666, %v3999
        %v4048 = vmax.f32 %v4024, 0.0
        %v4049 = vmax.f32 %v4025, 0.0
        %v4050 = vmax.f32 %v4026, 0.0
        %v4051 = vmax.f32 %v4027, 0.0
        %v4052 = vmax.f32 %v4028, 0.0
        %v4053 = vmax.f32 %v4029, 0.0
        %v4054 = vmax.f32 %v4030, 0.0
        %v4055 = vmax.f32 %v4031, 0.0
        %v4056 = vmax.f32 %v4032, 0.0
        %v4057 = vmax.f32 %v4033, 0.0
        %v4058 = vmax.f32 %v4034, 0.0
        %v4059 = vmax.f32 %v4035, 0.0
        %v4060 = vmax.f32 %v4036, 0.0
        %v4061 = vmax.f32 %v4037, 0.0
        %v4062 = vmax.f32 %v4038, 0.0
        %v4063 = vmax.f32 %v4039, 0.0
        %v4064 = vmax.f32 %v4040, 0.0
        %v4065 = vmax.f32 %v4041, 0.0
        %v4066 = vmax.f32 %v4042, 0.0
        %v4067 = vmax.f32 %v4043, 0.0
        %v4068 = vmax.f32 %v4044, 0.0
        %v4069 = vmax.f32 %v4045, 0.0
        %v4070 = vmax.f32 %v4046, 0.0
        %v4071 = vmax.f32 %v4047, 0.0
        %4072 = vst [vmem:[%s450] sm:$0xff] %v4048
        %4073 = vst [vmem:[%s450 + $0x8] sm:$0xff] %v4049
        %4074 = vst [vmem:[%s450 + $0x10] sm:$0xff] %v4050
        %4075 = vst [vmem:[%s450 + $0x18] sm:$0xff] %v4051
        %4076 = vst [vmem:[%s450 + $0x20] sm:$0xff] %v4052
        %4077 = vst [vmem:[%s450 + $0x28] sm:$0xff] %v4053
        %4078 = vst [vmem:[%s450 + $0x30] sm:$0xff] %v4054
        %4079 = vst [vmem:[%s450 + $0x38] sm:$0xff] %v4055
        %4080 = vst [vmem:[%s450 + $0x40] sm:$0xff] %v4056
        %4081 = vst [vmem:[%s450 + $0x48] sm:$0xff] %v4057
        %4082 = vst [vmem:[%s450 + $0x50] sm:$0xff] %v4058
        %4083 = vst [vmem:[%s450 + $0x58] sm:$0xff] %v4059
        %4084 = vst [vmem:[%s450 + $0x60] sm:$0xff] %v4060
        %4085 = vst [vmem:[%s450 + $0x68] sm:$0xff] %v4061
        %4086 = vst [vmem:[%s450 + $0x70] sm:$0xff] %v4062
        %4087 = vst [vmem:[%s450 + $0x78] sm:$0xff] %v4063
        %4088 = vst [vmem:[%s450 + $0x80] sm:$0xff] %v4064
        %4089 = vst [vmem:[%s450 + $0x88] sm:$0xff] %v4065
        %4090 = vst [vmem:[%s450 + $0x90] sm:$0xff] %v4066
        %4091 = vst [vmem:[%s450 + $0x98] sm:$0xff] %v4067
        %4092 = vst [vmem:[%s450 + $0xa0] sm:$0xff] %v4068
        %4093 = vst [vmem:[%s450 + $0xa8] sm:$0xff] %v4069
        %4094 = vst [vmem:[%s450 + $0xb0] sm:$0xff] %v4070
        %4095 = vst [vmem:[%s450 + $0xb8] sm:$0xff] %v4071
        %s4096 = sand.u32 %s271, 1
        %s4097 = scalar_lea.sflag [#allocation4], %s4096
        %s4098 = sand.u32 %s271, 1
        %s4099 = smul.addr %s4098, 192
        %s4100 = scalar_lea.vmem [#allocation10], %s4099
        // Predicated region
        $region77: #{tpu_custom_call.1} parent=59 // pred_check
          %p4101 = pneg %p281
        $region78: #{tpu_custom_call.1} parent=59 // pred_check_branch
          %4103 = sbr.rel (%p4101) target = $region80
        $region79: #{tpu_custom_call.1} parent=59 // pred_region
          %s4105 = ssub.s32 3072, 3072
          %4106 = vsyncadd %s4097, %s4105
          %s4107 = smul.addr %s32, 24
          %s4108 = smul.addr %s31, 48
          %s4109 = sadd.s32 %s4107, %s4108
          %s4110 = smul.addr %s4109, 128
          %s4111 = scalar_lea.hbm %s10, %s4110
          %s4112 = sshll.u32 %s4100, 4
          %s4113 = int_to_ptr.vmem [resolvable:$true] %s4112
          %4118 = dma.vmem_to_hbm [thread:$0]  %s4113, 3072, %s4111, %s4097, 128, 128, 8
        $region80: #{tpu_custom_call.1} parent=59 // pred_fallthru
          _
      $region60: #{tpu_custom_call.1} parent=5 // pred_fallthru
        _
      %p4119 = scmp.le.s32.totalorder 2, %s22
      // Predicated region
      $region81: #{tpu_custom_call.1} parent=5 // pred_check
        %p4120 = pneg %p4119
      $region82: #{tpu_custom_call.1} parent=5 // pred_check_branch
        %4122 = sbr.rel (%p4120) target = $region84
      $region83: #{tpu_custom_call.1} parent=5 // pred_region
        %s4123 = ssub.s32 %s22, 2
        // Predicated region
        $region85: #{tpu_custom_call.1} parent=83 // pred_check
          %p4124 = pneg %p287
        $region86: #{tpu_custom_call.1} parent=83 // pred_check_branch
          %4126 = sbr.rel (%p4124) target = $region88
        $region87: #{tpu_custom_call.1} parent=83 // pred_region
          %s4127 = sand.u32 %s272, 1
          %s4128 = scalar_lea.sflag [#allocation4], %s4127
          %s4129 = sand.u32 %s272, 1
          %s4130 = smul.addr %s4129, 192
          %s4131 = scalar_lea.vmem [#allocation10], %s4130
          %4132 = dma.done %s4128, 3072
        $region88: #{tpu_custom_call.1} parent=83 // pred_fallthru
          _
      $region84: #{tpu_custom_call.1} parent=5 // pred_fallthru
        _
    $region6: #{tpu_custom_call.1} parent=1 // loop_footer
      %s26 = sadd.s32 1, %s22
    $region7: #{tpu_custom_call.1} parent=1 // loop_footer_branch
      %21 = sbr.rel target = $region3
    $region8: #{tpu_custom_call.1} parent=1 // loop_exit
      _
    %4133 = vsyncpa [#allocation3], 1
    %s4134 = scalar_lea.sflag [#allocation3], 1
    %4135 = vsyncpa %s4134, 1
    %4136 = vsyncpa [#allocation6], 1
    %4137 = vsyncpa [#allocation9], 1
    %4138 = vsyncpa [#allocation4], 1
    %s4139 = scalar_lea.sflag [#allocation4], 1
    %4140 = vsyncpa %s4139, 1

</llo_original>
